<compile_context>
chip_gen: v6e
topology: v6e:2x2x1
jax: 0.10.0
libtpu: 0.0.40
codegen_flags: <defaults>
</compile_context>

<pallas_src>
import jax
import jax.numpy as jnp
from jax.experimental import pallas as pl
from jax.experimental.pallas import tpu as pltpu

C_GRID = 64      # channels of grid embeddings / point embeddings
H_Y = 32         # Linear(128 -> 32)
H_Z = 5          # Linear(32 -> 5)


def _unpillar_kernel(cell_ref, pt_ref, wc_ref, wp_ref, b_ref, out_ref):
    # Fused Linear(128->32) -> Linear(32->5):  out = cell@Wc + pt@Wp + b.
    cell = cell_ref[...]                           # (tile, 64) bf16 from HBM
    pt = pt_ref[...].astype(jnp.bfloat16)          # (tile, 64) f32 -> bf16 in VMEM
    acc = jnp.dot(cell, wc_ref[...], preferred_element_type=jnp.float32)
    acc = acc + jnp.dot(pt, wp_ref[...], preferred_element_type=jnp.float32)
    out_ref[...] = (acc + b_ref[...]).astype(out_ref.dtype)


def _round_up(x, m):
    return ((x + m - 1) // m) * m


def _pick_tile(N, tile_n):
    """Largest tile <= tile_n (multiple of 8 sublanes) that still yields
    >= 4 grid steps (2 per v7x TensorCore) when there is enough work;
    a single step only for tiny N."""
    min_steps = 4 if N >= 4096 else (2 if N >= 1024 else 1)
    tile = min(tile_n, _round_up(pl.cdiv(N, min_steps), 8))
    return max(tile, 8)


def unpillar_mlp_pallas(cell_flat, point_flat, w_cell, w_pt, b_fused, *,
                        tile_n=8192):
    """cell_flat: (N,64) bf16, point_flat: (N,64) f32,
       w_cell / w_pt: (64,5) bf16, b_fused: (1,5) f32  ->  (N,5) f32.

    No padding / slicing: grid is cdiv(N, tile) with a masked partial tail."""
    N = cell_flat.shape[0]
    tile = _pick_tile(N, tile_n)
    n_steps = pl.cdiv(N, tile)

    return pl.pallas_call(
        _unpillar_kernel,
        out_shape=jax.ShapeDtypeStruct((N, H_Z), jnp.float32),
        grid_spec=pltpu.PrefetchScalarGridSpec(
            num_scalar_prefetch=0,
            grid=(n_steps,),
            in_specs=[
                pl.BlockSpec((tile, C_GRID), lambda i: (i, 0)),   # cell tile (bf16)
                pl.BlockSpec((tile, C_GRID), lambda i: (i, 0)),   # point tile (f32)
                pl.BlockSpec((C_GRID, H_Z), lambda i: (0, 0)),    # fused W, cell half
                pl.BlockSpec((C_GRID, H_Z), lambda i: (0, 0)),    # fused W, point half
                pl.BlockSpec((1, H_Z), lambda i: (0, 0)),         # fused bias
            ],
            out_specs=pl.BlockSpec((tile, H_Z), lambda i: (i, 0)),
        ),
        compiler_params=pltpu.CompilerParams(
            dimension_semantics=("parallel",)),     # megacore sharding on v7x
    )(cell_flat, point_flat, w_cell, w_pt, b_fused)


def _fuse_params(params):
    """Exact fusion of Linear(128,32) and Linear(32,5): no activation between."""
    wy, by, wz, bz = params["wy"], params["by"], params["wz"], params["bz"]
    w_cell = (wy[:C_GRID] @ wz).astype(jnp.bfloat16)      # (64, 5)
    w_pt = (wy[C_GRID:] @ wz).astype(jnp.bfloat16)        # (64, 5)
    b_fused = (by @ wz + bz).reshape(1, H_Z)              # (1, 5) f32
    return w_cell, w_pt, b_fused


def unpillar_forward(grid_flow_embeddings, point_cloud, indices, params, *,
                     tile_n=8192):
    """Full forward pass, matching the PyTorch module.

    grid_flow_embeddings: (B, 64, Px, Py) float32
    point_cloud:          (B, P, 64) float32
    indices:              (B, P, 64) int   (pillar index per point AND channel)
    """
    B, C, Px, Py = grid_flow_embeddings.shape
    P = point_cloud.shape[1]

    # permute (0,2,3,1) + flatten(1,2) -> (B, Px*Py, 64); cast the (tiny) grid
    # table to bf16 first so the gathered `cell` tensor is materialized in HBM
    # at half the width.
    grid = jnp.transpose(grid_flow_embeddings, (0, 2, 3, 1)).reshape(B, Px * Py, C)
    grid = grid.astype(jnp.bfloat16)
    # TODO(synk): the per-channel gather (index varies per channel, per the
    # module interface) stays in XLA glue: an in-kernel per-channel gather has
    # no efficient Mosaic lowering, and the one-hot-matmul trick only applies
    # to per-point indices.  If upstream can guarantee per-point indices, pass
    # indices[:, :, 0] and fuse the gather into the kernel against the
    # VMEM-resident (Px*Py, 64) bf16 table; at minimum, int16 indices
    # (Px*Py <= 32767) would halve the dominant index-read traffic.
    cell = jnp.take_along_axis(grid, indices, axis=1)      # (B, P, 64) bf16

    # TODO(synk): if point_cloud's producer lives in the same jit, cast it to
    # bf16 there (fuses into the producer) and read the pt tile as bf16; here
    # it arrives cold from HBM, so the cast stays inside the kernel.
    w_cell, w_pt, b_fused = _fuse_params(params)
    out_flat = unpillar_mlp_pallas(
        cell.reshape(B * P, C), point_cloud.reshape(B * P, C),
        w_cell, w_pt, b_fused, tile_n=tile_n)
    return out_flat.reshape(B, P, H_Z)


def init_params(key):
    """Synthetic params matching nn.Linear(128,32), nn.Linear(32,5).

    Stored already transposed: wy is (in=128, out=32), wz is (in=32, out=5),
    so y = x @ w + b  (== torch's x @ W.T + b)."""
    k1, k2, k3, k4 = jax.random.split(key, 4)
    wy = jax.random.uniform(k1, (2 * C_GRID, H_Y), jnp.float32,
                            -1.0 / jnp.sqrt(128.0), 1.0 / jnp.sqrt(128.0))
    by = jax.random.uniform(k2, (H_Y,), jnp.float32,
                            -1.0 / jnp.sqrt(128.0), 1.0 / jnp.sqrt(128.0))
    wz = jax.random.uniform(k3, (H_Y, H_Z), jnp.float32,
                            -1.0 / jnp.sqrt(32.0), 1.0 / jnp.sqrt(32.0))
    bz = jax.random.uniform(k4, (H_Z,), jnp.float32,
                            -1.0 / jnp.sqrt(32.0), 1.0 / jnp.sqrt(32.0))
    return {"wy": wy, "by": by, "wz": wz, "bz": bz}


def reference_forward(grid_flow_embeddings, point_cloud, indices, params):
    """Pure-JAX f32 reference mirroring the PyTorch module exactly."""
    B, C, Px, Py = grid_flow_embeddings.shape
    grid = jnp.transpose(grid_flow_embeddings, (0, 2, 3, 1)).reshape(B, Px * Py, C)
    cell = jnp.take_along_axis(grid, indices, axis=1)
    full = jnp.concatenate([cell, point_cloud], axis=2)    # (B, P, 128)
    h = full @ params["wy"] + params["by"]
    return h @ params["wz"] + params["bz"]


def reference_forward_matched(grid_flow_embeddings, point_cloud, indices, params):
    """Reference using the same bf16 quantization / fused weights as the kernel."""
    B, C, Px, Py = grid_flow_embeddings.shape
    grid = jnp.transpose(grid_flow_embeddings, (0, 2, 3, 1)).reshape(B, Px * Py, C)
    cell = jnp.take_along_axis(grid.astype(jnp.bfloat16), indices, axis=1)
    w_cell, w_pt, b_fused = _fuse_params(params)
    z = (jnp.dot(cell.reshape(-1, C), w_cell, preferred_element_type=jnp.float32)
         + jnp.dot(point_cloud.reshape(-1, C).astype(jnp.bfloat16), w_pt,
                   preferred_element_type=jnp.float32)
         + b_fused)
    return z.reshape(B, -1, H_Z)


def _run_case(params, key, B, Px, Py, P):
    k_grid, k_pc, k_idx = jax.random.split(key, 3)
    grid_flow = jax.random.normal(k_grid, (B, C_GRID, Px, Py), jnp.float32)
    point_cloud = jax.random.normal(k_pc, (B, P, C_GRID), jnp.float32)
    indices = jax.random.randint(k_idx, (B, P, C_GRID), 0, Px * Py, jnp.int32)

    fwd = jax.jit(unpillar_forward)
    out = jax.block_until_ready(fwd(grid_flow, point_cloud, indices, params))
    assert out.shape == (B, P, H_Z)

    # Tight check vs a reference that matches the kernel's bf16-input /
    # fused-weight math (validates the Pallas kernel itself).
    ref_matched = reference_forward_matched(grid_flow, point_cloud, indices, params)
    assert jnp.allclose(out, ref_matched, atol=1e-3, rtol=1e-3), \
        "mismatch vs matched-precision reference"

    # Loose check vs the exact f32 PyTorch-equivalent reference (validates that
    # the bf16 input quantization is acceptable).
    ref_f32 = reference_forward(grid_flow, point_cloud, indices, params)
    assert jnp.allclose(out, ref_f32, atol=5e-2, rtol=5e-2), \
        "mismatch vs f32 reference"


if __name__ == "__main__":
    key = jax.random.PRNGKey(0)
    k_param, k_case1, k_case2 = jax.random.split(key, 3)
    params = init_params(k_param)

    # Case 1: N = B*P = 5900 -> 4 grid steps of 1480 rows, the last one a
    # masked partial tail (exercises the no-pad non-divisible path).
    _run_case(params, k_case1, B=2, Px=16, Py=16, P=2950)

    # Case 2: tiny N (200 rows) -> single-step grid, tile capped to N.
    _run_case(params, k_case2, B=2, Px=16, Py=16, P=100)

    print("KERNEL_OK")
</pallas_src>

<mosaic_0001>
module attributes {stable_mosaic.version = 11 : i64} {
  func.func @_unpillar_kernel(%arg0: i32, %arg1: memref<1480x64xbf16, #tpu.memory_space<vmem>>, %arg2: memref<1480x64xf32, #tpu.memory_space<vmem>>, %arg3: memref<64x5xbf16, #tpu.memory_space<vmem>>, %arg4: memref<64x5xbf16, #tpu.memory_space<vmem>>, %arg5: memref<1x5xf32, #tpu.memory_space<vmem>>, %arg6: memref<1480x5xf32, #tpu.memory_space<vmem>>) attributes {dimension_semantics = [#tpu.dimension_semantics<parallel>], iteration_bounds = array<i64: 4>, scalar_prefetch = 0 : i64, scratch_operands = 0 : i64, tpu.core_type = #tpu.core_type<tc>, window_params = [{transform_indices = @transform_0, window_bounds = array<i64: 1480, 64>}, {transform_indices = @transform_1, window_bounds = array<i64: 1480, 64>}, {pipeline_mode = #tpu.pipeline_mode<synchronous>, transform_indices = @transform_2, window_bounds = array<i64: 64, 5>}, {pipeline_mode = #tpu.pipeline_mode<synchronous>, transform_indices = @transform_3, window_bounds = array<i64: 64, 5>}, {pipeline_mode = #tpu.pipeline_mode<synchronous>, transform_indices = @transform_4, window_bounds = array<i64: 1, 5>}, {transform_indices = @transform_5, window_bounds = array<i64: 1480, 5>}]} {
    %c0 = arith.constant 0 : index
    %c0_0 = arith.constant 0 : index
    %0 = vector.load %arg1[%c0, %c0_0] : memref<1480x64xbf16, #tpu.memory_space<vmem>>, vector<1480x64xbf16>
    %c0_1 = arith.constant 0 : index
    %c0_2 = arith.constant 0 : index
    %1 = vector.load %arg2[%c0_1, %c0_2] : memref<1480x64xf32, #tpu.memory_space<vmem>>, vector<1480x64xf32>
    %2 = arith.truncf %1 : vector<1480x64xf32> to vector<1480x64xbf16>
    %c0_3 = arith.constant 0 : index
    %c0_4 = arith.constant 0 : index
    %3 = vector.load %arg3[%c0_3, %c0_4] : memref<64x5xbf16, #tpu.memory_space<vmem>>, vector<64x5xbf16>
    %cst = arith.constant dense<0.000000e+00> : vector<1480x5xf32>
    %4 = tpu.matmul %0, %3, %cst {dimension_numbers = #tpu.dot_dimension_numbers<[1], [0], [0], [1], [0, 0, 1, 1], [], []>} : vector<1480x64xbf16>, vector<64x5xbf16>, vector<1480x5xf32> -> vector<1480x5xf32>
    %c0_5 = arith.constant 0 : index
    %c0_6 = arith.constant 0 : index
    %5 = vector.load %arg4[%c0_5, %c0_6] : memref<64x5xbf16, #tpu.memory_space<vmem>>, vector<64x5xbf16>
    %cst_7 = arith.constant dense<0.000000e+00> : vector<1480x5xf32>
    %6 = tpu.matmul %2, %5, %cst_7 {dimension_numbers = #tpu.dot_dimension_numbers<[1], [0], [0], [1], [0, 0, 1, 1], [], []>} : vector<1480x64xbf16>, vector<64x5xbf16>, vector<1480x5xf32> -> vector<1480x5xf32>
    %7 = arith.addf %4, %6 : vector<1480x5xf32>
    %c0_8 = arith.constant 0 : index
    %c0_9 = arith.constant 0 : index
    %8 = vector.load %arg5[%c0_8, %c0_9] : memref<1x5xf32, #tpu.memory_space<vmem>>, vector<1x5xf32>
    %9 = vector.broadcast %8 : vector<1x5xf32> to vector<1480x5xf32>
    %10 = arith.addf %7, %9 : vector<1480x5xf32>
    %c0_10 = arith.constant 0 : index
    %c0_11 = arith.constant 0 : index
    %11 = vector.load %arg6[%c0_10, %c0_11] : memref<1480x5xf32, #tpu.memory_space<vmem>>, vector<1480x5xf32>
    tpu.vector_store %arg6[%c0_10, %c0_11], %10 {strides = array<i32>} : memref<1480x5xf32, #tpu.memory_space<vmem>>, vector<1480x5xf32>,
    return
  }
  func.func @transform_0(%arg0: i32) -> (i32, i32) {
    %c0_i32 = arith.constant 0 : i32
    %c0_i32_0 = arith.constant 0 : i32
    return %arg0, %c0_i32 : i32, i32
  }
  func.func @transform_1(%arg0: i32) -> (i32, i32) {
    %c0_i32 = arith.constant 0 : i32
    %c0_i32_0 = arith.constant 0 : i32
    return %arg0, %c0_i32 : i32, i32
  }
  func.func @transform_2(%arg0: i32) -> (i32, i32) {
    %c0_i32 = arith.constant 0 : i32
    %c0_i32_0 = arith.constant 0 : i32
    %c0_i32_1 = arith.constant 0 : i32
    return %c0_i32, %c0_i32_0 : i32, i32
  }
  func.func @transform_3(%arg0: i32) -> (i32, i32) {
    %c0_i32 = arith.constant 0 : i32
    %c0_i32_0 = arith.constant 0 : i32
    %c0_i32_1 = arith.constant 0 : i32
    return %c0_i32, %c0_i32_0 : i32, i32
  }
  func.func @transform_4(%arg0: i32) -> (i32, i32) {
    %c0_i32 = arith.constant 0 : i32
    %c0_i32_0 = arith.constant 0 : i32
    %c0_i32_1 = arith.constant 0 : i32
    return %c0_i32, %c0_i32_0 : i32, i32
  }
  func.func @transform_5(%arg0: i32) -> (i32, i32) {
    %c0_i32 = arith.constant 0 : i32
    %c0_i32_0 = arith.constant 0 : i32
    return %arg0, %c0_i32 : i32, i32
  }
}

</mosaic_0001>

<llo_original>
// kernel: unpillar_forward.1
$region0: #{unpillar_forward.1}
  #allocation0 [shape = 'u32[]', space=smem, size = 0x4, offset = 0x4, fixed_abs, tag = 'smem constant byte address 0x4 - core index']
  #allocation1 [shape = 'u32[144,128]{1,0:T(1,128)}', space=vmem, size = 0x12000, scoped, tag = 'internal scratch']
  %s0 = inlined_call_operand.vmem [shape: bf16[5900,64], index: 0, kind: input, shape index: {}]
  %s1 = inlined_call_operand.vmem [shape: f32[5900,64], index: 1, kind: input, shape index: {}]
  %s2 = inlined_call_operand.vmem [shape: bf16[64,5], index: 2, kind: input, shape index: {}]
  %s3 = inlined_call_operand.vmem [shape: bf16[64,5], index: 3, kind: input, shape index: {}]
  %s4 = inlined_call_operand.vmem [shape: f32[1,5], index: 4, kind: input, shape index: {}]
  %s5 = inlined_call_operand.vmem [shape: f32[5900,5], index: 5, kind: output, shape index: {}]
  %s6 = sld [smem:[#allocation0]]
  $region101: #{unpillar_forward.1} parent=0
    _
  %s8 = ssub.s32 1, %s6
  %s9 = scalar_select 0, %s8, %s6
  $region1: #{unpillar_forward.1} parent=0
    #allocation2 [shape = 'u8[1515520]{0}', space=vmem, size = 0x172000, scoped, tag = 'output window, operand 0']
    loop: start=0, step=1, limit=6
    $region2: #{unpillar_forward.1} parent=1 // loop_pre_header
      _
    $region3: #{unpillar_forward.1} parent=1 // loop_header
      %s11 = sphi 0, %s15
      %p12 = scmp.ge.s32.totalorder %s11, 6
      %s21 = sphi 0, %s23
      %s24 = sphi 0, %s21
      %s25 = sphi 0, %s24
      %s41 = sphi 0, %s25
      %s47 = sphi 0, %s49
      %s50 = sphi 0, %s47
      %s51 = sphi 0, %s50
      %s67 = sphi 0, %s51
      %s71 = sphi 0, %s71
      %s73 = sphi 0, %s71
      %s74 = sphi 0, %s73
      %s88 = sphi 0, %s74
      %s92 = sphi 0, %s92
      %s94 = sphi 0, %s92
      %s95 = sphi 0, %s94
      %s109 = sphi 0, %s95
      %s113 = sphi 0, %s113
      %s115 = sphi 0, %s113
      %s116 = sphi 0, %s115
      %s130 = sphi 0, %s116
      %s136 = sphi 0, %s138
      %s139 = sphi 0, %s136
      %s140 = sphi 0, %s139
      %s156 = sphi 0, %s140
    $region4: #{unpillar_forward.1} parent=1 // loop_header_branch
      %14 = sbr.rel (%p12) target = $region8
    $region5: #{unpillar_forward.1} parent=1 // loop_body
      %s16 = ssub.s32 %s11, 1
      %s17 = ssub.s32 %s11, 2
      %s18 = sadd.s32 %s11, 1
      %s19 = ssub.s32 %s11, %s18
      %p20 = scmp.eq.s32.totalorder %s19, 0
      %s22 = sadd.s32 %s21, 1
      %s23 = scalar_select %p20, %s21, %s22
      %p26 = pneg %p20
      %p27 = scmp.eq.s32.totalorder %s11, 3
      %p28 = por %p26, %p27
      %p29 = scmp.ne.s32.totalorder %s21, %s24
      %p30 = scmp.eq.s32.totalorder %s11, 0
      %p31 = por %p29, %p30
      %p32 = scmp.ne.s32.totalorder %s21, %s24
      %p33 = scmp.eq.s32.totalorder %s16, 3
      %p34 = por %p32, %p33
      %p35 = scmp.ne.s32.totalorder %s24, %s25
      %p36 = scmp.eq.s32.totalorder %s16, 0
      %p37 = por %p35, %p36
      %p38 = scmp.ne.s32.totalorder %s24, %s25
      %p39 = scmp.eq.s32.totalorder %s17, 3
      %p40 = por %p38, %p39
      %p42 = scmp.ne.s32.totalorder %s25, %s41
      %p43 = scmp.eq.s32.totalorder %s17, 0
      %p44 = por %p42, %p43
      %s45 = ssub.s32 %s11, %s18
      %p46 = scmp.eq.s32.totalorder %s45, 0
      %s48 = sadd.s32 %s47, 1
      %s49 = scalar_select %p46, %s47, %s48
      %p52 = pneg %p46
      %p53 = scmp.eq.s32.totalorder %s11, 3
      %p54 = por %p52, %p53
      %p55 = scmp.ne.s32.totalorder %s47, %s50
      %p56 = scmp.eq.s32.totalorder %s11, 0
      %p57 = por %p55, %p56
      %p58 = scmp.ne.s32.totalorder %s47, %s50
      %p59 = scmp.eq.s32.totalorder %s16, 3
      %p60 = por %p58, %p59
      %p61 = scmp.ne.s32.totalorder %s50, %s51
      %p62 = scmp.eq.s32.totalorder %s16, 0
      %p63 = por %p61, %p62
      %p64 = scmp.ne.s32.totalorder %s50, %s51
      %p65 = scmp.eq.s32.totalorder %s17, 3
      %p66 = por %p64, %p65
      %p68 = scmp.ne.s32.totalorder %s51, %s67
      %p69 = scmp.eq.s32.totalorder %s17, 0
      %p70 = por %p68, %p69
      %s72 = sadd.s32 %s71, 1
      %p75 = scmp.eq.s32.totalorder %s11, 3
      %p76 = scmp.ne.s32.totalorder %s71, %s73
      %p77 = scmp.eq.s32.totalorder %s11, 0
      %p78 = por %p76, %p77
      %p79 = scmp.ne.s32.totalorder %s71, %s73
      %p80 = scmp.eq.s32.totalorder %s16, 3
      %p81 = por %p79, %p80
      %p82 = scmp.ne.s32.totalorder %s73, %s74
      %p83 = scmp.eq.s32.totalorder %s16, 0
      %p84 = por %p82, %p83
      %p85 = scmp.ne.s32.totalorder %s73, %s74
      %p86 = scmp.eq.s32.totalorder %s17, 3
      %p87 = por %p85, %p86
      %p89 = scmp.ne.s32.totalorder %s74, %s88
      %p90 = scmp.eq.s32.totalorder %s17, 0
      %p91 = por %p89, %p90
      %s93 = sadd.s32 %s92, 1
      %p96 = scmp.eq.s32.totalorder %s11, 3
      %p97 = scmp.ne.s32.totalorder %s92, %s94
      %p98 = scmp.eq.s32.totalorder %s11, 0
      %p99 = por %p97, %p98
      %p100 = scmp.ne.s32.totalorder %s92, %s94
      %p101 = scmp.eq.s32.totalorder %s16, 3
      %p102 = por %p100, %p101
      %p103 = scmp.ne.s32.totalorder %s94, %s95
      %p104 = scmp.eq.s32.totalorder %s16, 0
      %p105 = por %p103, %p104
      %p106 = scmp.ne.s32.totalorder %s94, %s95
      %p107 = scmp.eq.s32.totalorder %s17, 3
      %p108 = por %p106, %p107
      %p110 = scmp.ne.s32.totalorder %s95, %s109
      %p111 = scmp.eq.s32.totalorder %s17, 0
      %p112 = por %p110, %p111
      %s114 = sadd.s32 %s113, 1
      %p117 = scmp.eq.s32.totalorder %s11, 3
      %p118 = scmp.ne.s32.totalorder %s113, %s115
      %p119 = scmp.eq.s32.totalorder %s11, 0
      %p120 = por %p118, %p119
      %p121 = scmp.ne.s32.totalorder %s113, %s115
      %p122 = scmp.eq.s32.totalorder %s16, 3
      %p123 = por %p121, %p122
      %p124 = scmp.ne.s32.totalorder %s115, %s116
      %p125 = scmp.eq.s32.totalorder %s16, 0
      %p126 = por %p124, %p125
      %p127 = scmp.ne.s32.totalorder %s115, %s116
      %p128 = scmp.eq.s32.totalorder %s17, 3
      %p129 = por %p127, %p128
      %p131 = scmp.ne.s32.totalorder %s116, %s130
      %p132 = scmp.eq.s32.totalorder %s17, 0
      %p133 = por %p131, %p132
      %s134 = ssub.s32 %s11, %s18
      %p135 = scmp.eq.s32.totalorder %s134, 0
      %s137 = sadd.s32 %s136, 1
      %s138 = scalar_select %p135, %s136, %s137
      %p141 = pneg %p135
      %p142 = scmp.eq.s32.totalorder %s11, 3
      %p143 = por %p141, %p142
      %p144 = scmp.ne.s32.totalorder %s136, %s139
      %p145 = scmp.eq.s32.totalorder %s11, 0
      %p146 = por %p144, %p145
      %p147 = scmp.ne.s32.totalorder %s136, %s139
      %p148 = scmp.eq.s32.totalorder %s16, 3
      %p149 = por %p147, %p148
      %p150 = scmp.ne.s32.totalorder %s139, %s140
      %p151 = scmp.eq.s32.totalorder %s16, 0
      %p152 = por %p150, %p151
      %p153 = scmp.ne.s32.totalorder %s139, %s140
      %p154 = scmp.eq.s32.totalorder %s17, 3
      %p155 = por %p153, %p154
      %p157 = scmp.ne.s32.totalorder %s140, %s156
      %p158 = scmp.eq.s32.totalorder %s17, 0
      %p159 = por %p157, %p158
      %p160 = scmp.le.s32.totalorder 1, %s11
      %p161 = scmp.lt.s32.totalorder %s11, 5
      %p162 = pnand %p160, %p161
      %p163 = pneg %p162
      // Predicated region
      $region9: #{unpillar_forward.1} parent=5 // pred_check
        _
      $region10: #{unpillar_forward.1} parent=5 // pred_check_branch
        %165 = sbr.rel (%p162) target = $region12
      $region11: #{unpillar_forward.1} parent=5 // pred_region
        %s166 = ssub.s32 %s11, 1
        // Predicated region
        $region13: #{unpillar_forward.1} parent=11 // pred_check
          %p167 = pneg %p84
        $region14: #{unpillar_forward.1} parent=11 // pred_check_branch
          %169 = sbr.rel (%p167) target = $region16
        $region15: #{unpillar_forward.1} parent=11 // pred_region
          _
        $region16: #{unpillar_forward.1} parent=11 // pred_fallthru
          _
        // Predicated region
        $region17: #{unpillar_forward.1} parent=11 // pred_check
          %p170 = pneg %p105
        $region18: #{unpillar_forward.1} parent=11 // pred_check_branch
          %172 = sbr.rel (%p170) target = $region20
        $region19: #{unpillar_forward.1} parent=11 // pred_region
          _
        $region20: #{unpillar_forward.1} parent=11 // pred_fallthru
          _
        // Predicated region
        $region21: #{unpillar_forward.1} parent=11 // pred_check
          %p173 = pneg %p126
        $region22: #{unpillar_forward.1} parent=11 // pred_check_branch
          %175 = sbr.rel (%p173) target = $region24
        $region23: #{unpillar_forward.1} parent=11 // pred_region
          _
        $region24: #{unpillar_forward.1} parent=11 // pred_fallthru
          _
      $region12: #{unpillar_forward.1} parent=5 // pred_fallthru
        _
      %p176 = scmp.lt.s32.totalorder %s11, 4
      // Predicated region
      $region25: #{unpillar_forward.1} parent=5 // pred_check
        %p177 = pneg %p176
      $region26: #{unpillar_forward.1} parent=5 // pred_check_branch
        %179 = sbr.rel (%p177) target = $region28
      $region27: #{unpillar_forward.1} parent=5 // pred_region
        // Predicated region
        $region29: #{unpillar_forward.1} parent=27 // pred_check
          %p180 = pneg %p31
        $region30: #{unpillar_forward.1} parent=27 // pred_check_branch
          %182 = sbr.rel (%p180) target = $region32
        $region31: #{unpillar_forward.1} parent=27 // pred_region
          %s183 = smul.u32 185, %s11
          %s184 = ssub.s32 738, %s183
          %p185 = scmp.lt.s32.totalorder %s184, 185
          %s186 = scalar_select %p185, %s184, 185
          %s187 = smul.u32 64, %s186
          %p188 = scmp.lt.s32.totalorder %s183, 737
          %s189 = scalar_select %p188, %s183, 737
          %s190 = smul.addr %s189, 4
          %s191 = scalar_lea.vmem %s0, %s190
          %s192 = smul.u32 185, %s11
          %s193 = ssub.s32 738, %s192
          %p194 = scmp.lt.s32.totalorder %s193, 185
          %s195 = scalar_select %p194, %s193, 185
          %s196 = smul.u32 64, %s195
        $region32: #{unpillar_forward.1} parent=27 // pred_fallthru
          _
        // Predicated region
        $region33: #{unpillar_forward.1} parent=27 // pred_check
          %p197 = pneg %p57
        $region34: #{unpillar_forward.1} parent=27 // pred_check_branch
          %199 = sbr.rel (%p197) target = $region36
        $region35: #{unpillar_forward.1} parent=27 // pred_region
          %s200 = smul.u32 185, %s11
          %s201 = ssub.s32 738, %s200
          %p202 = scmp.lt.s32.totalorder %s201, 185
          %s203 = scalar_select %p202, %s201, 185
          %s204 = smul.u32 128, %s203
          %p205 = scmp.lt.s32.totalorder %s200, 737
          %s206 = scalar_select %p205, %s200, 737
          %s207 = smul.addr %s206, 8
          %s208 = scalar_lea.vmem %s1, %s207
          %s209 = smul.u32 185, %s11
          %s210 = ssub.s32 738, %s209
          %p211 = scmp.lt.s32.totalorder %s210, 185
          %s212 = scalar_select %p211, %s210, 185
          %s213 = smul.u32 128, %s212
        $region36: #{unpillar_forward.1} parent=27 // pred_fallthru
          _
      $region28: #{unpillar_forward.1} parent=5 // pred_fallthru
        _
      %p214 = scmp.le.s32.totalorder 1, %s11
      %p215 = scmp.lt.s32.totalorder %s11, 5
      %p216 = pnand %p214, %p215
      %p217 = pneg %p216
      // Predicated region
      $region37: #{unpillar_forward.1} parent=5 // pred_check
        _
      $region38: #{unpillar_forward.1} parent=5 // pred_check_branch
        %219 = sbr.rel (%p216) target = $region40
      $region39: #{unpillar_forward.1} parent=5 // pred_region
        %s220 = ssub.s32 %s11, 1
        %s221 = smul.u32 185, %s16
        %s222 = ssub.s32 738, %s221
        %p223 = scmp.lt.s32.totalorder %s222, 185
        %s224 = scalar_select %p223, %s222, 185
        %s225 = smul.u32 64, %s224
        %p226 = scmp.lt.s32.totalorder %s221, 737
        %s227 = scalar_select %p226, %s221, 737
        %s228 = smul.addr %s227, 4
        %s229 = scalar_lea.vmem %s0, %s228
        %p230 = pneg %p37
        %p231 = pneg %p34
        %s232 = smul.u32 185, %s16
        %s233 = ssub.s32 738, %s232
        %p234 = scmp.lt.s32.totalorder %s233, 185
        %s235 = scalar_select %p234, %s233, 185
        %s236 = smul.u32 128, %s235
        %p237 = scmp.lt.s32.totalorder %s232, 737
        %s238 = scalar_select %p237, %s232, 737
        %s239 = smul.addr %s238, 8
        %s240 = scalar_lea.vmem %s1, %s239
        %p241 = pneg %p63
        %p242 = pneg %p60
        %p243 = pneg %p84
        %p244 = pneg %p81
        %p245 = pneg %p105
        %p246 = pneg %p102
        %p247 = pneg %p126
        %p248 = pneg %p123
        %p249 = pneg %p152
        %p250 = pneg %p149
        %s251 = sand.u32 %s139, 1
        %s252 = sand.u32 %s139, 1
        %s253 = smul.addr %s252, 1480
        %s254 = scalar_lea.vmem [#allocation2], %s253
        %s255 = smul.u32 185, %s16
        %s256 = ssub.s32 738, %s255
        %p257 = scmp.lt.s32.totalorder %s256, 185
        %s258 = scalar_select %p257, %s256, 185
        %s259 = smul.u32 64, %s258
        %p260 = scmp.lt.s32.totalorder %s255, 737
        %s261 = scalar_select %p260, %s255, 737
        %s262 = smul.addr %s261, 4
        %s263 = scalar_lea.vmem %s0, %s262
        %s264 = smul.u32 185, %s16
        %s265 = ssub.s32 738, %s264
        %p266 = scmp.lt.s32.totalorder %s265, 185
        %s267 = scalar_select %p266, %s265, 185
        %s268 = smul.u32 64, %s267
        %s269 = smul.u32 185, %s16
        %s270 = ssub.s32 738, %s269
        %p271 = scmp.lt.s32.totalorder %s270, 185
        %s272 = scalar_select %p271, %s270, 185
        %s273 = smul.u32 128, %s272
        %p274 = scmp.lt.s32.totalorder %s269, 737
        %s275 = scalar_select %p274, %s269, 737
        %s276 = smul.addr %s275, 8
        %s277 = scalar_lea.vmem %s1, %s276
        %s278 = smul.u32 185, %s16
        %s279 = ssub.s32 738, %s278
        %p280 = scmp.lt.s32.totalorder %s279, 185
        %s281 = scalar_select %p280, %s279, 185
        %s282 = smul.u32 128, %s281
        %s283 = smul.u32 185, %s16
        %s284 = ssub.s32 738, %s283
        %p285 = scmp.lt.s32.totalorder %s284, 185
        %s286 = scalar_select %p285, %s284, 185
        %s287 = smul.u32 128, %s286
        %v289 = vld [vmem:[%s263] sm:$0xf]
        %v290 = vld [vmem:[%s263 + $0x4] sm:$0xf]
        %v291 = vld [vmem:[%s263 + $0x8] sm:$0xf]
        %v292 = vld [vmem:[%s263 + $0xc] sm:$0xf]
        %v293 = vld [vmem:[%s263 + $0x10] sm:$0xf]
        %v294 = vld [vmem:[%s263 + $0x14] sm:$0xf]
        %v295 = vld [vmem:[%s263 + $0x18] sm:$0xf]
        %v296 = vld [vmem:[%s263 + $0x1c] sm:$0xf]
        %v297 = vld [vmem:[%s263 + $0x20] sm:$0xf]
        %v298 = vld [vmem:[%s263 + $0x24] sm:$0xf]
        %v299 = vld [vmem:[%s263 + $0x28] sm:$0xf]
        %v300 = vld [vmem:[%s263 + $0x2c] sm:$0xf]
        %v301 = vld [vmem:[%s263 + $0x30] sm:$0xf]
        %v302 = vld [vmem:[%s263 + $0x34] sm:$0xf]
        %v303 = vld [vmem:[%s263 + $0x38] sm:$0xf]
        %v304 = vld [vmem:[%s263 + $0x3c] sm:$0xf]
        %v305 = vld [vmem:[%s263 + $0x40] sm:$0xf]
        %v306 = vld [vmem:[%s263 + $0x44] sm:$0xf]
        %v307 = vld [vmem:[%s263 + $0x48] sm:$0xf]
        %v308 = vld [vmem:[%s263 + $0x4c] sm:$0xf]
        %v309 = vld [vmem:[%s263 + $0x50] sm:$0xf]
        %v310 = vld [vmem:[%s263 + $0x54] sm:$0xf]
        %v311 = vld [vmem:[%s263 + $0x58] sm:$0xf]
        %v312 = vld [vmem:[%s263 + $0x5c] sm:$0xf]
        %v313 = vld [vmem:[%s263 + $0x60] sm:$0xf]
        %v314 = vld [vmem:[%s263 + $0x64] sm:$0xf]
        %v315 = vld [vmem:[%s263 + $0x68] sm:$0xf]
        %v316 = vld [vmem:[%s263 + $0x6c] sm:$0xf]
        %v317 = vld [vmem:[%s263 + $0x70] sm:$0xf]
        %v318 = vld [vmem:[%s263 + $0x74] sm:$0xf]
        %v319 = vld [vmem:[%s263 + $0x78] sm:$0xf]
        %v320 = vld [vmem:[%s263 + $0x7c] sm:$0xf]
        %v321 = vld [vmem:[%s263 + $0x80] sm:$0xf]
        %v322 = vld [vmem:[%s263 + $0x84] sm:$0xf]
        %v323 = vld [vmem:[%s263 + $0x88] sm:$0xf]
        %v324 = vld [vmem:[%s263 + $0x8c] sm:$0xf]
        %v325 = vld [vmem:[%s263 + $0x90] sm:$0xf]
        %v326 = vld [vmem:[%s263 + $0x94] sm:$0xf]
        %v327 = vld [vmem:[%s263 + $0x98] sm:$0xf]
        %v328 = vld [vmem:[%s263 + $0x9c] sm:$0xf]
        %v329 = vld [vmem:[%s263 + $0xa0] sm:$0xf]
        %v330 = vld [vmem:[%s263 + $0xa4] sm:$0xf]
        %v331 = vld [vmem:[%s263 + $0xa8] sm:$0xf]
        %v332 = vld [vmem:[%s263 + $0xac] sm:$0xf]
        %v333 = vld [vmem:[%s263 + $0xb0] sm:$0xf]
        %v334 = vld [vmem:[%s263 + $0xb4] sm:$0xf]
        %v335 = vld [vmem:[%s263 + $0xb8] sm:$0xf]
        %v336 = vld [vmem:[%s263 + $0xbc] sm:$0xf]
        %v337 = vld [vmem:[%s263 + $0xc0] sm:$0xf]
        %v338 = vld [vmem:[%s263 + $0xc4] sm:$0xf]
        %v339 = vld [vmem:[%s263 + $0xc8] sm:$0xf]
        %v340 = vld [vmem:[%s263 + $0xcc] sm:$0xf]
        %v341 = vld [vmem:[%s263 + $0xd0] sm:$0xf]
        %v342 = vld [vmem:[%s263 + $0xd4] sm:$0xf]
        %v343 = vld [vmem:[%s263 + $0xd8] sm:$0xf]
        %v344 = vld [vmem:[%s263 + $0xdc] sm:$0xf]
        %v345 = vld [vmem:[%s263 + $0xe0] sm:$0xf]
        %v346 = vld [vmem:[%s263 + $0xe4] sm:$0xf]
        %v347 = vld [vmem:[%s263 + $0xe8] sm:$0xf]
        %v348 = vld [vmem:[%s263 + $0xec] sm:$0xf]
        %v349 = vld [vmem:[%s263 + $0xf0] sm:$0xf]
        %v350 = vld [vmem:[%s263 + $0xf4] sm:$0xf]
        %v351 = vld [vmem:[%s263 + $0xf8] sm:$0xf]
        %v352 = vld [vmem:[%s263 + $0xfc] sm:$0xf]
        %v353 = vld [vmem:[%s263 + $0x100] sm:$0xf]
        %v354 = vld [vmem:[%s263 + $0x104] sm:$0xf]
        %v355 = vld [vmem:[%s263 + $0x108] sm:$0xf]
        %v356 = vld [vmem:[%s263 + $0x10c] sm:$0xf]
        %v357 = vld [vmem:[%s263 + $0x110] sm:$0xf]
        %v358 = vld [vmem:[%s263 + $0x114] sm:$0xf]
        %v359 = vld [vmem:[%s263 + $0x118] sm:$0xf]
        %v360 = vld [vmem:[%s263 + $0x11c] sm:$0xf]
        %v361 = vld [vmem:[%s263 + $0x120] sm:$0xf]
        %v362 = vld [vmem:[%s263 + $0x124] sm:$0xf]
        %v363 = vld [vmem:[%s263 + $0x128] sm:$0xf]
        %v364 = vld [vmem:[%s263 + $0x12c] sm:$0xf]
        %v365 = vld [vmem:[%s263 + $0x130] sm:$0xf]
        %v366 = vld [vmem:[%s263 + $0x134] sm:$0xf]
        %v367 = vld [vmem:[%s263 + $0x138] sm:$0xf]
        %v368 = vld [vmem:[%s263 + $0x13c] sm:$0xf]
        %v369 = vld [vmem:[%s263 + $0x140] sm:$0xf]
        %v370 = vld [vmem:[%s263 + $0x144] sm:$0xf]
        %v371 = vld [vmem:[%s263 + $0x148] sm:$0xf]
        %v372 = vld [vmem:[%s263 + $0x14c] sm:$0xf]
        %v373 = vld [vmem:[%s263 + $0x150] sm:$0xf]
        %v374 = vld [vmem:[%s263 + $0x154] sm:$0xf]
        %v375 = vld [vmem:[%s263 + $0x158] sm:$0xf]
        %v376 = vld [vmem:[%s263 + $0x15c] sm:$0xf]
        %v377 = vld [vmem:[%s263 + $0x160] sm:$0xf]
        %v378 = vld [vmem:[%s263 + $0x164] sm:$0xf]
        %v379 = vld [vmem:[%s263 + $0x168] sm:$0xf]
        %v380 = vld [vmem:[%s263 + $0x16c] sm:$0xf]
        %v381 = vld [vmem:[%s263 + $0x170] sm:$0xf]
        %v382 = vld [vmem:[%s263 + $0x174] sm:$0xf]
        %v383 = vld [vmem:[%s263 + $0x178] sm:$0xf]
        %v384 = vld [vmem:[%s263 + $0x17c] sm:$0xf]
        %v385 = vld [vmem:[%s263 + $0x180] sm:$0xf]
        %v386 = vld [vmem:[%s263 + $0x184] sm:$0xf]
        %v387 = vld [vmem:[%s263 + $0x188] sm:$0xf]
        %v388 = vld [vmem:[%s263 + $0x18c] sm:$0xf]
        %v389 = vld [vmem:[%s263 + $0x190] sm:$0xf]
        %v390 = vld [vmem:[%s263 + $0x194] sm:$0xf]
        %v391 = vld [vmem:[%s263 + $0x198] sm:$0xf]
        %v392 = vld [vmem:[%s263 + $0x19c] sm:$0xf]
        %v393 = vld [vmem:[%s263 + $0x1a0] sm:$0xf]
        %v394 = vld [vmem:[%s263 + $0x1a4] sm:$0xf]
        %v395 = vld [vmem:[%s263 + $0x1a8] sm:$0xf]
        %v396 = vld [vmem:[%s263 + $0x1ac] sm:$0xf]
        %v397 = vld [vmem:[%s263 + $0x1b0] sm:$0xf]
        %v398 = vld [vmem:[%s263 + $0x1b4] sm:$0xf]
        %v399 = vld [vmem:[%s263 + $0x1b8] sm:$0xf]
        %v400 = vld [vmem:[%s263 + $0x1bc] sm:$0xf]
        %v401 = vld [vmem:[%s263 + $0x1c0] sm:$0xf]
        %v402 = vld [vmem:[%s263 + $0x1c4] sm:$0xf]
        %v403 = vld [vmem:[%s263 + $0x1c8] sm:$0xf]
        %v404 = vld [vmem:[%s263 + $0x1cc] sm:$0xf]
        %v405 = vld [vmem:[%s263 + $0x1d0] sm:$0xf]
        %v406 = vld [vmem:[%s263 + $0x1d4] sm:$0xf]
        %v407 = vld [vmem:[%s263 + $0x1d8] sm:$0xf]
        %v408 = vld [vmem:[%s263 + $0x1dc] sm:$0xf]
        %v409 = vld [vmem:[%s263 + $0x1e0] sm:$0xf]
        %v410 = vld [vmem:[%s263 + $0x1e4] sm:$0xf]
        %v411 = vld [vmem:[%s263 + $0x1e8] sm:$0xf]
        %v412 = vld [vmem:[%s263 + $0x1ec] sm:$0xf]
        %v413 = vld [vmem:[%s263 + $0x1f0] sm:$0xf]
        %v414 = vld [vmem:[%s263 + $0x1f4] sm:$0xf]
        %v415 = vld [vmem:[%s263 + $0x1f8] sm:$0xf]
        %v416 = vld [vmem:[%s263 + $0x1fc] sm:$0xf]
        %v417 = vld [vmem:[%s263 + $0x200] sm:$0xf]
        %v418 = vld [vmem:[%s263 + $0x204] sm:$0xf]
        %v419 = vld [vmem:[%s263 + $0x208] sm:$0xf]
        %v420 = vld [vmem:[%s263 + $0x20c] sm:$0xf]
        %v421 = vld [vmem:[%s263 + $0x210] sm:$0xf]
        %v422 = vld [vmem:[%s263 + $0x214] sm:$0xf]
        %v423 = vld [vmem:[%s263 + $0x218] sm:$0xf]
        %v424 = vld [vmem:[%s263 + $0x21c] sm:$0xf]
        %v425 = vld [vmem:[%s263 + $0x220] sm:$0xf]
        %v426 = vld [vmem:[%s263 + $0x224] sm:$0xf]
        %v427 = vld [vmem:[%s263 + $0x228] sm:$0xf]
        %v428 = vld [vmem:[%s263 + $0x22c] sm:$0xf]
        %v429 = vld [vmem:[%s263 + $0x230] sm:$0xf]
        %v430 = vld [vmem:[%s263 + $0x234] sm:$0xf]
        %v431 = vld [vmem:[%s263 + $0x238] sm:$0xf]
        %v432 = vld [vmem:[%s263 + $0x23c] sm:$0xf]
        %v433 = vld [vmem:[%s263 + $0x240] sm:$0xf]
        %v434 = vld [vmem:[%s263 + $0x244] sm:$0xf]
        %v435 = vld [vmem:[%s263 + $0x248] sm:$0xf]
        %v436 = vld [vmem:[%s263 + $0x24c] sm:$0xf]
        %v437 = vld [vmem:[%s263 + $0x250] sm:$0xf]
        %v438 = vld [vmem:[%s263 + $0x254] sm:$0xf]
        %v439 = vld [vmem:[%s263 + $0x258] sm:$0xf]
        %v440 = vld [vmem:[%s263 + $0x25c] sm:$0xf]
        %v441 = vld [vmem:[%s263 + $0x260] sm:$0xf]
        %v442 = vld [vmem:[%s263 + $0x264] sm:$0xf]
        %v443 = vld [vmem:[%s263 + $0x268] sm:$0xf]
        %v444 = vld [vmem:[%s263 + $0x26c] sm:$0xf]
        %v445 = vld [vmem:[%s263 + $0x270] sm:$0xf]
        %v446 = vld [vmem:[%s263 + $0x274] sm:$0xf]
        %v447 = vld [vmem:[%s263 + $0x278] sm:$0xf]
        %v448 = vld [vmem:[%s263 + $0x27c] sm:$0xf]
        %v449 = vld [vmem:[%s263 + $0x280] sm:$0xf]
        %v450 = vld [vmem:[%s263 + $0x284] sm:$0xf]
        %v451 = vld [vmem:[%s263 + $0x288] sm:$0xf]
        %v452 = vld [vmem:[%s263 + $0x28c] sm:$0xf]
        %v453 = vld [vmem:[%s263 + $0x290] sm:$0xf]
        %v454 = vld [vmem:[%s263 + $0x294] sm:$0xf]
        %v455 = vld [vmem:[%s263 + $0x298] sm:$0xf]
        %v456 = vld [vmem:[%s263 + $0x29c] sm:$0xf]
        %v457 = vld [vmem:[%s263 + $0x2a0] sm:$0xf]
        %v458 = vld [vmem:[%s263 + $0x2a4] sm:$0xf]
        %v459 = vld [vmem:[%s263 + $0x2a8] sm:$0xf]
        %v460 = vld [vmem:[%s263 + $0x2ac] sm:$0xf]
        %v461 = vld [vmem:[%s263 + $0x2b0] sm:$0xf]
        %v462 = vld [vmem:[%s263 + $0x2b4] sm:$0xf]
        %v463 = vld [vmem:[%s263 + $0x2b8] sm:$0xf]
        %v464 = vld [vmem:[%s263 + $0x2bc] sm:$0xf]
        %v465 = vld [vmem:[%s263 + $0x2c0] sm:$0xf]
        %v466 = vld [vmem:[%s263 + $0x2c4] sm:$0xf]
        %v467 = vld [vmem:[%s263 + $0x2c8] sm:$0xf]
        %v468 = vld [vmem:[%s263 + $0x2cc] sm:$0xf]
        %v469 = vld [vmem:[%s263 + $0x2d0] sm:$0xf]
        %v470 = vld [vmem:[%s263 + $0x2d4] sm:$0xf]
        %v471 = vld [vmem:[%s263 + $0x2d8] sm:$0xf]
        %v472 = vld [vmem:[%s263 + $0x2dc] sm:$0xf]
        %v473 = vld [vmem:[%s263 + $0x2e0] sm:$0xf]
        %v474 = vld [vmem:[%s277] sm:$0xff]
        %v475 = vld [vmem:[%s277 + $0x8] sm:$0xff]
        %v476 = vld [vmem:[%s277 + $0x10] sm:$0xff]
        %v477 = vld [vmem:[%s277 + $0x18] sm:$0xff]
        %v478 = vld [vmem:[%s277 + $0x20] sm:$0xff]
        %v479 = vld [vmem:[%s277 + $0x28] sm:$0xff]
        %v480 = vld [vmem:[%s277 + $0x30] sm:$0xff]
        %v481 = vld [vmem:[%s277 + $0x38] sm:$0xff]
        %v482 = vld [vmem:[%s277 + $0x40] sm:$0xff]
        %v483 = vld [vmem:[%s277 + $0x48] sm:$0xff]
        %v484 = vld [vmem:[%s277 + $0x50] sm:$0xff]
        %v485 = vld [vmem:[%s277 + $0x58] sm:$0xff]
        %v486 = vld [vmem:[%s277 + $0x60] sm:$0xff]
        %v487 = vld [vmem:[%s277 + $0x68] sm:$0xff]
        %v488 = vld [vmem:[%s277 + $0x70] sm:$0xff]
        %v489 = vld [vmem:[%s277 + $0x78] sm:$0xff]
        %v490 = vld [vmem:[%s277 + $0x80] sm:$0xff]
        %v491 = vld [vmem:[%s277 + $0x88] sm:$0xff]
        %v492 = vld [vmem:[%s277 + $0x90] sm:$0xff]
        %v493 = vld [vmem:[%s277 + $0x98] sm:$0xff]
        %v494 = vld [vmem:[%s277 + $0xa0] sm:$0xff]
        %v495 = vld [vmem:[%s277 + $0xa8] sm:$0xff]
        %v496 = vld [vmem:[%s277 + $0xb0] sm:$0xff]
        %v497 = vld [vmem:[%s277 + $0xb8] sm:$0xff]
        %v498 = vld [vmem:[%s277 + $0xc0] sm:$0xff]
        %v499 = vld [vmem:[%s277 + $0xc8] sm:$0xff]
        %v500 = vld [vmem:[%s277 + $0xd0] sm:$0xff]
        %v501 = vld [vmem:[%s277 + $0xd8] sm:$0xff]
        %v502 = vld [vmem:[%s277 + $0xe0] sm:$0xff]
        %v503 = vld [vmem:[%s277 + $0xe8] sm:$0xff]
        %v504 = vld [vmem:[%s277 + $0xf0] sm:$0xff]
        %v505 = vld [vmem:[%s277 + $0xf8] sm:$0xff]
        %v506 = vld [vmem:[%s277 + $0x100] sm:$0xff]
        %v507 = vld [vmem:[%s277 + $0x108] sm:$0xff]
        %v508 = vld [vmem:[%s277 + $0x110] sm:$0xff]
        %v509 = vld [vmem:[%s277 + $0x118] sm:$0xff]
        %v510 = vld [vmem:[%s277 + $0x120] sm:$0xff]
        %v511 = vld [vmem:[%s277 + $0x128] sm:$0xff]
        %v512 = vld [vmem:[%s277 + $0x130] sm:$0xff]
        %v513 = vld [vmem:[%s277 + $0x138] sm:$0xff]
        %v514 = vld [vmem:[%s277 + $0x140] sm:$0xff]
        %v515 = vld [vmem:[%s277 + $0x148] sm:$0xff]
        %v516 = vld [vmem:[%s277 + $0x150] sm:$0xff]
        %v517 = vld [vmem:[%s277 + $0x158] sm:$0xff]
        %v518 = vld [vmem:[%s277 + $0x160] sm:$0xff]
        %v519 = vld [vmem:[%s277 + $0x168] sm:$0xff]
        %v520 = vld [vmem:[%s277 + $0x170] sm:$0xff]
        %v521 = vld [vmem:[%s277 + $0x178] sm:$0xff]
        %v522 = vld [vmem:[%s277 + $0x180] sm:$0xff]
        %v523 = vld [vmem:[%s277 + $0x188] sm:$0xff]
        %v524 = vld [vmem:[%s277 + $0x190] sm:$0xff]
        %v525 = vld [vmem:[%s277 + $0x198] sm:$0xff]
        %v526 = vld [vmem:[%s277 + $0x1a0] sm:$0xff]
        %v527 = vld [vmem:[%s277 + $0x1a8] sm:$0xff]
        %v528 = vld [vmem:[%s277 + $0x1b0] sm:$0xff]
        %v529 = vld [vmem:[%s277 + $0x1b8] sm:$0xff]
        %v530 = vld [vmem:[%s277 + $0x1c0] sm:$0xff]
        %v531 = vld [vmem:[%s277 + $0x1c8] sm:$0xff]
        %v532 = vld [vmem:[%s277 + $0x1d0] sm:$0xff]
        %v533 = vld [vmem:[%s277 + $0x1d8] sm:$0xff]
        %v534 = vld [vmem:[%s277 + $0x1e0] sm:$0xff]
        %v535 = vld [vmem:[%s277 + $0x1e8] sm:$0xff]
        %v536 = vld [vmem:[%s277 + $0x1f0] sm:$0xff]
        %v537 = vld [vmem:[%s277 + $0x1f8] sm:$0xff]
        %v538 = vld [vmem:[%s277 + $0x200] sm:$0xff]
        %v539 = vld [vmem:[%s277 + $0x208] sm:$0xff]
        %v540 = vld [vmem:[%s277 + $0x210] sm:$0xff]
        %v541 = vld [vmem:[%s277 + $0x218] sm:$0xff]
        %v542 = vld [vmem:[%s277 + $0x220] sm:$0xff]
        %v543 = vld [vmem:[%s277 + $0x228] sm:$0xff]
        %v544 = vld [vmem:[%s277 + $0x230] sm:$0xff]
        %v545 = vld [vmem:[%s277 + $0x238] sm:$0xff]
        %v546 = vld [vmem:[%s277 + $0x240] sm:$0xff]
        %v547 = vld [vmem:[%s277 + $0x248] sm:$0xff]
        %v548 = vld [vmem:[%s277 + $0x250] sm:$0xff]
        %v549 = vld [vmem:[%s277 + $0x258] sm:$0xff]
        %v550 = vld [vmem:[%s277 + $0x260] sm:$0xff]
        %v551 = vld [vmem:[%s277 + $0x268] sm:$0xff]
        %v552 = vld [vmem:[%s277 + $0x270] sm:$0xff]
        %v553 = vld [vmem:[%s277 + $0x278] sm:$0xff]
        %v554 = vld [vmem:[%s277 + $0x280] sm:$0xff]
        %v555 = vld [vmem:[%s277 + $0x288] sm:$0xff]
        %v556 = vld [vmem:[%s277 + $0x290] sm:$0xff]
        %v557 = vld [vmem:[%s277 + $0x298] sm:$0xff]
        %v558 = vld [vmem:[%s277 + $0x2a0] sm:$0xff]
        %v559 = vld [vmem:[%s277 + $0x2a8] sm:$0xff]
        %v560 = vld [vmem:[%s277 + $0x2b0] sm:$0xff]
        %v561 = vld [vmem:[%s277 + $0x2b8] sm:$0xff]
        %v562 = vld [vmem:[%s277 + $0x2c0] sm:$0xff]
        %v563 = vld [vmem:[%s277 + $0x2c8] sm:$0xff]
        %v564 = vld [vmem:[%s277 + $0x2d0] sm:$0xff]
        %v565 = vld [vmem:[%s277 + $0x2d8] sm:$0xff]
        %v566 = vld [vmem:[%s277 + $0x2e0] sm:$0xff]
        %v567 = vld [vmem:[%s277 + $0x2e8] sm:$0xff]
        %v568 = vld [vmem:[%s277 + $0x2f0] sm:$0xff]
        %v569 = vld [vmem:[%s277 + $0x2f8] sm:$0xff]
        %v570 = vld [vmem:[%s277 + $0x300] sm:$0xff]
        %v571 = vld [vmem:[%s277 + $0x308] sm:$0xff]
        %v572 = vld [vmem:[%s277 + $0x310] sm:$0xff]
        %v573 = vld [vmem:[%s277 + $0x318] sm:$0xff]
        %v574 = vld [vmem:[%s277 + $0x320] sm:$0xff]
        %v575 = vld [vmem:[%s277 + $0x328] sm:$0xff]
        %v576 = vld [vmem:[%s277 + $0x330] sm:$0xff]
        %v577 = vld [vmem:[%s277 + $0x338] sm:$0xff]
        %v578 = vld [vmem:[%s277 + $0x340] sm:$0xff]
        %v579 = vld [vmem:[%s277 + $0x348] sm:$0xff]
        %v580 = vld [vmem:[%s277 + $0x350] sm:$0xff]
        %v581 = vld [vmem:[%s277 + $0x358] sm:$0xff]
        %v582 = vld [vmem:[%s277 + $0x360] sm:$0xff]
        %v583 = vld [vmem:[%s277 + $0x368] sm:$0xff]
        %v584 = vld [vmem:[%s277 + $0x370] sm:$0xff]
        %v585 = vld [vmem:[%s277 + $0x378] sm:$0xff]
        %v586 = vld [vmem:[%s277 + $0x380] sm:$0xff]
        %v587 = vld [vmem:[%s277 + $0x388] sm:$0xff]
        %v588 = vld [vmem:[%s277 + $0x390] sm:$0xff]
        %v589 = vld [vmem:[%s277 + $0x398] sm:$0xff]
        %v590 = vld [vmem:[%s277 + $0x3a0] sm:$0xff]
        %v591 = vld [vmem:[%s277 + $0x3a8] sm:$0xff]
        %v592 = vld [vmem:[%s277 + $0x3b0] sm:$0xff]
        %v593 = vld [vmem:[%s277 + $0x3b8] sm:$0xff]
        %v594 = vld [vmem:[%s277 + $0x3c0] sm:$0xff]
        %v595 = vld [vmem:[%s277 + $0x3c8] sm:$0xff]
        %v596 = vld [vmem:[%s277 + $0x3d0] sm:$0xff]
        %v597 = vld [vmem:[%s277 + $0x3d8] sm:$0xff]
        %v598 = vld [vmem:[%s277 + $0x3e0] sm:$0xff]
        %v599 = vld [vmem:[%s277 + $0x3e8] sm:$0xff]
        %v600 = vld [vmem:[%s277 + $0x3f0] sm:$0xff]
        %v601 = vld [vmem:[%s277 + $0x3f8] sm:$0xff]
        %v602 = vld [vmem:[%s277 + $0x400] sm:$0xff]
        %v603 = vld [vmem:[%s277 + $0x408] sm:$0xff]
        %v604 = vld [vmem:[%s277 + $0x410] sm:$0xff]
        %v605 = vld [vmem:[%s277 + $0x418] sm:$0xff]
        %v606 = vld [vmem:[%s277 + $0x420] sm:$0xff]
        %v607 = vld [vmem:[%s277 + $0x428] sm:$0xff]
        %v608 = vld [vmem:[%s277 + $0x430] sm:$0xff]
        %v609 = vld [vmem:[%s277 + $0x438] sm:$0xff]
        %v610 = vld [vmem:[%s277 + $0x440] sm:$0xff]
        %v611 = vld [vmem:[%s277 + $0x448] sm:$0xff]
        %v612 = vld [vmem:[%s277 + $0x450] sm:$0xff]
        %v613 = vld [vmem:[%s277 + $0x458] sm:$0xff]
        %v614 = vld [vmem:[%s277 + $0x460] sm:$0xff]
        %v615 = vld [vmem:[%s277 + $0x468] sm:$0xff]
        %v616 = vld [vmem:[%s277 + $0x470] sm:$0xff]
        %v617 = vld [vmem:[%s277 + $0x478] sm:$0xff]
        %v618 = vld [vmem:[%s277 + $0x480] sm:$0xff]
        %v619 = vld [vmem:[%s277 + $0x488] sm:$0xff]
        %v620 = vld [vmem:[%s277 + $0x490] sm:$0xff]
        %v621 = vld [vmem:[%s277 + $0x498] sm:$0xff]
        %v622 = vld [vmem:[%s277 + $0x4a0] sm:$0xff]
        %v623 = vld [vmem:[%s277 + $0x4a8] sm:$0xff]
        %v624 = vld [vmem:[%s277 + $0x4b0] sm:$0xff]
        %v625 = vld [vmem:[%s277 + $0x4b8] sm:$0xff]
        %v626 = vld [vmem:[%s277 + $0x4c0] sm:$0xff]
        %v627 = vld [vmem:[%s277 + $0x4c8] sm:$0xff]
        %v628 = vld [vmem:[%s277 + $0x4d0] sm:$0xff]
        %v629 = vld [vmem:[%s277 + $0x4d8] sm:$0xff]
        %v630 = vld [vmem:[%s277 + $0x4e0] sm:$0xff]
        %v631 = vld [vmem:[%s277 + $0x4e8] sm:$0xff]
        %v632 = vld [vmem:[%s277 + $0x4f0] sm:$0xff]
        %v633 = vld [vmem:[%s277 + $0x4f8] sm:$0xff]
        %v634 = vld [vmem:[%s277 + $0x500] sm:$0xff]
        %v635 = vld [vmem:[%s277 + $0x508] sm:$0xff]
        %v636 = vld [vmem:[%s277 + $0x510] sm:$0xff]
        %v637 = vld [vmem:[%s277 + $0x518] sm:$0xff]
        %v638 = vld [vmem:[%s277 + $0x520] sm:$0xff]
        %v639 = vld [vmem:[%s277 + $0x528] sm:$0xff]
        %v640 = vld [vmem:[%s277 + $0x530] sm:$0xff]
        %v641 = vld [vmem:[%s277 + $0x538] sm:$0xff]
        %v642 = vld [vmem:[%s277 + $0x540] sm:$0xff]
        %v643 = vld [vmem:[%s277 + $0x548] sm:$0xff]
        %v644 = vld [vmem:[%s277 + $0x550] sm:$0xff]
        %v645 = vld [vmem:[%s277 + $0x558] sm:$0xff]
        %v646 = vld [vmem:[%s277 + $0x560] sm:$0xff]
        %v647 = vld [vmem:[%s277 + $0x568] sm:$0xff]
        %v648 = vld [vmem:[%s277 + $0x570] sm:$0xff]
        %v649 = vld [vmem:[%s277 + $0x578] sm:$0xff]
        %v650 = vld [vmem:[%s277 + $0x580] sm:$0xff]
        %v651 = vld [vmem:[%s277 + $0x588] sm:$0xff]
        %v652 = vld [vmem:[%s277 + $0x590] sm:$0xff]
        %v653 = vld [vmem:[%s277 + $0x598] sm:$0xff]
        %v654 = vld [vmem:[%s277 + $0x5a0] sm:$0xff]
        %v655 = vld [vmem:[%s277 + $0x5a8] sm:$0xff]
        %v656 = vld [vmem:[%s277 + $0x5b0] sm:$0xff]
        %v657 = vld [vmem:[%s277 + $0x5b8] sm:$0xff]
        %v658 = vld [vmem:[%s277 + $0x5c0] sm:$0xff]
        %v659 = vpack.c.bf16 %v475, %v474
        %v660 = vpack.c.bf16 %v477, %v476
        %v661 = vpack.c.bf16 %v479, %v478
        %v662 = vpack.c.bf16 %v481, %v480
        %v663 = vpack.c.bf16 %v483, %v482
        %v664 = vpack.c.bf16 %v485, %v484
        %v665 = vpack.c.bf16 %v487, %v486
        %v666 = vpack.c.bf16 %v489, %v488
        %v667 = vpack.c.bf16 %v491, %v490
        %v668 = vpack.c.bf16 %v493, %v492
        %v669 = vpack.c.bf16 %v495, %v494
        %v670 = vpack.c.bf16 %v497, %v496
        %v671 = vpack.c.bf16 %v499, %v498
        %v672 = vpack.c.bf16 %v501, %v500
        %v673 = vpack.c.bf16 %v503, %v502
        %v674 = vpack.c.bf16 %v505, %v504
        %v675 = vpack.c.bf16 %v507, %v506
        %v676 = vpack.c.bf16 %v509, %v508
        %v677 = vpack.c.bf16 %v511, %v510
        %v678 = vpack.c.bf16 %v513, %v512
        %v679 = vpack.c.bf16 %v515, %v514
        %v680 = vpack.c.bf16 %v517, %v516
        %v681 = vpack.c.bf16 %v519, %v518
        %v682 = vpack.c.bf16 %v521, %v520
        %v683 = vpack.c.bf16 %v523, %v522
        %v684 = vpack.c.bf16 %v525, %v524
        %v685 = vpack.c.bf16 %v527, %v526
        %v686 = vpack.c.bf16 %v529, %v528
        %v687 = vpack.c.bf16 %v531, %v530
        %v688 = vpack.c.bf16 %v533, %v532
        %v689 = vpack.c.bf16 %v535, %v534
        %v690 = vpack.c.bf16 %v537, %v536
        %v691 = vpack.c.bf16 %v539, %v538
        %v692 = vpack.c.bf16 %v541, %v540
        %v693 = vpack.c.bf16 %v543, %v542
        %v694 = vpack.c.bf16 %v545, %v544
        %v695 = vpack.c.bf16 %v547, %v546
        %v696 = vpack.c.bf16 %v549, %v548
        %v697 = vpack.c.bf16 %v551, %v550
        %v698 = vpack.c.bf16 %v553, %v552
        %v699 = vpack.c.bf16 %v555, %v554
        %v700 = vpack.c.bf16 %v557, %v556
        %v701 = vpack.c.bf16 %v559, %v558
        %v702 = vpack.c.bf16 %v561, %v560
        %v703 = vpack.c.bf16 %v563, %v562
        %v704 = vpack.c.bf16 %v565, %v564
        %v705 = vpack.c.bf16 %v567, %v566
        %v706 = vpack.c.bf16 %v569, %v568
        %v707 = vpack.c.bf16 %v571, %v570
        %v708 = vpack.c.bf16 %v573, %v572
        %v709 = vpack.c.bf16 %v575, %v574
        %v710 = vpack.c.bf16 %v577, %v576
        %v711 = vpack.c.bf16 %v579, %v578
        %v712 = vpack.c.bf16 %v581, %v580
        %v713 = vpack.c.bf16 %v583, %v582
        %v714 = vpack.c.bf16 %v585, %v584
        %v715 = vpack.c.bf16 %v587, %v586
        %v716 = vpack.c.bf16 %v589, %v588
        %v717 = vpack.c.bf16 %v591, %v590
        %v718 = vpack.c.bf16 %v593, %v592
        %v719 = vpack.c.bf16 %v595, %v594
        %v720 = vpack.c.bf16 %v597, %v596
        %v721 = vpack.c.bf16 %v599, %v598
        %v722 = vpack.c.bf16 %v601, %v600
        %v723 = vpack.c.bf16 %v603, %v602
        %v724 = vpack.c.bf16 %v605, %v604
        %v725 = vpack.c.bf16 %v607, %v606
        %v726 = vpack.c.bf16 %v609, %v608
        %v727 = vpack.c.bf16 %v611, %v610
        %v728 = vpack.c.bf16 %v613, %v612
        %v729 = vpack.c.bf16 %v615, %v614
        %v730 = vpack.c.bf16 %v617, %v616
        %v731 = vpack.c.bf16 %v619, %v618
        %v732 = vpack.c.bf16 %v621, %v620
        %v733 = vpack.c.bf16 %v623, %v622
        %v734 = vpack.c.bf16 %v625, %v624
        %v735 = vpack.c.bf16 %v627, %v626
        %v736 = vpack.c.bf16 %v629, %v628
        %v737 = vpack.c.bf16 %v631, %v630
        %v738 = vpack.c.bf16 %v633, %v632
        %v739 = vpack.c.bf16 %v635, %v634
        %v740 = vpack.c.bf16 %v637, %v636
        %v741 = vpack.c.bf16 %v639, %v638
        %v742 = vpack.c.bf16 %v641, %v640
        %v743 = vpack.c.bf16 %v643, %v642
        %v744 = vpack.c.bf16 %v645, %v644
        %v745 = vpack.c.bf16 %v647, %v646
        %v746 = vpack.c.bf16 %v649, %v648
        %v747 = vpack.c.bf16 %v651, %v650
        %v748 = vpack.c.bf16 %v653, %v652
        %v749 = vpack.c.bf16 %v655, %v654
        %v750 = vpack.c.bf16 %v657, %v656
        %v751 = vpack.c.bf16 %v658, %v658
        %v752 = vld [vmem:[%s2] sm:$0xf]
        %v753 = vld [vmem:[%s2 + $0x4] sm:$0xf]
        %v754 = vld [vmem:[%s2 + $0x8] sm:$0xf]
        %v755 = vld [vmem:[%s2 + $0xc] sm:$0xf]
        %v756 = vld [vmem:[%s2 + $0x10] sm:$0xf]
        %v757 = vld [vmem:[%s2 + $0x14] sm:$0xf]
        %v758 = vld [vmem:[%s2 + $0x18] sm:$0xf]
        %v759 = vld [vmem:[%s2 + $0x1c] sm:$0xf]
        %v760 = vld [vmem:[%s3] sm:$0xf]
        %v761 = vld [vmem:[%s3 + $0x4] sm:$0xf]
        %v762 = vld [vmem:[%s3 + $0x8] sm:$0xf]
        %v763 = vld [vmem:[%s3 + $0xc] sm:$0xf]
        %v764 = vld [vmem:[%s3 + $0x10] sm:$0xf]
        %v765 = vld [vmem:[%s3 + $0x14] sm:$0xf]
        %v766 = vld [vmem:[%s3 + $0x18] sm:$0xf]
        %v767 = vld [vmem:[%s3 + $0x1c] sm:$0xf]
        %v776 = vunpack.c.l.b16 %v760
        %v777 = vunpack.c.l.b16 %v761
        %v778 = vunpack.c.l.b16 %v762
        %v779 = vunpack.c.l.b16 %v763
        %v780 = vunpack.c.l.b16 %v764
        %v781 = vunpack.c.l.b16 %v765
        %v782 = vunpack.c.l.b16 %v766
        %v783 = vunpack.c.l.b16 %v767
        %v784 = vpack.c.b16 %v777, %v776
        %v785 = vpack.c.b16 %v779, %v778
        %v786 = vpack.c.b16 %v781, %v780
        %v787 = vpack.c.b16 %v783, %v782
        %vm792 = vcmask 523264
        %v794 = vsel %vm792, %v659, 0
        %v797 = vsel %vm792, %v660, 0
        %v800 = vsel %vm792, %v661, 0
        %v803 = vsel %vm792, %v662, 0
        %v806 = vsel %vm792, %v663, 0
        %v809 = vsel %vm792, %v664, 0
        %v812 = vsel %vm792, %v665, 0
        %v815 = vsel %vm792, %v666, 0
        %v818 = vsel %vm792, %v667, 0
        %v821 = vsel %vm792, %v668, 0
        %v824 = vsel %vm792, %v669, 0
        %v827 = vsel %vm792, %v670, 0
        %v830 = vsel %vm792, %v671, 0
        %v833 = vsel %vm792, %v672, 0
        %v836 = vsel %vm792, %v673, 0
        %v839 = vsel %vm792, %v674, 0
        %v842 = vsel %vm792, %v675, 0
        %v845 = vsel %vm792, %v676, 0
        %v848 = vsel %vm792, %v677, 0
        %v851 = vsel %vm792, %v678, 0
        %v854 = vsel %vm792, %v679, 0
        %v857 = vsel %vm792, %v680, 0
        %v860 = vsel %vm792, %v681, 0
        %v863 = vsel %vm792, %v682, 0
        %v866 = vsel %vm792, %v683, 0
        %v869 = vsel %vm792, %v684, 0
        %v872 = vsel %vm792, %v685, 0
        %v875 = vsel %vm792, %v686, 0
        %v878 = vsel %vm792, %v687, 0
        %v881 = vsel %vm792, %v688, 0
        %v884 = vsel %vm792, %v689, 0
        %v887 = vsel %vm792, %v690, 0
        %v890 = vsel %vm792, %v691, 0
        %v893 = vsel %vm792, %v692, 0
        %v896 = vsel %vm792, %v693, 0
        %v899 = vsel %vm792, %v694, 0
        %v902 = vsel %vm792, %v695, 0
        %v905 = vsel %vm792, %v696, 0
        %v908 = vsel %vm792, %v697, 0
        %v911 = vsel %vm792, %v698, 0
        %v914 = vsel %vm792, %v699, 0
        %v917 = vsel %vm792, %v700, 0
        %v920 = vsel %vm792, %v701, 0
        %v923 = vsel %vm792, %v702, 0
        %v926 = vsel %vm792, %v703, 0
        %v929 = vsel %vm792, %v704, 0
        %v932 = vsel %vm792, %v705, 0
        %v935 = vsel %vm792, %v706, 0
        %v938 = vsel %vm792, %v707, 0
        %v941 = vsel %vm792, %v708, 0
        %v944 = vsel %vm792, %v709, 0
        %v947 = vsel %vm792, %v710, 0
        %v950 = vsel %vm792, %v711, 0
        %v953 = vsel %vm792, %v712, 0
        %v956 = vsel %vm792, %v713, 0
        %v959 = vsel %vm792, %v714, 0
        %v962 = vsel %vm792, %v715, 0
        %v965 = vsel %vm792, %v716, 0
        %v968 = vsel %vm792, %v717, 0
        %v971 = vsel %vm792, %v718, 0
        %v974 = vsel %vm792, %v719, 0
        %v977 = vsel %vm792, %v720, 0
        %v980 = vsel %vm792, %v721, 0
        %v983 = vsel %vm792, %v722, 0
        %v986 = vsel %vm792, %v723, 0
        %v989 = vsel %vm792, %v724, 0
        %v992 = vsel %vm792, %v725, 0
        %v995 = vsel %vm792, %v726, 0
        %v998 = vsel %vm792, %v727, 0
        %v1001 = vsel %vm792, %v728, 0
        %v1004 = vsel %vm792, %v729, 0
        %v1007 = vsel %vm792, %v730, 0
        %v1010 = vsel %vm792, %v731, 0
        %v1013 = vsel %vm792, %v732, 0
        %v1016 = vsel %vm792, %v733, 0
        %v1019 = vsel %vm792, %v734, 0
        %v1022 = vsel %vm792, %v735, 0
        %v1025 = vsel %vm792, %v736, 0
        %v1028 = vsel %vm792, %v737, 0
        %v1031 = vsel %vm792, %v738, 0
        %v1034 = vsel %vm792, %v739, 0
        %v1037 = vsel %vm792, %v740, 0
        %v1040 = vsel %vm792, %v741, 0
        %v1043 = vsel %vm792, %v742, 0
        %v1046 = vsel %vm792, %v743, 0
        %v1049 = vsel %vm792, %v744, 0
        %v1052 = vsel %vm792, %v745, 0
        %v1055 = vsel %vm792, %v746, 0
        %v1058 = vsel %vm792, %v747, 0
        %v1061 = vsel %vm792, %v748, 0
        %v1064 = vsel %vm792, %v749, 0
        %v1067 = vsel %vm792, %v750, 0
        %v1070 = vsel %vm792, %v751, 0
        %1072 = vmatprep.subr.bf16.mxu0 0
        %1073 = vmatpush1.bf16.msra.mxu0 0
        %1074 = vmatprep.subr.bf16.mxu0 0
        %1075 = vmatpush1.bf16.msra.mxu0 0
        %1076 = vmatprep.subr.bf16.mxu0 0
        %1077 = vmatpush1.bf16.msra.mxu0 0
        %1078 = vmatprep.subr.bf16.mxu0 0
        %1079 = vmatpush1.bf16.msra.mxu0 0
        %1080 = vmatprep.subr.bf16.mxu0 0
        %1081 = vmatpush1.bf16.msra.mxu0 %v787
        %1082 = vmatprep.subr.bf16.mxu0 0
        %1083 = vmatpush1.bf16.msra.mxu0 %v786
        %1084 = vmatprep.subr.bf16.mxu0 0
        %1085 = vmatpush1.bf16.msra.mxu0 %v785
        %1086 = vmatprep.subr.bf16.mxu0 0
        %1087 = vmatpush1.bf16.msra.mxu0 %v784
        %1088 = vmatprep.subr.bf16.mxu0 0
        %1089 = vmatpush2.bf16.msra.mxu0 0
        %1090 = vmatprep.subr.bf16.mxu0 0
        %1091 = vmatpush2.bf16.msra.mxu0 0
        %1092 = vmatprep.subr.bf16.mxu0 0
        %1093 = vmatpush2.bf16.msra.mxu0 0
        %1094 = vmatprep.subr.bf16.mxu0 0
        %1095 = vmatpush2.bf16.msra.mxu0 0
        %1096 = vmatprep.subr.bf16.mxu0 0
        %1097 = vmatpush2.bf16.msra.mxu0 0
        %1098 = vmatprep.subr.bf16.mxu0 0
        %1099 = vmatpush2.bf16.msra.mxu0 0
        %1100 = vmatprep.subr.bf16.mxu0 0
        %1101 = vmatpush2.bf16.msra.mxu0 0
        %1102 = vmatprep.subr.bf16.mxu0 0
        %1103 = vmatpush2.bf16.msra.mxu0 0
        %1104 = vmatprep.mubr.bf16.mxu0 0
        %1105 = vmatmul.mubr.bf16.gmra.mxu0 %v794
        %v1106 = vpop.f32.mrf.mxu0
        %v1107 = vadd.f32 0.0, %v1106
        %v1108 = vpop.f32.mrf.mxu0
        %v1109 = vpop.f32.mrf.mxu0
        %v1110 = vadd.f32 0.0, %v1109
        %v1111 = vpop.f32.mrf.mxu0
        %1112 = vmatprep.mubr.bf16.mxu0 0
        %1113 = vmatmul.mubr.bf16.gmra.mxu0 %v797
        %v1114 = vpop.f32.mrf.mxu0
        %v1115 = vadd.f32 0.0, %v1114
        %v1116 = vpop.f32.mrf.mxu0
        %v1117 = vpop.f32.mrf.mxu0
        %v1118 = vadd.f32 0.0, %v1117
        %v1119 = vpop.f32.mrf.mxu0
        %1120 = vmatprep.mubr.bf16.mxu0 0
        %1121 = vmatmul.mubr.bf16.gmra.mxu0 %v800
        %v1122 = vpop.f32.mrf.mxu0
        %v1123 = vadd.f32 0.0, %v1122
        %v1124 = vpop.f32.mrf.mxu0
        %v1125 = vpop.f32.mrf.mxu0
        %v1126 = vadd.f32 0.0, %v1125
        %v1127 = vpop.f32.mrf.mxu0
        %1128 = vmatprep.mubr.bf16.mxu0 0
        %1129 = vmatmul.mubr.bf16.gmra.mxu0 %v803
        %v1130 = vpop.f32.mrf.mxu0
        %v1131 = vadd.f32 0.0, %v1130
        %v1132 = vpop.f32.mrf.mxu0
        %v1133 = vpop.f32.mrf.mxu0
        %v1134 = vadd.f32 0.0, %v1133
        %v1135 = vpop.f32.mrf.mxu0
        %1136 = vmatprep.mubr.bf16.mxu0 0
        %1137 = vmatmul.mubr.bf16.gmra.mxu0 %v806
        %v1138 = vpop.f32.mrf.mxu0
        %v1139 = vadd.f32 0.0, %v1138
        %v1140 = vpop.f32.mrf.mxu0
        %v1141 = vpop.f32.mrf.mxu0
        %v1142 = vadd.f32 0.0, %v1141
        %v1143 = vpop.f32.mrf.mxu0
        %1144 = vmatprep.mubr.bf16.mxu0 0
        %1145 = vmatmul.mubr.bf16.gmra.mxu0 %v809
        %v1146 = vpop.f32.mrf.mxu0
        %v1147 = vadd.f32 0.0, %v1146
        %v1148 = vpop.f32.mrf.mxu0
        %v1149 = vpop.f32.mrf.mxu0
        %v1150 = vadd.f32 0.0, %v1149
        %v1151 = vpop.f32.mrf.mxu0
        %1152 = vmatprep.mubr.bf16.mxu0 0
        %1153 = vmatmul.mubr.bf16.gmra.mxu0 %v812
        %v1154 = vpop.f32.mrf.mxu0
        %v1155 = vadd.f32 0.0, %v1154
        %v1156 = vpop.f32.mrf.mxu0
        %v1157 = vpop.f32.mrf.mxu0
        %v1158 = vadd.f32 0.0, %v1157
        %v1159 = vpop.f32.mrf.mxu0
        %1160 = vmatprep.mubr.bf16.mxu0 0
        %1161 = vmatmul.mubr.bf16.gmra.mxu0 %v815
        %v1162 = vpop.f32.mrf.mxu0
        %v1163 = vadd.f32 0.0, %v1162
        %v1164 = vpop.f32.mrf.mxu0
        %v1165 = vpop.f32.mrf.mxu0
        %v1166 = vadd.f32 0.0, %v1165
        %v1167 = vpop.f32.mrf.mxu0
        %1168 = vmatprep.mubr.bf16.mxu0 0
        %1169 = vmatmul.mubr.bf16.gmra.mxu0 %v818
        %v1170 = vpop.f32.mrf.mxu0
        %v1171 = vadd.f32 0.0, %v1170
        %v1172 = vpop.f32.mrf.mxu0
        %v1173 = vpop.f32.mrf.mxu0
        %v1174 = vadd.f32 0.0, %v1173
        %v1175 = vpop.f32.mrf.mxu0
        %1176 = vmatprep.mubr.bf16.mxu0 0
        %1177 = vmatmul.mubr.bf16.gmra.mxu0 %v821
        %v1178 = vpop.f32.mrf.mxu0
        %v1179 = vadd.f32 0.0, %v1178
        %v1180 = vpop.f32.mrf.mxu0
        %v1181 = vpop.f32.mrf.mxu0
        %v1182 = vadd.f32 0.0, %v1181
        %v1183 = vpop.f32.mrf.mxu0
        %1184 = vmatprep.mubr.bf16.mxu0 0
        %1185 = vmatmul.mubr.bf16.gmra.mxu0 %v824
        %v1186 = vpop.f32.mrf.mxu0
        %v1187 = vadd.f32 0.0, %v1186
        %v1188 = vpop.f32.mrf.mxu0
        %v1189 = vpop.f32.mrf.mxu0
        %v1190 = vadd.f32 0.0, %v1189
        %v1191 = vpop.f32.mrf.mxu0
        %1192 = vmatprep.mubr.bf16.mxu0 0
        %1193 = vmatmul.mubr.bf16.gmra.mxu0 %v827
        %v1194 = vpop.f32.mrf.mxu0
        %v1195 = vadd.f32 0.0, %v1194
        %v1196 = vpop.f32.mrf.mxu0
        %v1197 = vpop.f32.mrf.mxu0
        %v1198 = vadd.f32 0.0, %v1197
        %v1199 = vpop.f32.mrf.mxu0
        %1200 = vmatprep.mubr.bf16.mxu0 0
        %1201 = vmatmul.mubr.bf16.gmra.mxu0 %v830
        %v1202 = vpop.f32.mrf.mxu0
        %v1203 = vadd.f32 0.0, %v1202
        %v1204 = vpop.f32.mrf.mxu0
        %v1205 = vpop.f32.mrf.mxu0
        %v1206 = vadd.f32 0.0, %v1205
        %v1207 = vpop.f32.mrf.mxu0
        %1208 = vmatprep.mubr.bf16.mxu0 0
        %1209 = vmatmul.mubr.bf16.gmra.mxu0 %v833
        %v1210 = vpop.f32.mrf.mxu0
        %v1211 = vadd.f32 0.0, %v1210
        %v1212 = vpop.f32.mrf.mxu0
        %v1213 = vpop.f32.mrf.mxu0
        %v1214 = vadd.f32 0.0, %v1213
        %v1215 = vpop.f32.mrf.mxu0
        %1216 = vmatprep.mubr.bf16.mxu0 0
        %1217 = vmatmul.mubr.bf16.gmra.mxu0 %v836
        %v1218 = vpop.f32.mrf.mxu0
        %v1219 = vadd.f32 0.0, %v1218
        %v1220 = vpop.f32.mrf.mxu0
        %v1221 = vpop.f32.mrf.mxu0
        %v1222 = vadd.f32 0.0, %v1221
        %v1223 = vpop.f32.mrf.mxu0
        %1224 = vmatprep.mubr.bf16.mxu0 0
        %1225 = vmatmul.mubr.bf16.gmra.mxu0 %v839
        %v1226 = vpop.f32.mrf.mxu0
        %v1227 = vadd.f32 0.0, %v1226
        %v1228 = vpop.f32.mrf.mxu0
        %v1229 = vpop.f32.mrf.mxu0
        %v1230 = vadd.f32 0.0, %v1229
        %v1231 = vpop.f32.mrf.mxu0
        %1232 = vmatprep.mubr.bf16.mxu0 0
        %1233 = vmatmul.mubr.bf16.gmra.mxu0 %v842
        %v1234 = vpop.f32.mrf.mxu0
        %v1235 = vadd.f32 0.0, %v1234
        %v1236 = vpop.f32.mrf.mxu0
        %v1237 = vpop.f32.mrf.mxu0
        %v1238 = vadd.f32 0.0, %v1237
        %v1239 = vpop.f32.mrf.mxu0
        %1240 = vmatprep.mubr.bf16.mxu0 0
        %1241 = vmatmul.mubr.bf16.gmra.mxu0 %v845
        %v1242 = vpop.f32.mrf.mxu0
        %v1243 = vadd.f32 0.0, %v1242
        %v1244 = vpop.f32.mrf.mxu0
        %v1245 = vpop.f32.mrf.mxu0
        %v1246 = vadd.f32 0.0, %v1245
        %v1247 = vpop.f32.mrf.mxu0
        %1248 = vmatprep.mubr.bf16.mxu0 0
        %1249 = vmatmul.mubr.bf16.gmra.mxu0 %v848
        %v1250 = vpop.f32.mrf.mxu0
        %v1251 = vadd.f32 0.0, %v1250
        %v1252 = vpop.f32.mrf.mxu0
        %v1253 = vpop.f32.mrf.mxu0
        %v1254 = vadd.f32 0.0, %v1253
        %v1255 = vpop.f32.mrf.mxu0
        %1256 = vmatprep.mubr.bf16.mxu0 0
        %1257 = vmatmul.mubr.bf16.gmra.mxu0 %v851
        %v1258 = vpop.f32.mrf.mxu0
        %v1259 = vadd.f32 0.0, %v1258
        %v1260 = vpop.f32.mrf.mxu0
        %v1261 = vpop.f32.mrf.mxu0
        %v1262 = vadd.f32 0.0, %v1261
        %v1263 = vpop.f32.mrf.mxu0
        %1264 = vmatprep.mubr.bf16.mxu0 0
        %1265 = vmatmul.mubr.bf16.gmra.mxu0 %v854
        %v1266 = vpop.f32.mrf.mxu0
        %v1267 = vadd.f32 0.0, %v1266
        %v1268 = vpop.f32.mrf.mxu0
        %v1269 = vpop.f32.mrf.mxu0
        %v1270 = vadd.f32 0.0, %v1269
        %v1271 = vpop.f32.mrf.mxu0
        %1272 = vmatprep.mubr.bf16.mxu0 0
        %1273 = vmatmul.mubr.bf16.gmra.mxu0 %v857
        %v1274 = vpop.f32.mrf.mxu0
        %v1275 = vadd.f32 0.0, %v1274
        %v1276 = vpop.f32.mrf.mxu0
        %v1277 = vpop.f32.mrf.mxu0
        %v1278 = vadd.f32 0.0, %v1277
        %v1279 = vpop.f32.mrf.mxu0
        %1280 = vmatprep.mubr.bf16.mxu0 0
        %1281 = vmatmul.mubr.bf16.gmra.mxu0 %v860
        %v1282 = vpop.f32.mrf.mxu0
        %v1283 = vadd.f32 0.0, %v1282
        %v1284 = vpop.f32.mrf.mxu0
        %v1285 = vpop.f32.mrf.mxu0
        %v1286 = vadd.f32 0.0, %v1285
        %v1287 = vpop.f32.mrf.mxu0
        %1288 = vmatprep.mubr.bf16.mxu0 0
        %1289 = vmatmul.mubr.bf16.gmra.mxu0 %v863
        %v1290 = vpop.f32.mrf.mxu0
        %v1291 = vadd.f32 0.0, %v1290
        %v1292 = vpop.f32.mrf.mxu0
        %v1293 = vpop.f32.mrf.mxu0
        %v1294 = vadd.f32 0.0, %v1293
        %v1295 = vpop.f32.mrf.mxu0
        %1296 = vmatprep.mubr.bf16.mxu0 0
        %1297 = vmatmul.mubr.bf16.gmra.mxu0 %v866
        %v1298 = vpop.f32.mrf.mxu0
        %v1299 = vadd.f32 0.0, %v1298
        %v1300 = vpop.f32.mrf.mxu0
        %v1301 = vpop.f32.mrf.mxu0
        %v1302 = vadd.f32 0.0, %v1301
        %v1303 = vpop.f32.mrf.mxu0
        %1304 = vmatprep.mubr.bf16.mxu0 0
        %1305 = vmatmul.mubr.bf16.gmra.mxu0 %v869
        %v1306 = vpop.f32.mrf.mxu0
        %v1307 = vadd.f32 0.0, %v1306
        %v1308 = vpop.f32.mrf.mxu0
        %v1309 = vpop.f32.mrf.mxu0
        %v1310 = vadd.f32 0.0, %v1309
        %v1311 = vpop.f32.mrf.mxu0
        %1312 = vmatprep.mubr.bf16.mxu0 0
        %1313 = vmatmul.mubr.bf16.gmra.mxu0 %v872
        %v1314 = vpop.f32.mrf.mxu0
        %v1315 = vadd.f32 0.0, %v1314
        %v1316 = vpop.f32.mrf.mxu0
        %v1317 = vpop.f32.mrf.mxu0
        %v1318 = vadd.f32 0.0, %v1317
        %v1319 = vpop.f32.mrf.mxu0
        %1320 = vmatprep.mubr.bf16.mxu0 0
        %1321 = vmatmul.mubr.bf16.gmra.mxu0 %v875
        %v1322 = vpop.f32.mrf.mxu0
        %v1323 = vadd.f32 0.0, %v1322
        %v1324 = vpop.f32.mrf.mxu0
        %v1325 = vpop.f32.mrf.mxu0
        %v1326 = vadd.f32 0.0, %v1325
        %v1327 = vpop.f32.mrf.mxu0
        %1328 = vmatprep.mubr.bf16.mxu0 0
        %1329 = vmatmul.mubr.bf16.gmra.mxu0 %v878
        %v1330 = vpop.f32.mrf.mxu0
        %v1331 = vadd.f32 0.0, %v1330
        %v1332 = vpop.f32.mrf.mxu0
        %v1333 = vpop.f32.mrf.mxu0
        %v1334 = vadd.f32 0.0, %v1333
        %v1335 = vpop.f32.mrf.mxu0
        %1336 = vmatprep.mubr.bf16.mxu0 0
        %1337 = vmatmul.mubr.bf16.gmra.mxu0 %v881
        %v1338 = vpop.f32.mrf.mxu0
        %v1339 = vadd.f32 0.0, %v1338
        %v1340 = vpop.f32.mrf.mxu0
        %v1341 = vpop.f32.mrf.mxu0
        %v1342 = vadd.f32 0.0, %v1341
        %v1343 = vpop.f32.mrf.mxu0
        %1344 = vmatprep.mubr.bf16.mxu0 0
        %1345 = vmatmul.mubr.bf16.gmra.mxu0 %v884
        %v1346 = vpop.f32.mrf.mxu0
        %v1347 = vadd.f32 0.0, %v1346
        %v1348 = vpop.f32.mrf.mxu0
        %v1349 = vpop.f32.mrf.mxu0
        %v1350 = vadd.f32 0.0, %v1349
        %v1351 = vpop.f32.mrf.mxu0
        %1352 = vmatprep.mubr.bf16.mxu0 0
        %1353 = vmatmul.mubr.bf16.gmra.mxu0 %v887
        %v1354 = vpop.f32.mrf.mxu0
        %v1355 = vadd.f32 0.0, %v1354
        %v1356 = vpop.f32.mrf.mxu0
        %v1357 = vpop.f32.mrf.mxu0
        %v1358 = vadd.f32 0.0, %v1357
        %v1359 = vpop.f32.mrf.mxu0
        %1360 = vmatprep.mubr.bf16.mxu0 0
        %1361 = vmatmul.mubr.bf16.gmra.mxu0 %v890
        %v1362 = vpop.f32.mrf.mxu0
        %v1363 = vadd.f32 0.0, %v1362
        %v1364 = vpop.f32.mrf.mxu0
        %v1365 = vpop.f32.mrf.mxu0
        %v1366 = vadd.f32 0.0, %v1365
        %v1367 = vpop.f32.mrf.mxu0
        %1368 = vmatprep.mubr.bf16.mxu0 0
        %1369 = vmatmul.mubr.bf16.gmra.mxu0 %v893
        %v1370 = vpop.f32.mrf.mxu0
        %v1371 = vadd.f32 0.0, %v1370
        %v1372 = vpop.f32.mrf.mxu0
        %v1373 = vpop.f32.mrf.mxu0
        %v1374 = vadd.f32 0.0, %v1373
        %v1375 = vpop.f32.mrf.mxu0
        %1376 = vmatprep.mubr.bf16.mxu0 0
        %1377 = vmatmul.mubr.bf16.gmra.mxu0 %v896
        %v1378 = vpop.f32.mrf.mxu0
        %v1379 = vadd.f32 0.0, %v1378
        %v1380 = vpop.f32.mrf.mxu0
        %v1381 = vpop.f32.mrf.mxu0
        %v1382 = vadd.f32 0.0, %v1381
        %v1383 = vpop.f32.mrf.mxu0
        %1384 = vmatprep.mubr.bf16.mxu0 0
        %1385 = vmatmul.mubr.bf16.gmra.mxu0 %v899
        %v1386 = vpop.f32.mrf.mxu0
        %v1387 = vadd.f32 0.0, %v1386
        %v1388 = vpop.f32.mrf.mxu0
        %v1389 = vpop.f32.mrf.mxu0
        %v1390 = vadd.f32 0.0, %v1389
        %v1391 = vpop.f32.mrf.mxu0
        %1392 = vmatprep.mubr.bf16.mxu0 0
        %1393 = vmatmul.mubr.bf16.gmra.mxu0 %v902
        %v1394 = vpop.f32.mrf.mxu0
        %v1395 = vadd.f32 0.0, %v1394
        %v1396 = vpop.f32.mrf.mxu0
        %v1397 = vpop.f32.mrf.mxu0
        %v1398 = vadd.f32 0.0, %v1397
        %v1399 = vpop.f32.mrf.mxu0
        %1400 = vmatprep.mubr.bf16.mxu0 0
        %1401 = vmatmul.mubr.bf16.gmra.mxu0 %v905
        %v1402 = vpop.f32.mrf.mxu0
        %v1403 = vadd.f32 0.0, %v1402
        %v1404 = vpop.f32.mrf.mxu0
        %v1405 = vpop.f32.mrf.mxu0
        %v1406 = vadd.f32 0.0, %v1405
        %v1407 = vpop.f32.mrf.mxu0
        %1408 = vmatprep.mubr.bf16.mxu0 0
        %1409 = vmatmul.mubr.bf16.gmra.mxu0 %v908
        %v1410 = vpop.f32.mrf.mxu0
        %v1411 = vadd.f32 0.0, %v1410
        %v1412 = vpop.f32.mrf.mxu0
        %v1413 = vpop.f32.mrf.mxu0
        %v1414 = vadd.f32 0.0, %v1413
        %v1415 = vpop.f32.mrf.mxu0
        %1416 = vmatprep.mubr.bf16.mxu0 0
        %1417 = vmatmul.mubr.bf16.gmra.mxu0 %v911
        %v1418 = vpop.f32.mrf.mxu0
        %v1419 = vadd.f32 0.0, %v1418
        %v1420 = vpop.f32.mrf.mxu0
        %v1421 = vpop.f32.mrf.mxu0
        %v1422 = vadd.f32 0.0, %v1421
        %v1423 = vpop.f32.mrf.mxu0
        %1424 = vmatprep.mubr.bf16.mxu0 0
        %1425 = vmatmul.mubr.bf16.gmra.mxu0 %v914
        %v1426 = vpop.f32.mrf.mxu0
        %v1427 = vadd.f32 0.0, %v1426
        %v1428 = vpop.f32.mrf.mxu0
        %v1429 = vpop.f32.mrf.mxu0
        %v1430 = vadd.f32 0.0, %v1429
        %v1431 = vpop.f32.mrf.mxu0
        %1432 = vmatprep.mubr.bf16.mxu0 0
        %1433 = vmatmul.mubr.bf16.gmra.mxu0 %v917
        %v1434 = vpop.f32.mrf.mxu0
        %v1435 = vadd.f32 0.0, %v1434
        %v1436 = vpop.f32.mrf.mxu0
        %v1437 = vpop.f32.mrf.mxu0
        %v1438 = vadd.f32 0.0, %v1437
        %v1439 = vpop.f32.mrf.mxu0
        %1440 = vmatprep.mubr.bf16.mxu0 0
        %1441 = vmatmul.mubr.bf16.gmra.mxu0 %v920
        %v1442 = vpop.f32.mrf.mxu0
        %v1443 = vadd.f32 0.0, %v1442
        %v1444 = vpop.f32.mrf.mxu0
        %v1445 = vpop.f32.mrf.mxu0
        %v1446 = vadd.f32 0.0, %v1445
        %v1447 = vpop.f32.mrf.mxu0
        %1448 = vmatprep.mubr.bf16.mxu0 0
        %1449 = vmatmul.mubr.bf16.gmra.mxu0 %v923
        %v1450 = vpop.f32.mrf.mxu0
        %v1451 = vadd.f32 0.0, %v1450
        %v1452 = vpop.f32.mrf.mxu0
        %v1453 = vpop.f32.mrf.mxu0
        %v1454 = vadd.f32 0.0, %v1453
        %v1455 = vpop.f32.mrf.mxu0
        %1456 = vmatprep.mubr.bf16.mxu0 0
        %1457 = vmatmul.mubr.bf16.gmra.mxu0 %v926
        %v1458 = vpop.f32.mrf.mxu0
        %v1459 = vadd.f32 0.0, %v1458
        %v1460 = vpop.f32.mrf.mxu0
        %v1461 = vpop.f32.mrf.mxu0
        %v1462 = vadd.f32 0.0, %v1461
        %v1463 = vpop.f32.mrf.mxu0
        %1464 = vmatprep.mubr.bf16.mxu0 0
        %1465 = vmatmul.mubr.bf16.gmra.mxu0 %v929
        %v1466 = vpop.f32.mrf.mxu0
        %v1467 = vadd.f32 0.0, %v1466
        %v1468 = vpop.f32.mrf.mxu0
        %v1469 = vpop.f32.mrf.mxu0
        %v1470 = vadd.f32 0.0, %v1469
        %v1471 = vpop.f32.mrf.mxu0
        %1472 = vmatprep.mubr.bf16.mxu0 0
        %1473 = vmatmul.mubr.bf16.gmra.mxu0 %v932
        %v1474 = vpop.f32.mrf.mxu0
        %v1475 = vadd.f32 0.0, %v1474
        %v1476 = vpop.f32.mrf.mxu0
        %v1477 = vpop.f32.mrf.mxu0
        %v1478 = vadd.f32 0.0, %v1477
        %v1479 = vpop.f32.mrf.mxu0
        %1480 = vmatprep.mubr.bf16.mxu0 0
        %1481 = vmatmul.mubr.bf16.gmra.mxu0 %v935
        %v1482 = vpop.f32.mrf.mxu0
        %v1483 = vadd.f32 0.0, %v1482
        %v1484 = vpop.f32.mrf.mxu0
        %v1485 = vpop.f32.mrf.mxu0
        %v1486 = vadd.f32 0.0, %v1485
        %v1487 = vpop.f32.mrf.mxu0
        %1488 = vmatprep.mubr.bf16.mxu0 0
        %1489 = vmatmul.mubr.bf16.gmra.mxu0 %v938
        %v1490 = vpop.f32.mrf.mxu0
        %v1491 = vadd.f32 0.0, %v1490
        %v1492 = vpop.f32.mrf.mxu0
        %v1493 = vpop.f32.mrf.mxu0
        %v1494 = vadd.f32 0.0, %v1493
        %v1495 = vpop.f32.mrf.mxu0
        %1496 = vmatprep.mubr.bf16.mxu0 0
        %1497 = vmatmul.mubr.bf16.gmra.mxu0 %v941
        %v1498 = vpop.f32.mrf.mxu0
        %v1499 = vadd.f32 0.0, %v1498
        %v1500 = vpop.f32.mrf.mxu0
        %v1501 = vpop.f32.mrf.mxu0
        %v1502 = vadd.f32 0.0, %v1501
        %v1503 = vpop.f32.mrf.mxu0
        %1504 = vmatprep.mubr.bf16.mxu0 0
        %1505 = vmatmul.mubr.bf16.gmra.mxu0 %v944
        %v1506 = vpop.f32.mrf.mxu0
        %v1507 = vadd.f32 0.0, %v1506
        %v1508 = vpop.f32.mrf.mxu0
        %v1509 = vpop.f32.mrf.mxu0
        %v1510 = vadd.f32 0.0, %v1509
        %v1511 = vpop.f32.mrf.mxu0
        %1512 = vmatprep.mubr.bf16.mxu0 0
        %1513 = vmatmul.mubr.bf16.gmra.mxu0 %v947
        %v1514 = vpop.f32.mrf.mxu0
        %v1515 = vadd.f32 0.0, %v1514
        %v1516 = vpop.f32.mrf.mxu0
        %v1517 = vpop.f32.mrf.mxu0
        %v1518 = vadd.f32 0.0, %v1517
        %v1519 = vpop.f32.mrf.mxu0
        %1520 = vmatprep.mubr.bf16.mxu0 0
        %1521 = vmatmul.mubr.bf16.gmra.mxu0 %v950
        %v1522 = vpop.f32.mrf.mxu0
        %v1523 = vadd.f32 0.0, %v1522
        %v1524 = vpop.f32.mrf.mxu0
        %v1525 = vpop.f32.mrf.mxu0
        %v1526 = vadd.f32 0.0, %v1525
        %v1527 = vpop.f32.mrf.mxu0
        %1528 = vmatprep.mubr.bf16.mxu0 0
        %1529 = vmatmul.mubr.bf16.gmra.mxu0 %v953
        %v1530 = vpop.f32.mrf.mxu0
        %v1531 = vadd.f32 0.0, %v1530
        %v1532 = vpop.f32.mrf.mxu0
        %v1533 = vpop.f32.mrf.mxu0
        %v1534 = vadd.f32 0.0, %v1533
        %v1535 = vpop.f32.mrf.mxu0
        %1536 = vmatprep.mubr.bf16.mxu0 0
        %1537 = vmatmul.mubr.bf16.gmra.mxu0 %v956
        %v1538 = vpop.f32.mrf.mxu0
        %v1539 = vadd.f32 0.0, %v1538
        %v1540 = vpop.f32.mrf.mxu0
        %v1541 = vpop.f32.mrf.mxu0
        %v1542 = vadd.f32 0.0, %v1541
        %v1543 = vpop.f32.mrf.mxu0
        %1544 = vmatprep.mubr.bf16.mxu0 0
        %1545 = vmatmul.mubr.bf16.gmra.mxu0 %v959
        %v1546 = vpop.f32.mrf.mxu0
        %v1547 = vadd.f32 0.0, %v1546
        %v1548 = vpop.f32.mrf.mxu0
        %v1549 = vpop.f32.mrf.mxu0
        %v1550 = vadd.f32 0.0, %v1549
        %v1551 = vpop.f32.mrf.mxu0
        %1552 = vmatprep.mubr.bf16.mxu0 0
        %1553 = vmatmul.mubr.bf16.gmra.mxu0 %v962
        %v1554 = vpop.f32.mrf.mxu0
        %v1555 = vadd.f32 0.0, %v1554
        %v1556 = vpop.f32.mrf.mxu0
        %v1557 = vpop.f32.mrf.mxu0
        %v1558 = vadd.f32 0.0, %v1557
        %v1559 = vpop.f32.mrf.mxu0
        %1560 = vmatprep.mubr.bf16.mxu0 0
        %1561 = vmatmul.mubr.bf16.gmra.mxu0 %v965
        %v1562 = vpop.f32.mrf.mxu0
        %v1563 = vadd.f32 0.0, %v1562
        %v1564 = vpop.f32.mrf.mxu0
        %v1565 = vpop.f32.mrf.mxu0
        %v1566 = vadd.f32 0.0, %v1565
        %v1567 = vpop.f32.mrf.mxu0
        %1568 = vmatprep.mubr.bf16.mxu0 0
        %1569 = vmatmul.mubr.bf16.gmra.mxu0 %v968
        %v1570 = vpop.f32.mrf.mxu0
        %v1571 = vadd.f32 0.0, %v1570
        %v1572 = vpop.f32.mrf.mxu0
        %v1573 = vpop.f32.mrf.mxu0
        %v1574 = vadd.f32 0.0, %v1573
        %v1575 = vpop.f32.mrf.mxu0
        %1576 = vmatprep.mubr.bf16.mxu0 0
        %1577 = vmatmul.mubr.bf16.gmra.mxu0 %v971
        %v1578 = vpop.f32.mrf.mxu0
        %v1579 = vadd.f32 0.0, %v1578
        %v1580 = vpop.f32.mrf.mxu0
        %v1581 = vpop.f32.mrf.mxu0
        %v1582 = vadd.f32 0.0, %v1581
        %v1583 = vpop.f32.mrf.mxu0
        %1584 = vmatprep.mubr.bf16.mxu0 0
        %1585 = vmatmul.mubr.bf16.gmra.mxu0 %v974
        %v1586 = vpop.f32.mrf.mxu0
        %v1587 = vadd.f32 0.0, %v1586
        %v1588 = vpop.f32.mrf.mxu0
        %v1589 = vpop.f32.mrf.mxu0
        %v1590 = vadd.f32 0.0, %v1589
        %v1591 = vpop.f32.mrf.mxu0
        %1592 = vmatprep.mubr.bf16.mxu0 0
        %1593 = vmatmul.mubr.bf16.gmra.mxu0 %v977
        %v1594 = vpop.f32.mrf.mxu0
        %v1595 = vadd.f32 0.0, %v1594
        %v1596 = vpop.f32.mrf.mxu0
        %v1597 = vpop.f32.mrf.mxu0
        %v1598 = vadd.f32 0.0, %v1597
        %v1599 = vpop.f32.mrf.mxu0
        %1600 = vmatprep.mubr.bf16.mxu0 0
        %1601 = vmatmul.mubr.bf16.gmra.mxu0 %v980
        %v1602 = vpop.f32.mrf.mxu0
        %v1603 = vadd.f32 0.0, %v1602
        %v1604 = vpop.f32.mrf.mxu0
        %v1605 = vpop.f32.mrf.mxu0
        %v1606 = vadd.f32 0.0, %v1605
        %v1607 = vpop.f32.mrf.mxu0
        %1608 = vmatprep.mubr.bf16.mxu0 0
        %1609 = vmatmul.mubr.bf16.gmra.mxu0 %v983
        %v1610 = vpop.f32.mrf.mxu0
        %v1611 = vadd.f32 0.0, %v1610
        %v1612 = vpop.f32.mrf.mxu0
        %v1613 = vpop.f32.mrf.mxu0
        %v1614 = vadd.f32 0.0, %v1613
        %v1615 = vpop.f32.mrf.mxu0
        %1616 = vmatprep.mubr.bf16.mxu0 0
        %1617 = vmatmul.mubr.bf16.gmra.mxu0 %v986
        %v1618 = vpop.f32.mrf.mxu0
        %v1619 = vadd.f32 0.0, %v1618
        %v1620 = vpop.f32.mrf.mxu0
        %v1621 = vpop.f32.mrf.mxu0
        %v1622 = vadd.f32 0.0, %v1621
        %v1623 = vpop.f32.mrf.mxu0
        %1624 = vmatprep.mubr.bf16.mxu0 0
        %1625 = vmatmul.mubr.bf16.gmra.mxu0 %v989
        %v1626 = vpop.f32.mrf.mxu0
        %v1627 = vadd.f32 0.0, %v1626
        %v1628 = vpop.f32.mrf.mxu0
        %v1629 = vpop.f32.mrf.mxu0
        %v1630 = vadd.f32 0.0, %v1629
        %v1631 = vpop.f32.mrf.mxu0
        %1632 = vmatprep.mubr.bf16.mxu0 0
        %1633 = vmatmul.mubr.bf16.gmra.mxu0 %v992
        %v1634 = vpop.f32.mrf.mxu0
        %v1635 = vadd.f32 0.0, %v1634
        %v1636 = vpop.f32.mrf.mxu0
        %v1637 = vpop.f32.mrf.mxu0
        %v1638 = vadd.f32 0.0, %v1637
        %v1639 = vpop.f32.mrf.mxu0
        %1640 = vmatprep.mubr.bf16.mxu0 0
        %1641 = vmatmul.mubr.bf16.gmra.mxu0 %v995
        %v1642 = vpop.f32.mrf.mxu0
        %v1643 = vadd.f32 0.0, %v1642
        %v1644 = vpop.f32.mrf.mxu0
        %v1645 = vpop.f32.mrf.mxu0
        %v1646 = vadd.f32 0.0, %v1645
        %v1647 = vpop.f32.mrf.mxu0
        %1648 = vmatprep.mubr.bf16.mxu0 0
        %1649 = vmatmul.mubr.bf16.gmra.mxu0 %v998
        %v1650 = vpop.f32.mrf.mxu0
        %v1651 = vadd.f32 0.0, %v1650
        %v1652 = vpop.f32.mrf.mxu0
        %v1653 = vpop.f32.mrf.mxu0
        %v1654 = vadd.f32 0.0, %v1653
        %v1655 = vpop.f32.mrf.mxu0
        %1656 = vmatprep.mubr.bf16.mxu0 0
        %1657 = vmatmul.mubr.bf16.gmra.mxu0 %v1001
        %v1658 = vpop.f32.mrf.mxu0
        %v1659 = vadd.f32 0.0, %v1658
        %v1660 = vpop.f32.mrf.mxu0
        %v1661 = vpop.f32.mrf.mxu0
        %v1662 = vadd.f32 0.0, %v1661
        %v1663 = vpop.f32.mrf.mxu0
        %1664 = vmatprep.mubr.bf16.mxu0 0
        %1665 = vmatmul.mubr.bf16.gmra.mxu0 %v1004
        %v1666 = vpop.f32.mrf.mxu0
        %v1667 = vadd.f32 0.0, %v1666
        %v1668 = vpop.f32.mrf.mxu0
        %v1669 = vpop.f32.mrf.mxu0
        %v1670 = vadd.f32 0.0, %v1669
        %v1671 = vpop.f32.mrf.mxu0
        %1672 = vmatprep.mubr.bf16.mxu0 0
        %1673 = vmatmul.mubr.bf16.gmra.mxu0 %v1007
        %v1674 = vpop.f32.mrf.mxu0
        %v1675 = vadd.f32 0.0, %v1674
        %v1676 = vpop.f32.mrf.mxu0
        %v1677 = vpop.f32.mrf.mxu0
        %v1678 = vadd.f32 0.0, %v1677
        %v1679 = vpop.f32.mrf.mxu0
        %1680 = vmatprep.mubr.bf16.mxu0 0
        %1681 = vmatmul.mubr.bf16.gmra.mxu0 %v1010
        %v1682 = vpop.f32.mrf.mxu0
        %v1683 = vadd.f32 0.0, %v1682
        %v1684 = vpop.f32.mrf.mxu0
        %v1685 = vpop.f32.mrf.mxu0
        %v1686 = vadd.f32 0.0, %v1685
        %v1687 = vpop.f32.mrf.mxu0
        %1688 = vmatprep.mubr.bf16.mxu0 0
        %1689 = vmatmul.mubr.bf16.gmra.mxu0 %v1013
        %v1690 = vpop.f32.mrf.mxu0
        %v1691 = vadd.f32 0.0, %v1690
        %v1692 = vpop.f32.mrf.mxu0
        %v1693 = vpop.f32.mrf.mxu0
        %v1694 = vadd.f32 0.0, %v1693
        %v1695 = vpop.f32.mrf.mxu0
        %1696 = vmatprep.mubr.bf16.mxu0 0
        %1697 = vmatmul.mubr.bf16.gmra.mxu0 %v1016
        %v1698 = vpop.f32.mrf.mxu0
        %v1699 = vadd.f32 0.0, %v1698
        %v1700 = vpop.f32.mrf.mxu0
        %v1701 = vpop.f32.mrf.mxu0
        %v1702 = vadd.f32 0.0, %v1701
        %v1703 = vpop.f32.mrf.mxu0
        %1704 = vmatprep.mubr.bf16.mxu0 0
        %1705 = vmatmul.mubr.bf16.gmra.mxu0 %v1019
        %v1706 = vpop.f32.mrf.mxu0
        %v1707 = vadd.f32 0.0, %v1706
        %v1708 = vpop.f32.mrf.mxu0
        %v1709 = vpop.f32.mrf.mxu0
        %v1710 = vadd.f32 0.0, %v1709
        %v1711 = vpop.f32.mrf.mxu0
        %1712 = vmatprep.mubr.bf16.mxu0 0
        %1713 = vmatmul.mubr.bf16.gmra.mxu0 %v1022
        %v1714 = vpop.f32.mrf.mxu0
        %v1715 = vadd.f32 0.0, %v1714
        %v1716 = vpop.f32.mrf.mxu0
        %v1717 = vpop.f32.mrf.mxu0
        %v1718 = vadd.f32 0.0, %v1717
        %v1719 = vpop.f32.mrf.mxu0
        %1720 = vmatprep.mubr.bf16.mxu0 0
        %1721 = vmatmul.mubr.bf16.gmra.mxu0 %v1025
        %v1722 = vpop.f32.mrf.mxu0
        %v1723 = vadd.f32 0.0, %v1722
        %v1724 = vpop.f32.mrf.mxu0
        %v1725 = vpop.f32.mrf.mxu0
        %v1726 = vadd.f32 0.0, %v1725
        %v1727 = vpop.f32.mrf.mxu0
        %1728 = vmatprep.mubr.bf16.mxu0 0
        %1729 = vmatmul.mubr.bf16.gmra.mxu0 %v1028
        %v1730 = vpop.f32.mrf.mxu0
        %v1731 = vadd.f32 0.0, %v1730
        %v1732 = vpop.f32.mrf.mxu0
        %v1733 = vpop.f32.mrf.mxu0
        %v1734 = vadd.f32 0.0, %v1733
        %v1735 = vpop.f32.mrf.mxu0
        %1736 = vmatprep.mubr.bf16.mxu0 0
        %1737 = vmatmul.mubr.bf16.gmra.mxu0 %v1031
        %v1738 = vpop.f32.mrf.mxu0
        %v1739 = vadd.f32 0.0, %v1738
        %v1740 = vpop.f32.mrf.mxu0
        %v1741 = vpop.f32.mrf.mxu0
        %v1742 = vadd.f32 0.0, %v1741
        %v1743 = vpop.f32.mrf.mxu0
        %1744 = vmatprep.mubr.bf16.mxu0 0
        %1745 = vmatmul.mubr.bf16.gmra.mxu0 %v1034
        %v1746 = vpop.f32.mrf.mxu0
        %v1747 = vadd.f32 0.0, %v1746
        %v1748 = vpop.f32.mrf.mxu0
        %v1749 = vpop.f32.mrf.mxu0
        %v1750 = vadd.f32 0.0, %v1749
        %v1751 = vpop.f32.mrf.mxu0
        %1752 = vmatprep.mubr.bf16.mxu0 0
        %1753 = vmatmul.mubr.bf16.gmra.mxu0 %v1037
        %v1754 = vpop.f32.mrf.mxu0
        %v1755 = vadd.f32 0.0, %v1754
        %v1756 = vpop.f32.mrf.mxu0
        %v1757 = vpop.f32.mrf.mxu0
        %v1758 = vadd.f32 0.0, %v1757
        %v1759 = vpop.f32.mrf.mxu0
        %1760 = vmatprep.mubr.bf16.mxu0 0
        %1761 = vmatmul.mubr.bf16.gmra.mxu0 %v1040
        %v1762 = vpop.f32.mrf.mxu0
        %v1763 = vadd.f32 0.0, %v1762
        %v1764 = vpop.f32.mrf.mxu0
        %v1765 = vpop.f32.mrf.mxu0
        %v1766 = vadd.f32 0.0, %v1765
        %v1767 = vpop.f32.mrf.mxu0
        %1768 = vmatprep.mubr.bf16.mxu0 0
        %1769 = vmatmul.mubr.bf16.gmra.mxu0 %v1043
        %v1770 = vpop.f32.mrf.mxu0
        %v1771 = vadd.f32 0.0, %v1770
        %v1772 = vpop.f32.mrf.mxu0
        %v1773 = vpop.f32.mrf.mxu0
        %v1774 = vadd.f32 0.0, %v1773
        %v1775 = vpop.f32.mrf.mxu0
        %1776 = vmatprep.mubr.bf16.mxu0 0
        %1777 = vmatmul.mubr.bf16.gmra.mxu0 %v1046
        %v1778 = vpop.f32.mrf.mxu0
        %v1779 = vadd.f32 0.0, %v1778
        %v1780 = vpop.f32.mrf.mxu0
        %v1781 = vpop.f32.mrf.mxu0
        %v1782 = vadd.f32 0.0, %v1781
        %v1783 = vpop.f32.mrf.mxu0
        %1784 = vmatprep.mubr.bf16.mxu0 0
        %1785 = vmatmul.mubr.bf16.gmra.mxu0 %v1049
        %v1786 = vpop.f32.mrf.mxu0
        %v1787 = vadd.f32 0.0, %v1786
        %v1788 = vpop.f32.mrf.mxu0
        %v1789 = vpop.f32.mrf.mxu0
        %v1790 = vadd.f32 0.0, %v1789
        %v1791 = vpop.f32.mrf.mxu0
        %1792 = vmatprep.mubr.bf16.mxu0 0
        %1793 = vmatmul.mubr.bf16.gmra.mxu0 %v1052
        %v1794 = vpop.f32.mrf.mxu0
        %v1795 = vadd.f32 0.0, %v1794
        %v1796 = vpop.f32.mrf.mxu0
        %v1797 = vpop.f32.mrf.mxu0
        %v1798 = vadd.f32 0.0, %v1797
        %v1799 = vpop.f32.mrf.mxu0
        %1800 = vmatprep.mubr.bf16.mxu0 0
        %1801 = vmatmul.mubr.bf16.gmra.mxu0 %v1055
        %v1802 = vpop.f32.mrf.mxu0
        %v1803 = vadd.f32 0.0, %v1802
        %v1804 = vpop.f32.mrf.mxu0
        %v1805 = vpop.f32.mrf.mxu0
        %v1806 = vadd.f32 0.0, %v1805
        %v1807 = vpop.f32.mrf.mxu0
        %1808 = vmatprep.mubr.bf16.mxu0 0
        %1809 = vmatmul.mubr.bf16.gmra.mxu0 %v1058
        %v1810 = vpop.f32.mrf.mxu0
        %v1811 = vadd.f32 0.0, %v1810
        %v1812 = vpop.f32.mrf.mxu0
        %v1813 = vpop.f32.mrf.mxu0
        %v1814 = vadd.f32 0.0, %v1813
        %v1815 = vpop.f32.mrf.mxu0
        %1816 = vmatprep.mubr.bf16.mxu0 0
        %1817 = vmatmul.mubr.bf16.gmra.mxu0 %v1061
        %v1818 = vpop.f32.mrf.mxu0
        %v1819 = vadd.f32 0.0, %v1818
        %v1820 = vpop.f32.mrf.mxu0
        %v1821 = vpop.f32.mrf.mxu0
        %v1822 = vadd.f32 0.0, %v1821
        %v1823 = vpop.f32.mrf.mxu0
        %1824 = vmatprep.mubr.bf16.mxu0 0
        %1825 = vmatmul.mubr.bf16.gmra.mxu0 %v1064
        %v1826 = vpop.f32.mrf.mxu0
        %v1827 = vadd.f32 0.0, %v1826
        %v1828 = vpop.f32.mrf.mxu0
        %v1829 = vpop.f32.mrf.mxu0
        %v1830 = vadd.f32 0.0, %v1829
        %v1831 = vpop.f32.mrf.mxu0
        %1832 = vmatprep.mubr.bf16.mxu0 0
        %1833 = vmatmul.mubr.bf16.gmra.mxu0 %v1067
        %v1834 = vpop.f32.mrf.mxu0
        %v1835 = vadd.f32 0.0, %v1834
        %v1836 = vpop.f32.mrf.mxu0
        %v1837 = vpop.f32.mrf.mxu0
        %v1838 = vadd.f32 0.0, %v1837
        %v1839 = vpop.f32.mrf.mxu0
        %1840 = vmatprep.mubr.bf16.mxu0 0
        %1841 = vmatmul.mubr.bf16.gmra.mxu0 %v1070
        %v1842 = vpop.f32.mrf.mxu0
        %v1843 = vadd.f32 0.0, %v1842
        %v1844 = vpop.f32.mrf.mxu0
        %v1845 = vpop.f32.mrf.mxu0
        %v1846 = vpop.f32.mrf.mxu0
        %1847 = vdwg.mxu0
        %v2033 = vunpack.c.l.b16 %v289
        %v2034 = vunpack.c.l.b16 %v290
        %v2035 = vunpack.c.l.b16 %v291
        %v2036 = vunpack.c.l.b16 %v292
        %v2037 = vunpack.c.l.b16 %v293
        %v2038 = vunpack.c.l.b16 %v294
        %v2039 = vunpack.c.l.b16 %v295
        %v2040 = vunpack.c.l.b16 %v296
        %v2041 = vunpack.c.l.b16 %v297
        %v2042 = vunpack.c.l.b16 %v298
        %v2043 = vunpack.c.l.b16 %v299
        %v2044 = vunpack.c.l.b16 %v300
        %v2045 = vunpack.c.l.b16 %v301
        %v2046 = vunpack.c.l.b16 %v302
        %v2047 = vunpack.c.l.b16 %v303
        %v2048 = vunpack.c.l.b16 %v304
        %v2049 = vunpack.c.l.b16 %v305
        %v2050 = vunpack.c.l.b16 %v306
        %v2051 = vunpack.c.l.b16 %v307
        %v2052 = vunpack.c.l.b16 %v308
        %v2053 = vunpack.c.l.b16 %v309
        %v2054 = vunpack.c.l.b16 %v310
        %v2055 = vunpack.c.l.b16 %v311
        %v2056 = vunpack.c.l.b16 %v312
        %v2057 = vunpack.c.l.b16 %v313
        %v2058 = vunpack.c.l.b16 %v314
        %v2059 = vunpack.c.l.b16 %v315
        %v2060 = vunpack.c.l.b16 %v316
        %v2061 = vunpack.c.l.b16 %v317
        %v2062 = vunpack.c.l.b16 %v318
        %v2063 = vunpack.c.l.b16 %v319
        %v2064 = vunpack.c.l.b16 %v320
        %v2065 = vunpack.c.l.b16 %v321
        %v2066 = vunpack.c.l.b16 %v322
        %v2067 = vunpack.c.l.b16 %v323
        %v2068 = vunpack.c.l.b16 %v324
        %v2069 = vunpack.c.l.b16 %v325
        %v2070 = vunpack.c.l.b16 %v326
        %v2071 = vunpack.c.l.b16 %v327
        %v2072 = vunpack.c.l.b16 %v328
        %v2073 = vunpack.c.l.b16 %v329
        %v2074 = vunpack.c.l.b16 %v330
        %v2075 = vunpack.c.l.b16 %v331
        %v2076 = vunpack.c.l.b16 %v332
        %v2077 = vunpack.c.l.b16 %v333
        %v2078 = vunpack.c.l.b16 %v334
        %v2079 = vunpack.c.l.b16 %v335
        %v2080 = vunpack.c.l.b16 %v336
        %v2081 = vunpack.c.l.b16 %v337
        %v2082 = vunpack.c.l.b16 %v338
        %v2083 = vunpack.c.l.b16 %v339
        %v2084 = vunpack.c.l.b16 %v340
        %v2085 = vunpack.c.l.b16 %v341
        %v2086 = vunpack.c.l.b16 %v342
        %v2087 = vunpack.c.l.b16 %v343
        %v2088 = vunpack.c.l.b16 %v344
        %v2089 = vunpack.c.l.b16 %v345
        %v2090 = vunpack.c.l.b16 %v346
        %v2091 = vunpack.c.l.b16 %v347
        %v2092 = vunpack.c.l.b16 %v348
        %v2093 = vunpack.c.l.b16 %v349
        %v2094 = vunpack.c.l.b16 %v350
        %v2095 = vunpack.c.l.b16 %v351
        %v2096 = vunpack.c.l.b16 %v352
        %v2097 = vunpack.c.l.b16 %v353
        %v2098 = vunpack.c.l.b16 %v354
        %v2099 = vunpack.c.l.b16 %v355
        %v2100 = vunpack.c.l.b16 %v356
        %v2101 = vunpack.c.l.b16 %v357
        %v2102 = vunpack.c.l.b16 %v358
        %v2103 = vunpack.c.l.b16 %v359
        %v2104 = vunpack.c.l.b16 %v360
        %v2105 = vunpack.c.l.b16 %v361
        %v2106 = vunpack.c.l.b16 %v362
        %v2107 = vunpack.c.l.b16 %v363
        %v2108 = vunpack.c.l.b16 %v364
        %v2109 = vunpack.c.l.b16 %v365
        %v2110 = vunpack.c.l.b16 %v366
        %v2111 = vunpack.c.l.b16 %v367
        %v2112 = vunpack.c.l.b16 %v368
        %v2113 = vunpack.c.l.b16 %v369
        %v2114 = vunpack.c.l.b16 %v370
        %v2115 = vunpack.c.l.b16 %v371
        %v2116 = vunpack.c.l.b16 %v372
        %v2117 = vunpack.c.l.b16 %v373
        %v2118 = vunpack.c.l.b16 %v374
        %v2119 = vunpack.c.l.b16 %v375
        %v2120 = vunpack.c.l.b16 %v376
        %v2121 = vunpack.c.l.b16 %v377
        %v2122 = vunpack.c.l.b16 %v378
        %v2123 = vunpack.c.l.b16 %v379
        %v2124 = vunpack.c.l.b16 %v380
        %v2125 = vunpack.c.l.b16 %v381
        %v2126 = vunpack.c.l.b16 %v382
        %v2127 = vunpack.c.l.b16 %v383
        %v2128 = vunpack.c.l.b16 %v384
        %v2129 = vunpack.c.l.b16 %v385
        %v2130 = vunpack.c.l.b16 %v386
        %v2131 = vunpack.c.l.b16 %v387
        %v2132 = vunpack.c.l.b16 %v388
        %v2133 = vunpack.c.l.b16 %v389
        %v2134 = vunpack.c.l.b16 %v390
        %v2135 = vunpack.c.l.b16 %v391
        %v2136 = vunpack.c.l.b16 %v392
        %v2137 = vunpack.c.l.b16 %v393
        %v2138 = vunpack.c.l.b16 %v394
        %v2139 = vunpack.c.l.b16 %v395
        %v2140 = vunpack.c.l.b16 %v396
        %v2141 = vunpack.c.l.b16 %v397
        %v2142 = vunpack.c.l.b16 %v398
        %v2143 = vunpack.c.l.b16 %v399
        %v2144 = vunpack.c.l.b16 %v400
        %v2145 = vunpack.c.l.b16 %v401
        %v2146 = vunpack.c.l.b16 %v402
        %v2147 = vunpack.c.l.b16 %v403
        %v2148 = vunpack.c.l.b16 %v404
        %v2149 = vunpack.c.l.b16 %v405
        %v2150 = vunpack.c.l.b16 %v406
        %v2151 = vunpack.c.l.b16 %v407
        %v2152 = vunpack.c.l.b16 %v408
        %v2153 = vunpack.c.l.b16 %v409
        %v2154 = vunpack.c.l.b16 %v410
        %v2155 = vunpack.c.l.b16 %v411
        %v2156 = vunpack.c.l.b16 %v412
        %v2157 = vunpack.c.l.b16 %v413
        %v2158 = vunpack.c.l.b16 %v414
        %v2159 = vunpack.c.l.b16 %v415
        %v2160 = vunpack.c.l.b16 %v416
        %v2161 = vunpack.c.l.b16 %v417
        %v2162 = vunpack.c.l.b16 %v418
        %v2163 = vunpack.c.l.b16 %v419
        %v2164 = vunpack.c.l.b16 %v420
        %v2165 = vunpack.c.l.b16 %v421
        %v2166 = vunpack.c.l.b16 %v422
        %v2167 = vunpack.c.l.b16 %v423
        %v2168 = vunpack.c.l.b16 %v424
        %v2169 = vunpack.c.l.b16 %v425
        %v2170 = vunpack.c.l.b16 %v426
        %v2171 = vunpack.c.l.b16 %v427
        %v2172 = vunpack.c.l.b16 %v428
        %v2173 = vunpack.c.l.b16 %v429
        %v2174 = vunpack.c.l.b16 %v430
        %v2175 = vunpack.c.l.b16 %v431
        %v2176 = vunpack.c.l.b16 %v432
        %v2177 = vunpack.c.l.b16 %v433
        %v2178 = vunpack.c.l.b16 %v434
        %v2179 = vunpack.c.l.b16 %v435
        %v2180 = vunpack.c.l.b16 %v436
        %v2181 = vunpack.c.l.b16 %v437
        %v2182 = vunpack.c.l.b16 %v438
        %v2183 = vunpack.c.l.b16 %v439
        %v2184 = vunpack.c.l.b16 %v440
        %v2185 = vunpack.c.l.b16 %v441
        %v2186 = vunpack.c.l.b16 %v442
        %v2187 = vunpack.c.l.b16 %v443
        %v2188 = vunpack.c.l.b16 %v444
        %v2189 = vunpack.c.l.b16 %v445
        %v2190 = vunpack.c.l.b16 %v446
        %v2191 = vunpack.c.l.b16 %v447
        %v2192 = vunpack.c.l.b16 %v448
        %v2193 = vunpack.c.l.b16 %v449
        %v2194 = vunpack.c.l.b16 %v450
        %v2195 = vunpack.c.l.b16 %v451
        %v2196 = vunpack.c.l.b16 %v452
        %v2197 = vunpack.c.l.b16 %v453
        %v2198 = vunpack.c.l.b16 %v454
        %v2199 = vunpack.c.l.b16 %v455
        %v2200 = vunpack.c.l.b16 %v456
        %v2201 = vunpack.c.l.b16 %v457
        %v2202 = vunpack.c.l.b16 %v458
        %v2203 = vunpack.c.l.b16 %v459
        %v2204 = vunpack.c.l.b16 %v460
        %v2205 = vunpack.c.l.b16 %v461
        %v2206 = vunpack.c.l.b16 %v462
        %v2207 = vunpack.c.l.b16 %v463
        %v2208 = vunpack.c.l.b16 %v464
        %v2209 = vunpack.c.l.b16 %v465
        %v2210 = vunpack.c.l.b16 %v466
        %v2211 = vunpack.c.l.b16 %v467
        %v2212 = vunpack.c.l.b16 %v468
        %v2213 = vunpack.c.l.b16 %v469
        %v2214 = vunpack.c.l.b16 %v470
        %v2215 = vunpack.c.l.b16 %v471
        %v2216 = vunpack.c.l.b16 %v472
        %v2217 = vunpack.c.l.b16 %v473
        %v2218 = vpack.c.b16 %v2034, %v2033
        %v2219 = vpack.c.b16 %v2036, %v2035
        %v2220 = vpack.c.b16 %v2038, %v2037
        %v2221 = vpack.c.b16 %v2040, %v2039
        %v2222 = vpack.c.b16 %v2042, %v2041
        %v2223 = vpack.c.b16 %v2044, %v2043
        %v2224 = vpack.c.b16 %v2046, %v2045
        %v2225 = vpack.c.b16 %v2048, %v2047
        %v2226 = vpack.c.b16 %v2050, %v2049
        %v2227 = vpack.c.b16 %v2052, %v2051
        %v2228 = vpack.c.b16 %v2054, %v2053
        %v2229 = vpack.c.b16 %v2056, %v2055
        %v2230 = vpack.c.b16 %v2058, %v2057
        %v2231 = vpack.c.b16 %v2060, %v2059
        %v2232 = vpack.c.b16 %v2062, %v2061
        %v2233 = vpack.c.b16 %v2064, %v2063
        %v2234 = vpack.c.b16 %v2066, %v2065
        %v2235 = vpack.c.b16 %v2068, %v2067
        %v2236 = vpack.c.b16 %v2070, %v2069
        %v2237 = vpack.c.b16 %v2072, %v2071
        %v2238 = vpack.c.b16 %v2074, %v2073
        %v2239 = vpack.c.b16 %v2076, %v2075
        %v2240 = vpack.c.b16 %v2078, %v2077
        %v2241 = vpack.c.b16 %v2080, %v2079
        %v2242 = vpack.c.b16 %v2082, %v2081
        %v2243 = vpack.c.b16 %v2084, %v2083
        %v2244 = vpack.c.b16 %v2086, %v2085
        %v2245 = vpack.c.b16 %v2088, %v2087
        %v2246 = vpack.c.b16 %v2090, %v2089
        %v2247 = vpack.c.b16 %v2092, %v2091
        %v2248 = vpack.c.b16 %v2094, %v2093
        %v2249 = vpack.c.b16 %v2096, %v2095
        %v2250 = vpack.c.b16 %v2098, %v2097
        %v2251 = vpack.c.b16 %v2100, %v2099
        %v2252 = vpack.c.b16 %v2102, %v2101
        %v2253 = vpack.c.b16 %v2104, %v2103
        %v2254 = vpack.c.b16 %v2106, %v2105
        %v2255 = vpack.c.b16 %v2108, %v2107
        %v2256 = vpack.c.b16 %v2110, %v2109
        %v2257 = vpack.c.b16 %v2112, %v2111
        %v2258 = vpack.c.b16 %v2114, %v2113
        %v2259 = vpack.c.b16 %v2116, %v2115
        %v2260 = vpack.c.b16 %v2118, %v2117
        %v2261 = vpack.c.b16 %v2120, %v2119
        %v2262 = vpack.c.b16 %v2122, %v2121
        %v2263 = vpack.c.b16 %v2124, %v2123
        %v2264 = vpack.c.b16 %v2126, %v2125
        %v2265 = vpack.c.b16 %v2128, %v2127
        %v2266 = vpack.c.b16 %v2130, %v2129
        %v2267 = vpack.c.b16 %v2132, %v2131
        %v2268 = vpack.c.b16 %v2134, %v2133
        %v2269 = vpack.c.b16 %v2136, %v2135
        %v2270 = vpack.c.b16 %v2138, %v2137
        %v2271 = vpack.c.b16 %v2140, %v2139
        %v2272 = vpack.c.b16 %v2142, %v2141
        %v2273 = vpack.c.b16 %v2144, %v2143
        %v2274 = vpack.c.b16 %v2146, %v2145
        %v2275 = vpack.c.b16 %v2148, %v2147
        %v2276 = vpack.c.b16 %v2150, %v2149
        %v2277 = vpack.c.b16 %v2152, %v2151
        %v2278 = vpack.c.b16 %v2154, %v2153
        %v2279 = vpack.c.b16 %v2156, %v2155
        %v2280 = vpack.c.b16 %v2158, %v2157
        %v2281 = vpack.c.b16 %v2160, %v2159
        %v2282 = vpack.c.b16 %v2162, %v2161
        %v2283 = vpack.c.b16 %v2164, %v2163
        %v2284 = vpack.c.b16 %v2166, %v2165
        %v2285 = vpack.c.b16 %v2168, %v2167
        %v2286 = vpack.c.b16 %v2170, %v2169
        %v2287 = vpack.c.b16 %v2172, %v2171
        %v2288 = vpack.c.b16 %v2174, %v2173
        %v2289 = vpack.c.b16 %v2176, %v2175
        %v2290 = vpack.c.b16 %v2178, %v2177
        %v2291 = vpack.c.b16 %v2180, %v2179
        %v2292 = vpack.c.b16 %v2182, %v2181
        %v2293 = vpack.c.b16 %v2184, %v2183
        %v2294 = vpack.c.b16 %v2186, %v2185
        %v2295 = vpack.c.b16 %v2188, %v2187
        %v2296 = vpack.c.b16 %v2190, %v2189
        %v2297 = vpack.c.b16 %v2192, %v2191
        %v2298 = vpack.c.b16 %v2194, %v2193
        %v2299 = vpack.c.b16 %v2196, %v2195
        %v2300 = vpack.c.b16 %v2198, %v2197
        %v2301 = vpack.c.b16 %v2200, %v2199
        %v2302 = vpack.c.b16 %v2202, %v2201
        %v2303 = vpack.c.b16 %v2204, %v2203
        %v2304 = vpack.c.b16 %v2206, %v2205
        %v2305 = vpack.c.b16 %v2208, %v2207
        %v2306 = vpack.c.b16 %v2210, %v2209
        %v2307 = vpack.c.b16 %v2212, %v2211
        %v2308 = vpack.c.b16 %v2214, %v2213
        %v2309 = vpack.c.b16 %v2216, %v2215
        %v2310 = vpack.c.b16 %v2217, %v2217
        %v2319 = vunpack.c.l.b16 %v752
        %v2320 = vunpack.c.l.b16 %v753
        %v2321 = vunpack.c.l.b16 %v754
        %v2322 = vunpack.c.l.b16 %v755
        %v2323 = vunpack.c.l.b16 %v756
        %v2324 = vunpack.c.l.b16 %v757
        %v2325 = vunpack.c.l.b16 %v758
        %v2326 = vunpack.c.l.b16 %v759
        %v2327 = vpack.c.b16 %v2320, %v2319
        %v2328 = vpack.c.b16 %v2322, %v2321
        %v2329 = vpack.c.b16 %v2324, %v2323
        %v2330 = vpack.c.b16 %v2326, %v2325
        %v2336 = vsel %vm792, %v2218, 0
        %v2339 = vsel %vm792, %v2219, 0
        %v2342 = vsel %vm792, %v2220, 0
        %v2345 = vsel %vm792, %v2221, 0
        %v2348 = vsel %vm792, %v2222, 0
        %v2351 = vsel %vm792, %v2223, 0
        %v2354 = vsel %vm792, %v2224, 0
        %v2357 = vsel %vm792, %v2225, 0
        %v2360 = vsel %vm792, %v2226, 0
        %v2363 = vsel %vm792, %v2227, 0
        %v2366 = vsel %vm792, %v2228, 0
        %v2369 = vsel %vm792, %v2229, 0
        %v2372 = vsel %vm792, %v2230, 0
        %v2375 = vsel %vm792, %v2231, 0
        %v2378 = vsel %vm792, %v2232, 0
        %v2381 = vsel %vm792, %v2233, 0
        %v2384 = vsel %vm792, %v2234, 0
        %v2387 = vsel %vm792, %v2235, 0
        %v2390 = vsel %vm792, %v2236, 0
        %v2393 = vsel %vm792, %v2237, 0
        %v2396 = vsel %vm792, %v2238, 0
        %v2399 = vsel %vm792, %v2239, 0
        %v2402 = vsel %vm792, %v2240, 0
        %v2405 = vsel %vm792, %v2241, 0
        %v2408 = vsel %vm792, %v2242, 0
        %v2411 = vsel %vm792, %v2243, 0
        %v2414 = vsel %vm792, %v2244, 0
        %v2417 = vsel %vm792, %v2245, 0
        %v2420 = vsel %vm792, %v2246, 0
        %v2423 = vsel %vm792, %v2247, 0
        %v2426 = vsel %vm792, %v2248, 0
        %v2429 = vsel %vm792, %v2249, 0
        %v2432 = vsel %vm792, %v2250, 0
        %v2435 = vsel %vm792, %v2251, 0
        %v2438 = vsel %vm792, %v2252, 0
        %v2441 = vsel %vm792, %v2253, 0
        %v2444 = vsel %vm792, %v2254, 0
        %v2447 = vsel %vm792, %v2255, 0
        %v2450 = vsel %vm792, %v2256, 0
        %v2453 = vsel %vm792, %v2257, 0
        %v2456 = vsel %vm792, %v2258, 0
        %v2459 = vsel %vm792, %v2259, 0
        %v2462 = vsel %vm792, %v2260, 0
        %v2465 = vsel %vm792, %v2261, 0
        %v2468 = vsel %vm792, %v2262, 0
        %v2471 = vsel %vm792, %v2263, 0
        %v2474 = vsel %vm792, %v2264, 0
        %v2477 = vsel %vm792, %v2265, 0
        %v2480 = vsel %vm792, %v2266, 0
        %v2483 = vsel %vm792, %v2267, 0
        %v2486 = vsel %vm792, %v2268, 0
        %v2489 = vsel %vm792, %v2269, 0
        %v2492 = vsel %vm792, %v2270, 0
        %v2495 = vsel %vm792, %v2271, 0
        %v2498 = vsel %vm792, %v2272, 0
        %v2501 = vsel %vm792, %v2273, 0
        %v2504 = vsel %vm792, %v2274, 0
        %v2507 = vsel %vm792, %v2275, 0
        %v2510 = vsel %vm792, %v2276, 0
        %v2513 = vsel %vm792, %v2277, 0
        %v2516 = vsel %vm792, %v2278, 0
        %v2519 = vsel %vm792, %v2279, 0
        %v2522 = vsel %vm792, %v2280, 0
        %v2525 = vsel %vm792, %v2281, 0
        %v2528 = vsel %vm792, %v2282, 0
        %v2531 = vsel %vm792, %v2283, 0
        %v2534 = vsel %vm792, %v2284, 0
        %v2537 = vsel %vm792, %v2285, 0
        %v2540 = vsel %vm792, %v2286, 0
        %v2543 = vsel %vm792, %v2287, 0
        %v2546 = vsel %vm792, %v2288, 0
        %v2549 = vsel %vm792, %v2289, 0
        %v2552 = vsel %vm792, %v2290, 0
        %v2555 = vsel %vm792, %v2291, 0
        %v2558 = vsel %vm792, %v2292, 0
        %v2561 = vsel %vm792, %v2293, 0
        %v2564 = vsel %vm792, %v2294, 0
        %v2567 = vsel %vm792, %v2295, 0
        %v2570 = vsel %vm792, %v2296, 0
        %v2573 = vsel %vm792, %v2297, 0
        %v2576 = vsel %vm792, %v2298, 0
        %v2579 = vsel %vm792, %v2299, 0
        %v2582 = vsel %vm792, %v2300, 0
        %v2585 = vsel %vm792, %v2301, 0
        %v2588 = vsel %vm792, %v2302, 0
        %v2591 = vsel %vm792, %v2303, 0
        %v2594 = vsel %vm792, %v2304, 0
        %v2597 = vsel %vm792, %v2305, 0
        %v2600 = vsel %vm792, %v2306, 0
        %v2603 = vsel %vm792, %v2307, 0
        %v2606 = vsel %vm792, %v2308, 0
        %v2609 = vsel %vm792, %v2309, 0
        %v2612 = vsel %vm792, %v2310, 0
        %2614 = vmatprep.subr.bf16.mxu0 0
        %2615 = vmatpush1.bf16.msra.mxu0 0
        %2616 = vmatprep.subr.bf16.mxu0 0
        %2617 = vmatpush1.bf16.msra.mxu0 0
        %2618 = vmatprep.subr.bf16.mxu0 0
        %2619 = vmatpush1.bf16.msra.mxu0 0
        %2620 = vmatprep.subr.bf16.mxu0 0
        %2621 = vmatpush1.bf16.msra.mxu0 0
        %2622 = vmatprep.subr.bf16.mxu0 0
        %2623 = vmatpush1.bf16.msra.mxu0 %v2330
        %2624 = vmatprep.subr.bf16.mxu0 0
        %2625 = vmatpush1.bf16.msra.mxu0 %v2329
        %2626 = vmatprep.subr.bf16.mxu0 0
        %2627 = vmatpush1.bf16.msra.mxu0 %v2328
        %2628 = vmatprep.subr.bf16.mxu0 0
        %2629 = vmatpush1.bf16.msra.mxu0 %v2327
        %2630 = vmatprep.subr.bf16.mxu0 0
        %2631 = vmatpush2.bf16.msra.mxu0 0
        %2632 = vmatprep.subr.bf16.mxu0 0
        %2633 = vmatpush2.bf16.msra.mxu0 0
        %2634 = vmatprep.subr.bf16.mxu0 0
        %2635 = vmatpush2.bf16.msra.mxu0 0
        %2636 = vmatprep.subr.bf16.mxu0 0
        %2637 = vmatpush2.bf16.msra.mxu0 0
        %2638 = vmatprep.subr.bf16.mxu0 0
        %2639 = vmatpush2.bf16.msra.mxu0 0
        %2640 = vmatprep.subr.bf16.mxu0 0
        %2641 = vmatpush2.bf16.msra.mxu0 0
        %2642 = vmatprep.subr.bf16.mxu0 0
        %2643 = vmatpush2.bf16.msra.mxu0 0
        %2644 = vmatprep.subr.bf16.mxu0 0
        %2645 = vmatpush2.bf16.msra.mxu0 0
        %2646 = vmatprep.mubr.bf16.mxu0 0
        %2647 = vmatmul.mubr.bf16.gmra.mxu0 %v2336
        %v2648 = vpop.f32.mrf.mxu0
        %v2649 = vadd.f32 %v1107, %v2648
        %v2650 = vpop.f32.mrf.mxu0
        %v2651 = vpop.f32.mrf.mxu0
        %v2652 = vadd.f32 %v1110, %v2651
        %v2653 = vpop.f32.mrf.mxu0
        %2654 = vmatprep.mubr.bf16.mxu0 0
        %2655 = vmatmul.mubr.bf16.gmra.mxu0 %v2339
        %v2656 = vpop.f32.mrf.mxu0
        %v2657 = vadd.f32 %v1115, %v2656
        %v2658 = vpop.f32.mrf.mxu0
        %v2659 = vpop.f32.mrf.mxu0
        %v2660 = vadd.f32 %v1118, %v2659
        %v2661 = vpop.f32.mrf.mxu0
        %2662 = vmatprep.mubr.bf16.mxu0 0
        %2663 = vmatmul.mubr.bf16.gmra.mxu0 %v2342
        %v2664 = vpop.f32.mrf.mxu0
        %v2665 = vadd.f32 %v1123, %v2664
        %v2666 = vpop.f32.mrf.mxu0
        %v2667 = vpop.f32.mrf.mxu0
        %v2668 = vadd.f32 %v1126, %v2667
        %v2669 = vpop.f32.mrf.mxu0
        %2670 = vmatprep.mubr.bf16.mxu0 0
        %2671 = vmatmul.mubr.bf16.gmra.mxu0 %v2345
        %v2672 = vpop.f32.mrf.mxu0
        %v2673 = vadd.f32 %v1131, %v2672
        %v2674 = vpop.f32.mrf.mxu0
        %v2675 = vpop.f32.mrf.mxu0
        %v2676 = vadd.f32 %v1134, %v2675
        %v2677 = vpop.f32.mrf.mxu0
        %2678 = vmatprep.mubr.bf16.mxu0 0
        %2679 = vmatmul.mubr.bf16.gmra.mxu0 %v2348
        %v2680 = vpop.f32.mrf.mxu0
        %v2681 = vadd.f32 %v1139, %v2680
        %v2682 = vpop.f32.mrf.mxu0
        %v2683 = vpop.f32.mrf.mxu0
        %v2684 = vadd.f32 %v1142, %v2683
        %v2685 = vpop.f32.mrf.mxu0
        %2686 = vmatprep.mubr.bf16.mxu0 0
        %2687 = vmatmul.mubr.bf16.gmra.mxu0 %v2351
        %v2688 = vpop.f32.mrf.mxu0
        %v2689 = vadd.f32 %v1147, %v2688
        %v2690 = vpop.f32.mrf.mxu0
        %v2691 = vpop.f32.mrf.mxu0
        %v2692 = vadd.f32 %v1150, %v2691
        %v2693 = vpop.f32.mrf.mxu0
        %2694 = vmatprep.mubr.bf16.mxu0 0
        %2695 = vmatmul.mubr.bf16.gmra.mxu0 %v2354
        %v2696 = vpop.f32.mrf.mxu0
        %v2697 = vadd.f32 %v1155, %v2696
        %v2698 = vpop.f32.mrf.mxu0
        %v2699 = vpop.f32.mrf.mxu0
        %v2700 = vadd.f32 %v1158, %v2699
        %v2701 = vpop.f32.mrf.mxu0
        %2702 = vmatprep.mubr.bf16.mxu0 0
        %2703 = vmatmul.mubr.bf16.gmra.mxu0 %v2357
        %v2704 = vpop.f32.mrf.mxu0
        %v2705 = vadd.f32 %v1163, %v2704
        %v2706 = vpop.f32.mrf.mxu0
        %v2707 = vpop.f32.mrf.mxu0
        %v2708 = vadd.f32 %v1166, %v2707
        %v2709 = vpop.f32.mrf.mxu0
        %2710 = vmatprep.mubr.bf16.mxu0 0
        %2711 = vmatmul.mubr.bf16.gmra.mxu0 %v2360
        %v2712 = vpop.f32.mrf.mxu0
        %v2713 = vadd.f32 %v1171, %v2712
        %v2714 = vpop.f32.mrf.mxu0
        %v2715 = vpop.f32.mrf.mxu0
        %v2716 = vadd.f32 %v1174, %v2715
        %v2717 = vpop.f32.mrf.mxu0
        %2718 = vmatprep.mubr.bf16.mxu0 0
        %2719 = vmatmul.mubr.bf16.gmra.mxu0 %v2363
        %v2720 = vpop.f32.mrf.mxu0
        %v2721 = vadd.f32 %v1179, %v2720
        %v2722 = vpop.f32.mrf.mxu0
        %v2723 = vpop.f32.mrf.mxu0
        %v2724 = vadd.f32 %v1182, %v2723
        %v2725 = vpop.f32.mrf.mxu0
        %2726 = vmatprep.mubr.bf16.mxu0 0
        %2727 = vmatmul.mubr.bf16.gmra.mxu0 %v2366
        %v2728 = vpop.f32.mrf.mxu0
        %v2729 = vadd.f32 %v1187, %v2728
        %v2730 = vpop.f32.mrf.mxu0
        %v2731 = vpop.f32.mrf.mxu0
        %v2732 = vadd.f32 %v1190, %v2731
        %v2733 = vpop.f32.mrf.mxu0
        %2734 = vmatprep.mubr.bf16.mxu0 0
        %2735 = vmatmul.mubr.bf16.gmra.mxu0 %v2369
        %v2736 = vpop.f32.mrf.mxu0
        %v2737 = vadd.f32 %v1195, %v2736
        %v2738 = vpop.f32.mrf.mxu0
        %v2739 = vpop.f32.mrf.mxu0
        %v2740 = vadd.f32 %v1198, %v2739
        %v2741 = vpop.f32.mrf.mxu0
        %2742 = vmatprep.mubr.bf16.mxu0 0
        %2743 = vmatmul.mubr.bf16.gmra.mxu0 %v2372
        %v2744 = vpop.f32.mrf.mxu0
        %v2745 = vadd.f32 %v1203, %v2744
        %v2746 = vpop.f32.mrf.mxu0
        %v2747 = vpop.f32.mrf.mxu0
        %v2748 = vadd.f32 %v1206, %v2747
        %v2749 = vpop.f32.mrf.mxu0
        %2750 = vmatprep.mubr.bf16.mxu0 0
        %2751 = vmatmul.mubr.bf16.gmra.mxu0 %v2375
        %v2752 = vpop.f32.mrf.mxu0
        %v2753 = vadd.f32 %v1211, %v2752
        %v2754 = vpop.f32.mrf.mxu0
        %v2755 = vpop.f32.mrf.mxu0
        %v2756 = vadd.f32 %v1214, %v2755
        %v2757 = vpop.f32.mrf.mxu0
        %2758 = vmatprep.mubr.bf16.mxu0 0
        %2759 = vmatmul.mubr.bf16.gmra.mxu0 %v2378
        %v2760 = vpop.f32.mrf.mxu0
        %v2761 = vadd.f32 %v1219, %v2760
        %v2762 = vpop.f32.mrf.mxu0
        %v2763 = vpop.f32.mrf.mxu0
        %v2764 = vadd.f32 %v1222, %v2763
        %v2765 = vpop.f32.mrf.mxu0
        %2766 = vmatprep.mubr.bf16.mxu0 0
        %2767 = vmatmul.mubr.bf16.gmra.mxu0 %v2381
        %v2768 = vpop.f32.mrf.mxu0
        %v2769 = vadd.f32 %v1227, %v2768
        %v2770 = vpop.f32.mrf.mxu0
        %v2771 = vpop.f32.mrf.mxu0
        %v2772 = vadd.f32 %v1230, %v2771
        %v2773 = vpop.f32.mrf.mxu0
        %2774 = vmatprep.mubr.bf16.mxu0 0
        %2775 = vmatmul.mubr.bf16.gmra.mxu0 %v2384
        %v2776 = vpop.f32.mrf.mxu0
        %v2777 = vadd.f32 %v1235, %v2776
        %v2778 = vpop.f32.mrf.mxu0
        %v2779 = vpop.f32.mrf.mxu0
        %v2780 = vadd.f32 %v1238, %v2779
        %v2781 = vpop.f32.mrf.mxu0
        %2782 = vmatprep.mubr.bf16.mxu0 0
        %2783 = vmatmul.mubr.bf16.gmra.mxu0 %v2387
        %v2784 = vpop.f32.mrf.mxu0
        %v2785 = vadd.f32 %v1243, %v2784
        %v2786 = vpop.f32.mrf.mxu0
        %v2787 = vpop.f32.mrf.mxu0
        %v2788 = vadd.f32 %v1246, %v2787
        %v2789 = vpop.f32.mrf.mxu0
        %2790 = vmatprep.mubr.bf16.mxu0 0
        %2791 = vmatmul.mubr.bf16.gmra.mxu0 %v2390
        %v2792 = vpop.f32.mrf.mxu0
        %v2793 = vadd.f32 %v1251, %v2792
        %v2794 = vpop.f32.mrf.mxu0
        %v2795 = vpop.f32.mrf.mxu0
        %v2796 = vadd.f32 %v1254, %v2795
        %v2797 = vpop.f32.mrf.mxu0
        %2798 = vmatprep.mubr.bf16.mxu0 0
        %2799 = vmatmul.mubr.bf16.gmra.mxu0 %v2393
        %v2800 = vpop.f32.mrf.mxu0
        %v2801 = vadd.f32 %v1259, %v2800
        %v2802 = vpop.f32.mrf.mxu0
        %v2803 = vpop.f32.mrf.mxu0
        %v2804 = vadd.f32 %v1262, %v2803
        %v2805 = vpop.f32.mrf.mxu0
        %2806 = vmatprep.mubr.bf16.mxu0 0
        %2807 = vmatmul.mubr.bf16.gmra.mxu0 %v2396
        %v2808 = vpop.f32.mrf.mxu0
        %v2809 = vadd.f32 %v1267, %v2808
        %v2810 = vpop.f32.mrf.mxu0
        %v2811 = vpop.f32.mrf.mxu0
        %v2812 = vadd.f32 %v1270, %v2811
        %v2813 = vpop.f32.mrf.mxu0
        %2814 = vmatprep.mubr.bf16.mxu0 0
        %2815 = vmatmul.mubr.bf16.gmra.mxu0 %v2399
        %v2816 = vpop.f32.mrf.mxu0
        %v2817 = vadd.f32 %v1275, %v2816
        %v2818 = vpop.f32.mrf.mxu0
        %v2819 = vpop.f32.mrf.mxu0
        %v2820 = vadd.f32 %v1278, %v2819
        %v2821 = vpop.f32.mrf.mxu0
        %2822 = vmatprep.mubr.bf16.mxu0 0
        %2823 = vmatmul.mubr.bf16.gmra.mxu0 %v2402
        %v2824 = vpop.f32.mrf.mxu0
        %v2825 = vadd.f32 %v1283, %v2824
        %v2826 = vpop.f32.mrf.mxu0
        %v2827 = vpop.f32.mrf.mxu0
        %v2828 = vadd.f32 %v1286, %v2827
        %v2829 = vpop.f32.mrf.mxu0
        %2830 = vmatprep.mubr.bf16.mxu0 0
        %2831 = vmatmul.mubr.bf16.gmra.mxu0 %v2405
        %v2832 = vpop.f32.mrf.mxu0
        %v2833 = vadd.f32 %v1291, %v2832
        %v2834 = vpop.f32.mrf.mxu0
        %v2835 = vpop.f32.mrf.mxu0
        %v2836 = vadd.f32 %v1294, %v2835
        %v2837 = vpop.f32.mrf.mxu0
        %2838 = vmatprep.mubr.bf16.mxu0 0
        %2839 = vmatmul.mubr.bf16.gmra.mxu0 %v2408
        %v2840 = vpop.f32.mrf.mxu0
        %v2841 = vadd.f32 %v1299, %v2840
        %v2842 = vpop.f32.mrf.mxu0
        %v2843 = vpop.f32.mrf.mxu0
        %v2844 = vadd.f32 %v1302, %v2843
        %v2845 = vpop.f32.mrf.mxu0
        %2846 = vmatprep.mubr.bf16.mxu0 0
        %2847 = vmatmul.mubr.bf16.gmra.mxu0 %v2411
        %v2848 = vpop.f32.mrf.mxu0
        %v2849 = vadd.f32 %v1307, %v2848
        %v2850 = vpop.f32.mrf.mxu0
        %v2851 = vpop.f32.mrf.mxu0
        %v2852 = vadd.f32 %v1310, %v2851
        %v2853 = vpop.f32.mrf.mxu0
        %2854 = vmatprep.mubr.bf16.mxu0 0
        %2855 = vmatmul.mubr.bf16.gmra.mxu0 %v2414
        %v2856 = vpop.f32.mrf.mxu0
        %v2857 = vadd.f32 %v1315, %v2856
        %v2858 = vpop.f32.mrf.mxu0
        %v2859 = vpop.f32.mrf.mxu0
        %v2860 = vadd.f32 %v1318, %v2859
        %v2861 = vpop.f32.mrf.mxu0
        %2862 = vmatprep.mubr.bf16.mxu0 0
        %2863 = vmatmul.mubr.bf16.gmra.mxu0 %v2417
        %v2864 = vpop.f32.mrf.mxu0
        %v2865 = vadd.f32 %v1323, %v2864
        %v2866 = vpop.f32.mrf.mxu0
        %v2867 = vpop.f32.mrf.mxu0
        %v2868 = vadd.f32 %v1326, %v2867
        %v2869 = vpop.f32.mrf.mxu0
        %2870 = vmatprep.mubr.bf16.mxu0 0
        %2871 = vmatmul.mubr.bf16.gmra.mxu0 %v2420
        %v2872 = vpop.f32.mrf.mxu0
        %v2873 = vadd.f32 %v1331, %v2872
        %v2874 = vpop.f32.mrf.mxu0
        %v2875 = vpop.f32.mrf.mxu0
        %v2876 = vadd.f32 %v1334, %v2875
        %v2877 = vpop.f32.mrf.mxu0
        %2878 = vmatprep.mubr.bf16.mxu0 0
        %2879 = vmatmul.mubr.bf16.gmra.mxu0 %v2423
        %v2880 = vpop.f32.mrf.mxu0
        %v2881 = vadd.f32 %v1339, %v2880
        %v2882 = vpop.f32.mrf.mxu0
        %v2883 = vpop.f32.mrf.mxu0
        %v2884 = vadd.f32 %v1342, %v2883
        %v2885 = vpop.f32.mrf.mxu0
        %2886 = vmatprep.mubr.bf16.mxu0 0
        %2887 = vmatmul.mubr.bf16.gmra.mxu0 %v2426
        %v2888 = vpop.f32.mrf.mxu0
        %v2889 = vadd.f32 %v1347, %v2888
        %v2890 = vpop.f32.mrf.mxu0
        %v2891 = vpop.f32.mrf.mxu0
        %v2892 = vadd.f32 %v1350, %v2891
        %v2893 = vpop.f32.mrf.mxu0
        %2894 = vmatprep.mubr.bf16.mxu0 0
        %2895 = vmatmul.mubr.bf16.gmra.mxu0 %v2429
        %v2896 = vpop.f32.mrf.mxu0
        %v2897 = vadd.f32 %v1355, %v2896
        %v2898 = vpop.f32.mrf.mxu0
        %v2899 = vpop.f32.mrf.mxu0
        %v2900 = vadd.f32 %v1358, %v2899
        %v2901 = vpop.f32.mrf.mxu0
        %2902 = vmatprep.mubr.bf16.mxu0 0
        %2903 = vmatmul.mubr.bf16.gmra.mxu0 %v2432
        %v2904 = vpop.f32.mrf.mxu0
        %v2905 = vadd.f32 %v1363, %v2904
        %v2906 = vpop.f32.mrf.mxu0
        %v2907 = vpop.f32.mrf.mxu0
        %v2908 = vadd.f32 %v1366, %v2907
        %v2909 = vpop.f32.mrf.mxu0
        %2910 = vmatprep.mubr.bf16.mxu0 0
        %2911 = vmatmul.mubr.bf16.gmra.mxu0 %v2435
        %v2912 = vpop.f32.mrf.mxu0
        %v2913 = vadd.f32 %v1371, %v2912
        %v2914 = vpop.f32.mrf.mxu0
        %v2915 = vpop.f32.mrf.mxu0
        %v2916 = vadd.f32 %v1374, %v2915
        %v2917 = vpop.f32.mrf.mxu0
        %2918 = vmatprep.mubr.bf16.mxu0 0
        %2919 = vmatmul.mubr.bf16.gmra.mxu0 %v2438
        %v2920 = vpop.f32.mrf.mxu0
        %v2921 = vadd.f32 %v1379, %v2920
        %v2922 = vpop.f32.mrf.mxu0
        %v2923 = vpop.f32.mrf.mxu0
        %v2924 = vadd.f32 %v1382, %v2923
        %v2925 = vpop.f32.mrf.mxu0
        %2926 = vmatprep.mubr.bf16.mxu0 0
        %2927 = vmatmul.mubr.bf16.gmra.mxu0 %v2441
        %v2928 = vpop.f32.mrf.mxu0
        %v2929 = vadd.f32 %v1387, %v2928
        %v2930 = vpop.f32.mrf.mxu0
        %v2931 = vpop.f32.mrf.mxu0
        %v2932 = vadd.f32 %v1390, %v2931
        %v2933 = vpop.f32.mrf.mxu0
        %2934 = vmatprep.mubr.bf16.mxu0 0
        %2935 = vmatmul.mubr.bf16.gmra.mxu0 %v2444
        %v2936 = vpop.f32.mrf.mxu0
        %v2937 = vadd.f32 %v1395, %v2936
        %v2938 = vpop.f32.mrf.mxu0
        %v2939 = vpop.f32.mrf.mxu0
        %v2940 = vadd.f32 %v1398, %v2939
        %v2941 = vpop.f32.mrf.mxu0
        %2942 = vmatprep.mubr.bf16.mxu0 0
        %2943 = vmatmul.mubr.bf16.gmra.mxu0 %v2447
        %v2944 = vpop.f32.mrf.mxu0
        %v2945 = vadd.f32 %v1403, %v2944
        %v2946 = vpop.f32.mrf.mxu0
        %v2947 = vpop.f32.mrf.mxu0
        %v2948 = vadd.f32 %v1406, %v2947
        %v2949 = vpop.f32.mrf.mxu0
        %2950 = vmatprep.mubr.bf16.mxu0 0
        %2951 = vmatmul.mubr.bf16.gmra.mxu0 %v2450
        %v2952 = vpop.f32.mrf.mxu0
        %v2953 = vadd.f32 %v1411, %v2952
        %v2954 = vpop.f32.mrf.mxu0
        %v2955 = vpop.f32.mrf.mxu0
        %v2956 = vadd.f32 %v1414, %v2955
        %v2957 = vpop.f32.mrf.mxu0
        %2958 = vmatprep.mubr.bf16.mxu0 0
        %2959 = vmatmul.mubr.bf16.gmra.mxu0 %v2453
        %v2960 = vpop.f32.mrf.mxu0
        %v2961 = vadd.f32 %v1419, %v2960
        %v2962 = vpop.f32.mrf.mxu0
        %v2963 = vpop.f32.mrf.mxu0
        %v2964 = vadd.f32 %v1422, %v2963
        %v2965 = vpop.f32.mrf.mxu0
        %2966 = vmatprep.mubr.bf16.mxu0 0
        %2967 = vmatmul.mubr.bf16.gmra.mxu0 %v2456
        %v2968 = vpop.f32.mrf.mxu0
        %v2969 = vadd.f32 %v1427, %v2968
        %v2970 = vpop.f32.mrf.mxu0
        %v2971 = vpop.f32.mrf.mxu0
        %v2972 = vadd.f32 %v1430, %v2971
        %v2973 = vpop.f32.mrf.mxu0
        %2974 = vmatprep.mubr.bf16.mxu0 0
        %2975 = vmatmul.mubr.bf16.gmra.mxu0 %v2459
        %v2976 = vpop.f32.mrf.mxu0
        %v2977 = vadd.f32 %v1435, %v2976
        %v2978 = vpop.f32.mrf.mxu0
        %v2979 = vpop.f32.mrf.mxu0
        %v2980 = vadd.f32 %v1438, %v2979
        %v2981 = vpop.f32.mrf.mxu0
        %2982 = vmatprep.mubr.bf16.mxu0 0
        %2983 = vmatmul.mubr.bf16.gmra.mxu0 %v2462
        %v2984 = vpop.f32.mrf.mxu0
        %v2985 = vadd.f32 %v1443, %v2984
        %v2986 = vpop.f32.mrf.mxu0
        %v2987 = vpop.f32.mrf.mxu0
        %v2988 = vadd.f32 %v1446, %v2987
        %v2989 = vpop.f32.mrf.mxu0
        %2990 = vmatprep.mubr.bf16.mxu0 0
        %2991 = vmatmul.mubr.bf16.gmra.mxu0 %v2465
        %v2992 = vpop.f32.mrf.mxu0
        %v2993 = vadd.f32 %v1451, %v2992
        %v2994 = vpop.f32.mrf.mxu0
        %v2995 = vpop.f32.mrf.mxu0
        %v2996 = vadd.f32 %v1454, %v2995
        %v2997 = vpop.f32.mrf.mxu0
        %2998 = vmatprep.mubr.bf16.mxu0 0
        %2999 = vmatmul.mubr.bf16.gmra.mxu0 %v2468
        %v3000 = vpop.f32.mrf.mxu0
        %v3001 = vadd.f32 %v1459, %v3000
        %v3002 = vpop.f32.mrf.mxu0
        %v3003 = vpop.f32.mrf.mxu0
        %v3004 = vadd.f32 %v1462, %v3003
        %v3005 = vpop.f32.mrf.mxu0
        %3006 = vmatprep.mubr.bf16.mxu0 0
        %3007 = vmatmul.mubr.bf16.gmra.mxu0 %v2471
        %v3008 = vpop.f32.mrf.mxu0
        %v3009 = vadd.f32 %v1467, %v3008
        %v3010 = vpop.f32.mrf.mxu0
        %v3011 = vpop.f32.mrf.mxu0
        %v3012 = vadd.f32 %v1470, %v3011
        %v3013 = vpop.f32.mrf.mxu0
        %3014 = vmatprep.mubr.bf16.mxu0 0
        %3015 = vmatmul.mubr.bf16.gmra.mxu0 %v2474
        %v3016 = vpop.f32.mrf.mxu0
        %v3017 = vadd.f32 %v1475, %v3016
        %v3018 = vpop.f32.mrf.mxu0
        %v3019 = vpop.f32.mrf.mxu0
        %v3020 = vadd.f32 %v1478, %v3019
        %v3021 = vpop.f32.mrf.mxu0
        %3022 = vmatprep.mubr.bf16.mxu0 0
        %3023 = vmatmul.mubr.bf16.gmra.mxu0 %v2477
        %v3024 = vpop.f32.mrf.mxu0
        %v3025 = vadd.f32 %v1483, %v3024
        %v3026 = vpop.f32.mrf.mxu0
        %v3027 = vpop.f32.mrf.mxu0
        %v3028 = vadd.f32 %v1486, %v3027
        %v3029 = vpop.f32.mrf.mxu0
        %3030 = vmatprep.mubr.bf16.mxu0 0
        %3031 = vmatmul.mubr.bf16.gmra.mxu0 %v2480
        %v3032 = vpop.f32.mrf.mxu0
        %v3033 = vadd.f32 %v1491, %v3032
        %v3034 = vpop.f32.mrf.mxu0
        %v3035 = vpop.f32.mrf.mxu0
        %v3036 = vadd.f32 %v1494, %v3035
        %v3037 = vpop.f32.mrf.mxu0
        %3038 = vmatprep.mubr.bf16.mxu0 0
        %3039 = vmatmul.mubr.bf16.gmra.mxu0 %v2483
        %v3040 = vpop.f32.mrf.mxu0
        %v3041 = vadd.f32 %v1499, %v3040
        %v3042 = vpop.f32.mrf.mxu0
        %v3043 = vpop.f32.mrf.mxu0
        %v3044 = vadd.f32 %v1502, %v3043
        %v3045 = vpop.f32.mrf.mxu0
        %3046 = vmatprep.mubr.bf16.mxu0 0
        %3047 = vmatmul.mubr.bf16.gmra.mxu0 %v2486
        %v3048 = vpop.f32.mrf.mxu0
        %v3049 = vadd.f32 %v1507, %v3048
        %v3050 = vpop.f32.mrf.mxu0
        %v3051 = vpop.f32.mrf.mxu0
        %v3052 = vadd.f32 %v1510, %v3051
        %v3053 = vpop.f32.mrf.mxu0
        %3054 = vmatprep.mubr.bf16.mxu0 0
        %3055 = vmatmul.mubr.bf16.gmra.mxu0 %v2489
        %v3056 = vpop.f32.mrf.mxu0
        %v3057 = vadd.f32 %v1515, %v3056
        %v3058 = vpop.f32.mrf.mxu0
        %v3059 = vpop.f32.mrf.mxu0
        %v3060 = vadd.f32 %v1518, %v3059
        %v3061 = vpop.f32.mrf.mxu0
        %3062 = vmatprep.mubr.bf16.mxu0 0
        %3063 = vmatmul.mubr.bf16.gmra.mxu0 %v2492
        %v3064 = vpop.f32.mrf.mxu0
        %v3065 = vadd.f32 %v1523, %v3064
        %v3066 = vpop.f32.mrf.mxu0
        %v3067 = vpop.f32.mrf.mxu0
        %v3068 = vadd.f32 %v1526, %v3067
        %v3069 = vpop.f32.mrf.mxu0
        %3070 = vmatprep.mubr.bf16.mxu0 0
        %3071 = vmatmul.mubr.bf16.gmra.mxu0 %v2495
        %v3072 = vpop.f32.mrf.mxu0
        %v3073 = vadd.f32 %v1531, %v3072
        %v3074 = vpop.f32.mrf.mxu0
        %v3075 = vpop.f32.mrf.mxu0
        %v3076 = vadd.f32 %v1534, %v3075
        %v3077 = vpop.f32.mrf.mxu0
        %3078 = vmatprep.mubr.bf16.mxu0 0
        %3079 = vmatmul.mubr.bf16.gmra.mxu0 %v2498
        %v3080 = vpop.f32.mrf.mxu0
        %v3081 = vadd.f32 %v1539, %v3080
        %v3082 = vpop.f32.mrf.mxu0
        %v3083 = vpop.f32.mrf.mxu0
        %v3084 = vadd.f32 %v1542, %v3083
        %v3085 = vpop.f32.mrf.mxu0
        %3086 = vmatprep.mubr.bf16.mxu0 0
        %3087 = vmatmul.mubr.bf16.gmra.mxu0 %v2501
        %v3088 = vpop.f32.mrf.mxu0
        %v3089 = vadd.f32 %v1547, %v3088
        %v3090 = vpop.f32.mrf.mxu0
        %v3091 = vpop.f32.mrf.mxu0
        %v3092 = vadd.f32 %v1550, %v3091
        %v3093 = vpop.f32.mrf.mxu0
        %3094 = vmatprep.mubr.bf16.mxu0 0
        %3095 = vmatmul.mubr.bf16.gmra.mxu0 %v2504
        %v3096 = vpop.f32.mrf.mxu0
        %v3097 = vadd.f32 %v1555, %v3096
        %v3098 = vpop.f32.mrf.mxu0
        %v3099 = vpop.f32.mrf.mxu0
        %v3100 = vadd.f32 %v1558, %v3099
        %v3101 = vpop.f32.mrf.mxu0
        %3102 = vmatprep.mubr.bf16.mxu0 0
        %3103 = vmatmul.mubr.bf16.gmra.mxu0 %v2507
        %v3104 = vpop.f32.mrf.mxu0
        %v3105 = vadd.f32 %v1563, %v3104
        %v3106 = vpop.f32.mrf.mxu0
        %v3107 = vpop.f32.mrf.mxu0
        %v3108 = vadd.f32 %v1566, %v3107
        %v3109 = vpop.f32.mrf.mxu0
        %3110 = vmatprep.mubr.bf16.mxu0 0
        %3111 = vmatmul.mubr.bf16.gmra.mxu0 %v2510
        %v3112 = vpop.f32.mrf.mxu0
        %v3113 = vadd.f32 %v1571, %v3112
        %v3114 = vpop.f32.mrf.mxu0
        %v3115 = vpop.f32.mrf.mxu0
        %v3116 = vadd.f32 %v1574, %v3115
        %v3117 = vpop.f32.mrf.mxu0
        %3118 = vmatprep.mubr.bf16.mxu0 0
        %3119 = vmatmul.mubr.bf16.gmra.mxu0 %v2513
        %v3120 = vpop.f32.mrf.mxu0
        %v3121 = vadd.f32 %v1579, %v3120
        %v3122 = vpop.f32.mrf.mxu0
        %v3123 = vpop.f32.mrf.mxu0
        %v3124 = vadd.f32 %v1582, %v3123
        %v3125 = vpop.f32.mrf.mxu0
        %3126 = vmatprep.mubr.bf16.mxu0 0
        %3127 = vmatmul.mubr.bf16.gmra.mxu0 %v2516
        %v3128 = vpop.f32.mrf.mxu0
        %v3129 = vadd.f32 %v1587, %v3128
        %v3130 = vpop.f32.mrf.mxu0
        %v3131 = vpop.f32.mrf.mxu0
        %v3132 = vadd.f32 %v1590, %v3131
        %v3133 = vpop.f32.mrf.mxu0
        %3134 = vmatprep.mubr.bf16.mxu0 0
        %3135 = vmatmul.mubr.bf16.gmra.mxu0 %v2519
        %v3136 = vpop.f32.mrf.mxu0
        %v3137 = vadd.f32 %v1595, %v3136
        %v3138 = vpop.f32.mrf.mxu0
        %v3139 = vpop.f32.mrf.mxu0
        %v3140 = vadd.f32 %v1598, %v3139
        %v3141 = vpop.f32.mrf.mxu0
        %3142 = vmatprep.mubr.bf16.mxu0 0
        %3143 = vmatmul.mubr.bf16.gmra.mxu0 %v2522
        %v3144 = vpop.f32.mrf.mxu0
        %v3145 = vadd.f32 %v1603, %v3144
        %v3146 = vpop.f32.mrf.mxu0
        %v3147 = vpop.f32.mrf.mxu0
        %v3148 = vadd.f32 %v1606, %v3147
        %v3149 = vpop.f32.mrf.mxu0
        %3150 = vmatprep.mubr.bf16.mxu0 0
        %3151 = vmatmul.mubr.bf16.gmra.mxu0 %v2525
        %v3152 = vpop.f32.mrf.mxu0
        %v3153 = vadd.f32 %v1611, %v3152
        %v3154 = vpop.f32.mrf.mxu0
        %v3155 = vpop.f32.mrf.mxu0
        %v3156 = vadd.f32 %v1614, %v3155
        %v3157 = vpop.f32.mrf.mxu0
        %3158 = vmatprep.mubr.bf16.mxu0 0
        %3159 = vmatmul.mubr.bf16.gmra.mxu0 %v2528
        %v3160 = vpop.f32.mrf.mxu0
        %v3161 = vadd.f32 %v1619, %v3160
        %v3162 = vpop.f32.mrf.mxu0
        %v3163 = vpop.f32.mrf.mxu0
        %v3164 = vadd.f32 %v1622, %v3163
        %v3165 = vpop.f32.mrf.mxu0
        %3166 = vmatprep.mubr.bf16.mxu0 0
        %3167 = vmatmul.mubr.bf16.gmra.mxu0 %v2531
        %v3168 = vpop.f32.mrf.mxu0
        %v3169 = vadd.f32 %v1627, %v3168
        %v3170 = vpop.f32.mrf.mxu0
        %v3171 = vpop.f32.mrf.mxu0
        %v3172 = vadd.f32 %v1630, %v3171
        %v3173 = vpop.f32.mrf.mxu0
        %3174 = vmatprep.mubr.bf16.mxu0 0
        %3175 = vmatmul.mubr.bf16.gmra.mxu0 %v2534
        %v3176 = vpop.f32.mrf.mxu0
        %v3177 = vadd.f32 %v1635, %v3176
        %v3178 = vpop.f32.mrf.mxu0
        %v3179 = vpop.f32.mrf.mxu0
        %v3180 = vadd.f32 %v1638, %v3179
        %v3181 = vpop.f32.mrf.mxu0
        %3182 = vmatprep.mubr.bf16.mxu0 0
        %3183 = vmatmul.mubr.bf16.gmra.mxu0 %v2537
        %v3184 = vpop.f32.mrf.mxu0
        %v3185 = vadd.f32 %v1643, %v3184
        %v3186 = vpop.f32.mrf.mxu0
        %v3187 = vpop.f32.mrf.mxu0
        %v3188 = vadd.f32 %v1646, %v3187
        %v3189 = vpop.f32.mrf.mxu0
        %3190 = vmatprep.mubr.bf16.mxu0 0
        %3191 = vmatmul.mubr.bf16.gmra.mxu0 %v2540
        %v3192 = vpop.f32.mrf.mxu0
        %v3193 = vadd.f32 %v1651, %v3192
        %v3194 = vpop.f32.mrf.mxu0
        %v3195 = vpop.f32.mrf.mxu0
        %v3196 = vadd.f32 %v1654, %v3195
        %v3197 = vpop.f32.mrf.mxu0
        %3198 = vmatprep.mubr.bf16.mxu0 0
        %3199 = vmatmul.mubr.bf16.gmra.mxu0 %v2543
        %v3200 = vpop.f32.mrf.mxu0
        %v3201 = vadd.f32 %v1659, %v3200
        %v3202 = vpop.f32.mrf.mxu0
        %v3203 = vpop.f32.mrf.mxu0
        %v3204 = vadd.f32 %v1662, %v3203
        %v3205 = vpop.f32.mrf.mxu0
        %3206 = vmatprep.mubr.bf16.mxu0 0
        %3207 = vmatmul.mubr.bf16.gmra.mxu0 %v2546
        %v3208 = vpop.f32.mrf.mxu0
        %v3209 = vadd.f32 %v1667, %v3208
        %v3210 = vpop.f32.mrf.mxu0
        %v3211 = vpop.f32.mrf.mxu0
        %v3212 = vadd.f32 %v1670, %v3211
        %v3213 = vpop.f32.mrf.mxu0
        %3214 = vmatprep.mubr.bf16.mxu0 0
        %3215 = vmatmul.mubr.bf16.gmra.mxu0 %v2549
        %v3216 = vpop.f32.mrf.mxu0
        %v3217 = vadd.f32 %v1675, %v3216
        %v3218 = vpop.f32.mrf.mxu0
        %v3219 = vpop.f32.mrf.mxu0
        %v3220 = vadd.f32 %v1678, %v3219
        %v3221 = vpop.f32.mrf.mxu0
        %3222 = vmatprep.mubr.bf16.mxu0 0
        %3223 = vmatmul.mubr.bf16.gmra.mxu0 %v2552
        %v3224 = vpop.f32.mrf.mxu0
        %v3225 = vadd.f32 %v1683, %v3224
        %v3226 = vpop.f32.mrf.mxu0
        %v3227 = vpop.f32.mrf.mxu0
        %v3228 = vadd.f32 %v1686, %v3227
        %v3229 = vpop.f32.mrf.mxu0
        %3230 = vmatprep.mubr.bf16.mxu0 0
        %3231 = vmatmul.mubr.bf16.gmra.mxu0 %v2555
        %v3232 = vpop.f32.mrf.mxu0
        %v3233 = vadd.f32 %v1691, %v3232
        %v3234 = vpop.f32.mrf.mxu0
        %v3235 = vpop.f32.mrf.mxu0
        %v3236 = vadd.f32 %v1694, %v3235
        %v3237 = vpop.f32.mrf.mxu0
        %3238 = vmatprep.mubr.bf16.mxu0 0
        %3239 = vmatmul.mubr.bf16.gmra.mxu0 %v2558
        %v3240 = vpop.f32.mrf.mxu0
        %v3241 = vadd.f32 %v1699, %v3240
        %v3242 = vpop.f32.mrf.mxu0
        %v3243 = vpop.f32.mrf.mxu0
        %v3244 = vadd.f32 %v1702, %v3243
        %v3245 = vpop.f32.mrf.mxu0
        %3246 = vmatprep.mubr.bf16.mxu0 0
        %3247 = vmatmul.mubr.bf16.gmra.mxu0 %v2561
        %v3248 = vpop.f32.mrf.mxu0
        %v3249 = vadd.f32 %v1707, %v3248
        %v3250 = vpop.f32.mrf.mxu0
        %v3251 = vpop.f32.mrf.mxu0
        %v3252 = vadd.f32 %v1710, %v3251
        %v3253 = vpop.f32.mrf.mxu0
        %3254 = vmatprep.mubr.bf16.mxu0 0
        %3255 = vmatmul.mubr.bf16.gmra.mxu0 %v2564
        %v3256 = vpop.f32.mrf.mxu0
        %v3257 = vadd.f32 %v1715, %v3256
        %v3258 = vpop.f32.mrf.mxu0
        %v3259 = vpop.f32.mrf.mxu0
        %v3260 = vadd.f32 %v1718, %v3259
        %v3261 = vpop.f32.mrf.mxu0
        %3262 = vmatprep.mubr.bf16.mxu0 0
        %3263 = vmatmul.mubr.bf16.gmra.mxu0 %v2567
        %v3264 = vpop.f32.mrf.mxu0
        %v3265 = vadd.f32 %v1723, %v3264
        %v3266 = vpop.f32.mrf.mxu0
        %v3267 = vpop.f32.mrf.mxu0
        %v3268 = vadd.f32 %v1726, %v3267
        %v3269 = vpop.f32.mrf.mxu0
        %3270 = vmatprep.mubr.bf16.mxu0 0
        %3271 = vmatmul.mubr.bf16.gmra.mxu0 %v2570
        %v3272 = vpop.f32.mrf.mxu0
        %v3273 = vadd.f32 %v1731, %v3272
        %v3274 = vpop.f32.mrf.mxu0
        %v3275 = vpop.f32.mrf.mxu0
        %v3276 = vadd.f32 %v1734, %v3275
        %v3277 = vpop.f32.mrf.mxu0
        %3278 = vmatprep.mubr.bf16.mxu0 0
        %3279 = vmatmul.mubr.bf16.gmra.mxu0 %v2573
        %v3280 = vpop.f32.mrf.mxu0
        %v3281 = vadd.f32 %v1739, %v3280
        %v3282 = vpop.f32.mrf.mxu0
        %v3283 = vpop.f32.mrf.mxu0
        %v3284 = vadd.f32 %v1742, %v3283
        %v3285 = vpop.f32.mrf.mxu0
        %3286 = vmatprep.mubr.bf16.mxu0 0
        %3287 = vmatmul.mubr.bf16.gmra.mxu0 %v2576
        %v3288 = vpop.f32.mrf.mxu0
        %v3289 = vadd.f32 %v1747, %v3288
        %v3290 = vpop.f32.mrf.mxu0
        %v3291 = vpop.f32.mrf.mxu0
        %v3292 = vadd.f32 %v1750, %v3291
        %v3293 = vpop.f32.mrf.mxu0
        %3294 = vmatprep.mubr.bf16.mxu0 0
        %3295 = vmatmul.mubr.bf16.gmra.mxu0 %v2579
        %v3296 = vpop.f32.mrf.mxu0
        %v3297 = vadd.f32 %v1755, %v3296
        %v3298 = vpop.f32.mrf.mxu0
        %v3299 = vpop.f32.mrf.mxu0
        %v3300 = vadd.f32 %v1758, %v3299
        %v3301 = vpop.f32.mrf.mxu0
        %3302 = vmatprep.mubr.bf16.mxu0 0
        %3303 = vmatmul.mubr.bf16.gmra.mxu0 %v2582
        %v3304 = vpop.f32.mrf.mxu0
        %v3305 = vadd.f32 %v1763, %v3304
        %v3306 = vpop.f32.mrf.mxu0
        %v3307 = vpop.f32.mrf.mxu0
        %v3308 = vadd.f32 %v1766, %v3307
        %v3309 = vpop.f32.mrf.mxu0
        %3310 = vmatprep.mubr.bf16.mxu0 0
        %3311 = vmatmul.mubr.bf16.gmra.mxu0 %v2585
        %v3312 = vpop.f32.mrf.mxu0
        %v3313 = vadd.f32 %v1771, %v3312
        %v3314 = vpop.f32.mrf.mxu0
        %v3315 = vpop.f32.mrf.mxu0
        %v3316 = vadd.f32 %v1774, %v3315
        %v3317 = vpop.f32.mrf.mxu0
        %3318 = vmatprep.mubr.bf16.mxu0 0
        %3319 = vmatmul.mubr.bf16.gmra.mxu0 %v2588
        %v3320 = vpop.f32.mrf.mxu0
        %v3321 = vadd.f32 %v1779, %v3320
        %v3322 = vpop.f32.mrf.mxu0
        %v3323 = vpop.f32.mrf.mxu0
        %v3324 = vadd.f32 %v1782, %v3323
        %v3325 = vpop.f32.mrf.mxu0
        %3326 = vmatprep.mubr.bf16.mxu0 0
        %3327 = vmatmul.mubr.bf16.gmra.mxu0 %v2591
        %v3328 = vpop.f32.mrf.mxu0
        %v3329 = vadd.f32 %v1787, %v3328
        %v3330 = vpop.f32.mrf.mxu0
        %v3331 = vpop.f32.mrf.mxu0
        %v3332 = vadd.f32 %v1790, %v3331
        %v3333 = vpop.f32.mrf.mxu0
        %3334 = vmatprep.mubr.bf16.mxu0 0
        %3335 = vmatmul.mubr.bf16.gmra.mxu0 %v2594
        %v3336 = vpop.f32.mrf.mxu0
        %v3337 = vadd.f32 %v1795, %v3336
        %v3338 = vpop.f32.mrf.mxu0
        %v3339 = vpop.f32.mrf.mxu0
        %v3340 = vadd.f32 %v1798, %v3339
        %v3341 = vpop.f32.mrf.mxu0
        %3342 = vmatprep.mubr.bf16.mxu0 0
        %3343 = vmatmul.mubr.bf16.gmra.mxu0 %v2597
        %v3344 = vpop.f32.mrf.mxu0
        %v3345 = vadd.f32 %v1803, %v3344
        %v3346 = vpop.f32.mrf.mxu0
        %v3347 = vpop.f32.mrf.mxu0
        %v3348 = vadd.f32 %v1806, %v3347
        %v3349 = vpop.f32.mrf.mxu0
        %3350 = vmatprep.mubr.bf16.mxu0 0
        %3351 = vmatmul.mubr.bf16.gmra.mxu0 %v2600
        %v3352 = vpop.f32.mrf.mxu0
        %v3353 = vadd.f32 %v1811, %v3352
        %v3354 = vpop.f32.mrf.mxu0
        %v3355 = vpop.f32.mrf.mxu0
        %v3356 = vadd.f32 %v1814, %v3355
        %v3357 = vpop.f32.mrf.mxu0
        %3358 = vmatprep.mubr.bf16.mxu0 0
        %3359 = vmatmul.mubr.bf16.gmra.mxu0 %v2603
        %v3360 = vpop.f32.mrf.mxu0
        %v3361 = vadd.f32 %v1819, %v3360
        %v3362 = vpop.f32.mrf.mxu0
        %v3363 = vpop.f32.mrf.mxu0
        %v3364 = vadd.f32 %v1822, %v3363
        %v3365 = vpop.f32.mrf.mxu0
        %3366 = vmatprep.mubr.bf16.mxu0 0
        %3367 = vmatmul.mubr.bf16.gmra.mxu0 %v2606
        %v3368 = vpop.f32.mrf.mxu0
        %v3369 = vadd.f32 %v1827, %v3368
        %v3370 = vpop.f32.mrf.mxu0
        %v3371 = vpop.f32.mrf.mxu0
        %v3372 = vadd.f32 %v1830, %v3371
        %v3373 = vpop.f32.mrf.mxu0
        %3374 = vmatprep.mubr.bf16.mxu0 0
        %3375 = vmatmul.mubr.bf16.gmra.mxu0 %v2609
        %v3376 = vpop.f32.mrf.mxu0
        %v3377 = vadd.f32 %v1835, %v3376
        %v3378 = vpop.f32.mrf.mxu0
        %v3379 = vpop.f32.mrf.mxu0
        %v3380 = vadd.f32 %v1838, %v3379
        %v3381 = vpop.f32.mrf.mxu0
        %3382 = vmatprep.mubr.bf16.mxu0 0
        %3383 = vmatmul.mubr.bf16.gmra.mxu0 %v2612
        %v3384 = vpop.f32.mrf.mxu0
        %v3385 = vadd.f32 %v1843, %v3384
        %v3386 = vpop.f32.mrf.mxu0
        %v3387 = vpop.f32.mrf.mxu0
        %v3388 = vpop.f32.mrf.mxu0
        %3389 = vdwg.mxu0
        %v3390 = vld [vmem:[%s4] sm:$0x1]
        %v3392 = vlaneseq
        %v3393 = vshrl.u32 %v3392, 7
        %v3394 = vsub.s32 0, %v3393
        %v3395 = vrot.slane %v3390, %v3394
        %v3397 = vadd.f32 %v2649, %v3395
        %v3398 = vadd.f32 %v2652, %v3395
        %v3399 = vadd.f32 %v2657, %v3395
        %v3400 = vadd.f32 %v2660, %v3395
        %v3401 = vadd.f32 %v2665, %v3395
        %v3402 = vadd.f32 %v2668, %v3395
        %v3403 = vadd.f32 %v2673, %v3395
        %v3404 = vadd.f32 %v2676, %v3395
        %v3405 = vadd.f32 %v2681, %v3395
        %v3406 = vadd.f32 %v2684, %v3395
        %v3407 = vadd.f32 %v2689, %v3395
        %v3408 = vadd.f32 %v2692, %v3395
        %v3409 = vadd.f32 %v2697, %v3395
        %v3410 = vadd.f32 %v2700, %v3395
        %v3411 = vadd.f32 %v2705, %v3395
        %v3412 = vadd.f32 %v2708, %v3395
        %v3413 = vadd.f32 %v2713, %v3395
        %v3414 = vadd.f32 %v2716, %v3395
        %v3415 = vadd.f32 %v2721, %v3395
        %v3416 = vadd.f32 %v2724, %v3395
        %v3417 = vadd.f32 %v2729, %v3395
        %v3418 = vadd.f32 %v2732, %v3395
        %v3419 = vadd.f32 %v2737, %v3395
        %v3420 = vadd.f32 %v2740, %v3395
        %v3421 = vadd.f32 %v2745, %v3395
        %v3422 = vadd.f32 %v2748, %v3395
        %v3423 = vadd.f32 %v2753, %v3395
        %v3424 = vadd.f32 %v2756, %v3395
        %v3425 = vadd.f32 %v2761, %v3395
        %v3426 = vadd.f32 %v2764, %v3395
        %v3427 = vadd.f32 %v2769, %v3395
        %v3428 = vadd.f32 %v2772, %v3395
        %v3429 = vadd.f32 %v2777, %v3395
        %v3430 = vadd.f32 %v2780, %v3395
        %v3431 = vadd.f32 %v2785, %v3395
        %v3432 = vadd.f32 %v2788, %v3395
        %v3433 = vadd.f32 %v2793, %v3395
        %v3434 = vadd.f32 %v2796, %v3395
        %v3435 = vadd.f32 %v2801, %v3395
        %v3436 = vadd.f32 %v2804, %v3395
        %v3437 = vadd.f32 %v2809, %v3395
        %v3438 = vadd.f32 %v2812, %v3395
        %v3439 = vadd.f32 %v2817, %v3395
        %v3440 = vadd.f32 %v2820, %v3395
        %v3441 = vadd.f32 %v2825, %v3395
        %v3442 = vadd.f32 %v2828, %v3395
        %v3443 = vadd.f32 %v2833, %v3395
        %v3444 = vadd.f32 %v2836, %v3395
        %v3445 = vadd.f32 %v2841, %v3395
        %v3446 = vadd.f32 %v2844, %v3395
        %v3447 = vadd.f32 %v2849, %v3395
        %v3448 = vadd.f32 %v2852, %v3395
        %v3449 = vadd.f32 %v2857, %v3395
        %v3450 = vadd.f32 %v2860, %v3395
        %v3451 = vadd.f32 %v2865, %v3395
        %v3452 = vadd.f32 %v2868, %v3395
        %v3453 = vadd.f32 %v2873, %v3395
        %v3454 = vadd.f32 %v2876, %v3395
        %v3455 = vadd.f32 %v2881, %v3395
        %v3456 = vadd.f32 %v2884, %v3395
        %v3457 = vadd.f32 %v2889, %v3395
        %v3458 = vadd.f32 %v2892, %v3395
        %v3459 = vadd.f32 %v2897, %v3395
        %v3460 = vadd.f32 %v2900, %v3395
        %v3461 = vadd.f32 %v2905, %v3395
        %v3462 = vadd.f32 %v2908, %v3395
        %v3463 = vadd.f32 %v2913, %v3395
        %v3464 = vadd.f32 %v2916, %v3395
        %v3465 = vadd.f32 %v2921, %v3395
        %v3466 = vadd.f32 %v2924, %v3395
        %v3467 = vadd.f32 %v2929, %v3395
        %v3468 = vadd.f32 %v2932, %v3395
        %v3469 = vadd.f32 %v2937, %v3395
        %v3470 = vadd.f32 %v2940, %v3395
        %v3471 = vadd.f32 %v2945, %v3395
        %v3472 = vadd.f32 %v2948, %v3395
        %v3473 = vadd.f32 %v2953, %v3395
        %v3474 = vadd.f32 %v2956, %v3395
        %v3475 = vadd.f32 %v2961, %v3395
        %v3476 = vadd.f32 %v2964, %v3395
        %v3477 = vadd.f32 %v2969, %v3395
        %v3478 = vadd.f32 %v2972, %v3395
        %v3479 = vadd.f32 %v2977, %v3395
        %v3480 = vadd.f32 %v2980, %v3395
        %v3481 = vadd.f32 %v2985, %v3395
        %v3482 = vadd.f32 %v2988, %v3395
        %v3483 = vadd.f32 %v2993, %v3395
        %v3484 = vadd.f32 %v2996, %v3395
        %v3485 = vadd.f32 %v3001, %v3395
        %v3486 = vadd.f32 %v3004, %v3395
        %v3487 = vadd.f32 %v3009, %v3395
        %v3488 = vadd.f32 %v3012, %v3395
        %v3489 = vadd.f32 %v3017, %v3395
        %v3490 = vadd.f32 %v3020, %v3395
        %v3491 = vadd.f32 %v3025, %v3395
        %v3492 = vadd.f32 %v3028, %v3395
        %v3493 = vadd.f32 %v3033, %v3395
        %v3494 = vadd.f32 %v3036, %v3395
        %v3495 = vadd.f32 %v3041, %v3395
        %v3496 = vadd.f32 %v3044, %v3395
        %v3497 = vadd.f32 %v3049, %v3395
        %v3498 = vadd.f32 %v3052, %v3395
        %v3499 = vadd.f32 %v3057, %v3395
        %v3500 = vadd.f32 %v3060, %v3395
        %v3501 = vadd.f32 %v3065, %v3395
        %v3502 = vadd.f32 %v3068, %v3395
        %v3503 = vadd.f32 %v3073, %v3395
        %v3504 = vadd.f32 %v3076, %v3395
        %v3505 = vadd.f32 %v3081, %v3395
        %v3506 = vadd.f32 %v3084, %v3395
        %v3507 = vadd.f32 %v3089, %v3395
        %v3508 = vadd.f32 %v3092, %v3395
        %v3509 = vadd.f32 %v3097, %v3395
        %v3510 = vadd.f32 %v3100, %v3395
        %v3511 = vadd.f32 %v3105, %v3395
        %v3512 = vadd.f32 %v3108, %v3395
        %v3513 = vadd.f32 %v3113, %v3395
        %v3514 = vadd.f32 %v3116, %v3395
        %v3515 = vadd.f32 %v3121, %v3395
        %v3516 = vadd.f32 %v3124, %v3395
        %v3517 = vadd.f32 %v3129, %v3395
        %v3518 = vadd.f32 %v3132, %v3395
        %v3519 = vadd.f32 %v3137, %v3395
        %v3520 = vadd.f32 %v3140, %v3395
        %v3521 = vadd.f32 %v3145, %v3395
        %v3522 = vadd.f32 %v3148, %v3395
        %v3523 = vadd.f32 %v3153, %v3395
        %v3524 = vadd.f32 %v3156, %v3395
        %v3525 = vadd.f32 %v3161, %v3395
        %v3526 = vadd.f32 %v3164, %v3395
        %v3527 = vadd.f32 %v3169, %v3395
        %v3528 = vadd.f32 %v3172, %v3395
        %v3529 = vadd.f32 %v3177, %v3395
        %v3530 = vadd.f32 %v3180, %v3395
        %v3531 = vadd.f32 %v3185, %v3395
        %v3532 = vadd.f32 %v3188, %v3395
        %v3533 = vadd.f32 %v3193, %v3395
        %v3534 = vadd.f32 %v3196, %v3395
        %v3535 = vadd.f32 %v3201, %v3395
        %v3536 = vadd.f32 %v3204, %v3395
        %v3537 = vadd.f32 %v3209, %v3395
        %v3538 = vadd.f32 %v3212, %v3395
        %v3539 = vadd.f32 %v3217, %v3395
        %v3540 = vadd.f32 %v3220, %v3395
        %v3541 = vadd.f32 %v3225, %v3395
        %v3542 = vadd.f32 %v3228, %v3395
        %v3543 = vadd.f32 %v3233, %v3395
        %v3544 = vadd.f32 %v3236, %v3395
        %v3545 = vadd.f32 %v3241, %v3395
        %v3546 = vadd.f32 %v3244, %v3395
        %v3547 = vadd.f32 %v3249, %v3395
        %v3548 = vadd.f32 %v3252, %v3395
        %v3549 = vadd.f32 %v3257, %v3395
        %v3550 = vadd.f32 %v3260, %v3395
        %v3551 = vadd.f32 %v3265, %v3395
        %v3552 = vadd.f32 %v3268, %v3395
        %v3553 = vadd.f32 %v3273, %v3395
        %v3554 = vadd.f32 %v3276, %v3395
        %v3555 = vadd.f32 %v3281, %v3395
        %v3556 = vadd.f32 %v3284, %v3395
        %v3557 = vadd.f32 %v3289, %v3395
        %v3558 = vadd.f32 %v3292, %v3395
        %v3559 = vadd.f32 %v3297, %v3395
        %v3560 = vadd.f32 %v3300, %v3395
        %v3561 = vadd.f32 %v3305, %v3395
        %v3562 = vadd.f32 %v3308, %v3395
        %v3563 = vadd.f32 %v3313, %v3395
        %v3564 = vadd.f32 %v3316, %v3395
        %v3565 = vadd.f32 %v3321, %v3395
        %v3566 = vadd.f32 %v3324, %v3395
        %v3567 = vadd.f32 %v3329, %v3395
        %v3568 = vadd.f32 %v3332, %v3395
        %v3569 = vadd.f32 %v3337, %v3395
        %v3570 = vadd.f32 %v3340, %v3395
        %v3571 = vadd.f32 %v3345, %v3395
        %v3572 = vadd.f32 %v3348, %v3395
        %v3573 = vadd.f32 %v3353, %v3395
        %v3574 = vadd.f32 %v3356, %v3395
        %v3575 = vadd.f32 %v3361, %v3395
        %v3576 = vadd.f32 %v3364, %v3395
        %v3577 = vadd.f32 %v3369, %v3395
        %v3578 = vadd.f32 %v3372, %v3395
        %v3579 = vadd.f32 %v3377, %v3395
        %v3580 = vadd.f32 %v3380, %v3395
        %v3581 = vadd.f32 %v3385, %v3395
        %vm3582 = vcmask 39936
        %3583 = vst.msk [vmem:[%s254] sm:$0xff] %vm3582, %v3397
        %3584 = vst.msk [vmem:[%s254 + $0x8] sm:$0xff] %vm3582, %v3398
        %3585 = vst.msk [vmem:[%s254 + $0x10] sm:$0xff] %vm3582, %v3399
        %3586 = vst.msk [vmem:[%s254 + $0x18] sm:$0xff] %vm3582, %v3400
        %3587 = vst.msk [vmem:[%s254 + $0x20] sm:$0xff] %vm3582, %v3401
        %3588 = vst.msk [vmem:[%s254 + $0x28] sm:$0xff] %vm3582, %v3402
        %3589 = vst.msk [vmem:[%s254 + $0x30] sm:$0xff] %vm3582, %v3403
        %3590 = vst.msk [vmem:[%s254 + $0x38] sm:$0xff] %vm3582, %v3404
        %3591 = vst.msk [vmem:[%s254 + $0x40] sm:$0xff] %vm3582, %v3405
        %3592 = vst.msk [vmem:[%s254 + $0x48] sm:$0xff] %vm3582, %v3406
        %3593 = vst.msk [vmem:[%s254 + $0x50] sm:$0xff] %vm3582, %v3407
        %3594 = vst.msk [vmem:[%s254 + $0x58] sm:$0xff] %vm3582, %v3408
        %3595 = vst.msk [vmem:[%s254 + $0x60] sm:$0xff] %vm3582, %v3409
        %3596 = vst.msk [vmem:[%s254 + $0x68] sm:$0xff] %vm3582, %v3410
        %3597 = vst.msk [vmem:[%s254 + $0x70] sm:$0xff] %vm3582, %v3411
        %3598 = vst.msk [vmem:[%s254 + $0x78] sm:$0xff] %vm3582, %v3412
        %3599 = vst.msk [vmem:[%s254 + $0x80] sm:$0xff] %vm3582, %v3413
        %3600 = vst.msk [vmem:[%s254 + $0x88] sm:$0xff] %vm3582, %v3414
        %3601 = vst.msk [vmem:[%s254 + $0x90] sm:$0xff] %vm3582, %v3415
        %3602 = vst.msk [vmem:[%s254 + $0x98] sm:$0xff] %vm3582, %v3416
        %3603 = vst.msk [vmem:[%s254 + $0xa0] sm:$0xff] %vm3582, %v3417
        %3604 = vst.msk [vmem:[%s254 + $0xa8] sm:$0xff] %vm3582, %v3418
        %3605 = vst.msk [vmem:[%s254 + $0xb0] sm:$0xff] %vm3582, %v3419
        %3606 = vst.msk [vmem:[%s254 + $0xb8] sm:$0xff] %vm3582, %v3420
        %3607 = vst.msk [vmem:[%s254 + $0xc0] sm:$0xff] %vm3582, %v3421
        %3608 = vst.msk [vmem:[%s254 + $0xc8] sm:$0xff] %vm3582, %v3422
        %3609 = vst.msk [vmem:[%s254 + $0xd0] sm:$0xff] %vm3582, %v3423
        %3610 = vst.msk [vmem:[%s254 + $0xd8] sm:$0xff] %vm3582, %v3424
        %3611 = vst.msk [vmem:[%s254 + $0xe0] sm:$0xff] %vm3582, %v3425
        %3612 = vst.msk [vmem:[%s254 + $0xe8] sm:$0xff] %vm3582, %v3426
        %3613 = vst.msk [vmem:[%s254 + $0xf0] sm:$0xff] %vm3582, %v3427
        %3614 = vst.msk [vmem:[%s254 + $0xf8] sm:$0xff] %vm3582, %v3428
        %3615 = vst.msk [vmem:[%s254 + $0x100] sm:$0xff] %vm3582, %v3429
        %3616 = vst.msk [vmem:[%s254 + $0x108] sm:$0xff] %vm3582, %v3430
        %3617 = vst.msk [vmem:[%s254 + $0x110] sm:$0xff] %vm3582, %v3431
        %3618 = vst.msk [vmem:[%s254 + $0x118] sm:$0xff] %vm3582, %v3432
        %3619 = vst.msk [vmem:[%s254 + $0x120] sm:$0xff] %vm3582, %v3433
        %3620 = vst.msk [vmem:[%s254 + $0x128] sm:$0xff] %vm3582, %v3434
        %3621 = vst.msk [vmem:[%s254 + $0x130] sm:$0xff] %vm3582, %v3435
        %3622 = vst.msk [vmem:[%s254 + $0x138] sm:$0xff] %vm3582, %v3436
        %3623 = vst.msk [vmem:[%s254 + $0x140] sm:$0xff] %vm3582, %v3437
        %3624 = vst.msk [vmem:[%s254 + $0x148] sm:$0xff] %vm3582, %v3438
        %3625 = vst.msk [vmem:[%s254 + $0x150] sm:$0xff] %vm3582, %v3439
        %3626 = vst.msk [vmem:[%s254 + $0x158] sm:$0xff] %vm3582, %v3440
        %3627 = vst.msk [vmem:[%s254 + $0x160] sm:$0xff] %vm3582, %v3441
        %3628 = vst.msk [vmem:[%s254 + $0x168] sm:$0xff] %vm3582, %v3442
        %3629 = vst.msk [vmem:[%s254 + $0x170] sm:$0xff] %vm3582, %v3443
        %3630 = vst.msk [vmem:[%s254 + $0x178] sm:$0xff] %vm3582, %v3444
        %3631 = vst.msk [vmem:[%s254 + $0x180] sm:$0xff] %vm3582, %v3445
        %3632 = vst.msk [vmem:[%s254 + $0x188] sm:$0xff] %vm3582, %v3446
        %3633 = vst.msk [vmem:[%s254 + $0x190] sm:$0xff] %vm3582, %v3447
        %3634 = vst.msk [vmem:[%s254 + $0x198] sm:$0xff] %vm3582, %v3448
        %3635 = vst.msk [vmem:[%s254 + $0x1a0] sm:$0xff] %vm3582, %v3449
        %3636 = vst.msk [vmem:[%s254 + $0x1a8] sm:$0xff] %vm3582, %v3450
        %3637 = vst.msk [vmem:[%s254 + $0x1b0] sm:$0xff] %vm3582, %v3451
        %3638 = vst.msk [vmem:[%s254 + $0x1b8] sm:$0xff] %vm3582, %v3452
        %3639 = vst.msk [vmem:[%s254 + $0x1c0] sm:$0xff] %vm3582, %v3453
        %3640 = vst.msk [vmem:[%s254 + $0x1c8] sm:$0xff] %vm3582, %v3454
        %3641 = vst.msk [vmem:[%s254 + $0x1d0] sm:$0xff] %vm3582, %v3455
        %3642 = vst.msk [vmem:[%s254 + $0x1d8] sm:$0xff] %vm3582, %v3456
        %3643 = vst.msk [vmem:[%s254 + $0x1e0] sm:$0xff] %vm3582, %v3457
        %3644 = vst.msk [vmem:[%s254 + $0x1e8] sm:$0xff] %vm3582, %v3458
        %3645 = vst.msk [vmem:[%s254 + $0x1f0] sm:$0xff] %vm3582, %v3459
        %3646 = vst.msk [vmem:[%s254 + $0x1f8] sm:$0xff] %vm3582, %v3460
        %3647 = vst.msk [vmem:[%s254 + $0x200] sm:$0xff] %vm3582, %v3461
        %3648 = vst.msk [vmem:[%s254 + $0x208] sm:$0xff] %vm3582, %v3462
        %3649 = vst.msk [vmem:[%s254 + $0x210] sm:$0xff] %vm3582, %v3463
        %3650 = vst.msk [vmem:[%s254 + $0x218] sm:$0xff] %vm3582, %v3464
        %3651 = vst.msk [vmem:[%s254 + $0x220] sm:$0xff] %vm3582, %v3465
        %3652 = vst.msk [vmem:[%s254 + $0x228] sm:$0xff] %vm3582, %v3466
        %3653 = vst.msk [vmem:[%s254 + $0x230] sm:$0xff] %vm3582, %v3467
        %3654 = vst.msk [vmem:[%s254 + $0x238] sm:$0xff] %vm3582, %v3468
        %3655 = vst.msk [vmem:[%s254 + $0x240] sm:$0xff] %vm3582, %v3469
        %3656 = vst.msk [vmem:[%s254 + $0x248] sm:$0xff] %vm3582, %v3470
        %3657 = vst.msk [vmem:[%s254 + $0x250] sm:$0xff] %vm3582, %v3471
        %3658 = vst.msk [vmem:[%s254 + $0x258] sm:$0xff] %vm3582, %v3472
        %3659 = vst.msk [vmem:[%s254 + $0x260] sm:$0xff] %vm3582, %v3473
        %3660 = vst.msk [vmem:[%s254 + $0x268] sm:$0xff] %vm3582, %v3474
        %3661 = vst.msk [vmem:[%s254 + $0x270] sm:$0xff] %vm3582, %v3475
        %3662 = vst.msk [vmem:[%s254 + $0x278] sm:$0xff] %vm3582, %v3476
        %3663 = vst.msk [vmem:[%s254 + $0x280] sm:$0xff] %vm3582, %v3477
        %3664 = vst.msk [vmem:[%s254 + $0x288] sm:$0xff] %vm3582, %v3478
        %3665 = vst.msk [vmem:[%s254 + $0x290] sm:$0xff] %vm3582, %v3479
        %3666 = vst.msk [vmem:[%s254 + $0x298] sm:$0xff] %vm3582, %v3480
        %3667 = vst.msk [vmem:[%s254 + $0x2a0] sm:$0xff] %vm3582, %v3481
        %3668 = vst.msk [vmem:[%s254 + $0x2a8] sm:$0xff] %vm3582, %v3482
        %3669 = vst.msk [vmem:[%s254 + $0x2b0] sm:$0xff] %vm3582, %v3483
        %3670 = vst.msk [vmem:[%s254 + $0x2b8] sm:$0xff] %vm3582, %v3484
        %3671 = vst.msk [vmem:[%s254 + $0x2c0] sm:$0xff] %vm3582, %v3485
        %3672 = vst.msk [vmem:[%s254 + $0x2c8] sm:$0xff] %vm3582, %v3486
        %3673 = vst.msk [vmem:[%s254 + $0x2d0] sm:$0xff] %vm3582, %v3487
        %3674 = vst.msk [vmem:[%s254 + $0x2d8] sm:$0xff] %vm3582, %v3488
        %3675 = vst.msk [vmem:[%s254 + $0x2e0] sm:$0xff] %vm3582, %v3489
        %3676 = vst.msk [vmem:[%s254 + $0x2e8] sm:$0xff] %vm3582, %v3490
        %3677 = vst.msk [vmem:[%s254 + $0x2f0] sm:$0xff] %vm3582, %v3491
        %3678 = vst.msk [vmem:[%s254 + $0x2f8] sm:$0xff] %vm3582, %v3492
        %3679 = vst.msk [vmem:[%s254 + $0x300] sm:$0xff] %vm3582, %v3493
        %3680 = vst.msk [vmem:[%s254 + $0x308] sm:$0xff] %vm3582, %v3494
        %3681 = vst.msk [vmem:[%s254 + $0x310] sm:$0xff] %vm3582, %v3495
        %3682 = vst.msk [vmem:[%s254 + $0x318] sm:$0xff] %vm3582, %v3496
        %3683 = vst.msk [vmem:[%s254 + $0x320] sm:$0xff] %vm3582, %v3497
        %3684 = vst.msk [vmem:[%s254 + $0x328] sm:$0xff] %vm3582, %v3498
        %3685 = vst.msk [vmem:[%s254 + $0x330] sm:$0xff] %vm3582, %v3499
        %3686 = vst.msk [vmem:[%s254 + $0x338] sm:$0xff] %vm3582, %v3500
        %3687 = vst.msk [vmem:[%s254 + $0x340] sm:$0xff] %vm3582, %v3501
        %3688 = vst.msk [vmem:[%s254 + $0x348] sm:$0xff] %vm3582, %v3502
        %3689 = vst.msk [vmem:[%s254 + $0x350] sm:$0xff] %vm3582, %v3503
        %3690 = vst.msk [vmem:[%s254 + $0x358] sm:$0xff] %vm3582, %v3504
        %3691 = vst.msk [vmem:[%s254 + $0x360] sm:$0xff] %vm3582, %v3505
        %3692 = vst.msk [vmem:[%s254 + $0x368] sm:$0xff] %vm3582, %v3506
        %3693 = vst.msk [vmem:[%s254 + $0x370] sm:$0xff] %vm3582, %v3507
        %3694 = vst.msk [vmem:[%s254 + $0x378] sm:$0xff] %vm3582, %v3508
        %3695 = vst.msk [vmem:[%s254 + $0x380] sm:$0xff] %vm3582, %v3509
        %3696 = vst.msk [vmem:[%s254 + $0x388] sm:$0xff] %vm3582, %v3510
        %3697 = vst.msk [vmem:[%s254 + $0x390] sm:$0xff] %vm3582, %v3511
        %3698 = vst.msk [vmem:[%s254 + $0x398] sm:$0xff] %vm3582, %v3512
        %3699 = vst.msk [vmem:[%s254 + $0x3a0] sm:$0xff] %vm3582, %v3513
        %3700 = vst.msk [vmem:[%s254 + $0x3a8] sm:$0xff] %vm3582, %v3514
        %3701 = vst.msk [vmem:[%s254 + $0x3b0] sm:$0xff] %vm3582, %v3515
        %3702 = vst.msk [vmem:[%s254 + $0x3b8] sm:$0xff] %vm3582, %v3516
        %3703 = vst.msk [vmem:[%s254 + $0x3c0] sm:$0xff] %vm3582, %v3517
        %3704 = vst.msk [vmem:[%s254 + $0x3c8] sm:$0xff] %vm3582, %v3518
        %3705 = vst.msk [vmem:[%s254 + $0x3d0] sm:$0xff] %vm3582, %v3519
        %3706 = vst.msk [vmem:[%s254 + $0x3d8] sm:$0xff] %vm3582, %v3520
        %3707 = vst.msk [vmem:[%s254 + $0x3e0] sm:$0xff] %vm3582, %v3521
        %3708 = vst.msk [vmem:[%s254 + $0x3e8] sm:$0xff] %vm3582, %v3522
        %3709 = vst.msk [vmem:[%s254 + $0x3f0] sm:$0xff] %vm3582, %v3523
        %3710 = vst.msk [vmem:[%s254 + $0x3f8] sm:$0xff] %vm3582, %v3524
        %3711 = vst.msk [vmem:[%s254 + $0x400] sm:$0xff] %vm3582, %v3525
        %3712 = vst.msk [vmem:[%s254 + $0x408] sm:$0xff] %vm3582, %v3526
        %3713 = vst.msk [vmem:[%s254 + $0x410] sm:$0xff] %vm3582, %v3527
        %3714 = vst.msk [vmem:[%s254 + $0x418] sm:$0xff] %vm3582, %v3528
        %3715 = vst.msk [vmem:[%s254 + $0x420] sm:$0xff] %vm3582, %v3529
        %3716 = vst.msk [vmem:[%s254 + $0x428] sm:$0xff] %vm3582, %v3530
        %3717 = vst.msk [vmem:[%s254 + $0x430] sm:$0xff] %vm3582, %v3531
        %3718 = vst.msk [vmem:[%s254 + $0x438] sm:$0xff] %vm3582, %v3532
        %3719 = vst.msk [vmem:[%s254 + $0x440] sm:$0xff] %vm3582, %v3533
        %3720 = vst.msk [vmem:[%s254 + $0x448] sm:$0xff] %vm3582, %v3534
        %3721 = vst.msk [vmem:[%s254 + $0x450] sm:$0xff] %vm3582, %v3535
        %3722 = vst.msk [vmem:[%s254 + $0x458] sm:$0xff] %vm3582, %v3536
        %3723 = vst.msk [vmem:[%s254 + $0x460] sm:$0xff] %vm3582, %v3537
        %3724 = vst.msk [vmem:[%s254 + $0x468] sm:$0xff] %vm3582, %v3538
        %3725 = vst.msk [vmem:[%s254 + $0x470] sm:$0xff] %vm3582, %v3539
        %3726 = vst.msk [vmem:[%s254 + $0x478] sm:$0xff] %vm3582, %v3540
        %3727 = vst.msk [vmem:[%s254 + $0x480] sm:$0xff] %vm3582, %v3541
        %3728 = vst.msk [vmem:[%s254 + $0x488] sm:$0xff] %vm3582, %v3542
        %3729 = vst.msk [vmem:[%s254 + $0x490] sm:$0xff] %vm3582, %v3543
        %3730 = vst.msk [vmem:[%s254 + $0x498] sm:$0xff] %vm3582, %v3544
        %3731 = vst.msk [vmem:[%s254 + $0x4a0] sm:$0xff] %vm3582, %v3545
        %3732 = vst.msk [vmem:[%s254 + $0x4a8] sm:$0xff] %vm3582, %v3546
        %3733 = vst.msk [vmem:[%s254 + $0x4b0] sm:$0xff] %vm3582, %v3547
        %3734 = vst.msk [vmem:[%s254 + $0x4b8] sm:$0xff] %vm3582, %v3548
        %3735 = vst.msk [vmem:[%s254 + $0x4c0] sm:$0xff] %vm3582, %v3549
        %3736 = vst.msk [vmem:[%s254 + $0x4c8] sm:$0xff] %vm3582, %v3550
        %3737 = vst.msk [vmem:[%s254 + $0x4d0] sm:$0xff] %vm3582, %v3551
        %3738 = vst.msk [vmem:[%s254 + $0x4d8] sm:$0xff] %vm3582, %v3552
        %3739 = vst.msk [vmem:[%s254 + $0x4e0] sm:$0xff] %vm3582, %v3553
        %3740 = vst.msk [vmem:[%s254 + $0x4e8] sm:$0xff] %vm3582, %v3554
        %3741 = vst.msk [vmem:[%s254 + $0x4f0] sm:$0xff] %vm3582, %v3555
        %3742 = vst.msk [vmem:[%s254 + $0x4f8] sm:$0xff] %vm3582, %v3556
        %3743 = vst.msk [vmem:[%s254 + $0x500] sm:$0xff] %vm3582, %v3557
        %3744 = vst.msk [vmem:[%s254 + $0x508] sm:$0xff] %vm3582, %v3558
        %3745 = vst.msk [vmem:[%s254 + $0x510] sm:$0xff] %vm3582, %v3559
        %3746 = vst.msk [vmem:[%s254 + $0x518] sm:$0xff] %vm3582, %v3560
        %3747 = vst.msk [vmem:[%s254 + $0x520] sm:$0xff] %vm3582, %v3561
        %3748 = vst.msk [vmem:[%s254 + $0x528] sm:$0xff] %vm3582, %v3562
        %3749 = vst.msk [vmem:[%s254 + $0x530] sm:$0xff] %vm3582, %v3563
        %3750 = vst.msk [vmem:[%s254 + $0x538] sm:$0xff] %vm3582, %v3564
        %3751 = vst.msk [vmem:[%s254 + $0x540] sm:$0xff] %vm3582, %v3565
        %3752 = vst.msk [vmem:[%s254 + $0x548] sm:$0xff] %vm3582, %v3566
        %3753 = vst.msk [vmem:[%s254 + $0x550] sm:$0xff] %vm3582, %v3567
        %3754 = vst.msk [vmem:[%s254 + $0x558] sm:$0xff] %vm3582, %v3568
        %3755 = vst.msk [vmem:[%s254 + $0x560] sm:$0xff] %vm3582, %v3569
        %3756 = vst.msk [vmem:[%s254 + $0x568] sm:$0xff] %vm3582, %v3570
        %3757 = vst.msk [vmem:[%s254 + $0x570] sm:$0xff] %vm3582, %v3571
        %3758 = vst.msk [vmem:[%s254 + $0x578] sm:$0xff] %vm3582, %v3572
        %3759 = vst.msk [vmem:[%s254 + $0x580] sm:$0xff] %vm3582, %v3573
        %3760 = vst.msk [vmem:[%s254 + $0x588] sm:$0xff] %vm3582, %v3574
        %3761 = vst.msk [vmem:[%s254 + $0x590] sm:$0xff] %vm3582, %v3575
        %3762 = vst.msk [vmem:[%s254 + $0x598] sm:$0xff] %vm3582, %v3576
        %3763 = vst.msk [vmem:[%s254 + $0x5a0] sm:$0xff] %vm3582, %v3577
        %3764 = vst.msk [vmem:[%s254 + $0x5a8] sm:$0xff] %vm3582, %v3578
        %3765 = vst.msk [vmem:[%s254 + $0x5b0] sm:$0xff] %vm3582, %v3579
        %3766 = vst.msk [vmem:[%s254 + $0x5b8] sm:$0xff] %vm3582, %v3580
        %3767 = vst.msk [vmem:[%s254 + $0x5c0] sm:$0xff] %vm3582, %v3581
        %s3768 = sand.u32 %s139, 1
        %s3769 = sand.u32 %s139, 1
        %s3770 = smul.addr %s3769, 1480
        %s3771 = scalar_lea.vmem [#allocation2], %s3770
        // Predicated region
        $region41: #{unpillar_forward.1} parent=39 // pred_check
          %p3772 = pneg %p149
        $region42: #{unpillar_forward.1} parent=39 // pred_check_branch
          %3774 = sbr.rel (%p3772) target = $region44
        $region43: #{unpillar_forward.1} parent=39 // pred_region
          %s3775 = smul.u32 185, %s16
          %s3776 = ssub.s32 738, %s3775
          %p3777 = scmp.lt.s32.totalorder %s3776, 185
          %s3778 = scalar_select %p3777, %s3776, 185
          %s3779 = smul.u32 128, %s3778
          %p3780 = scmp.ne.s32.totalorder 0, %s3779
          %s3781 = smul.addr %s3775, 8
          %s3782 = scalar_lea.vmem %s5, %s3781
          // Predicated region
          $region45: #{unpillar_forward.1} parent=43 // pred_check
            %p3783 = pneg %p3780
          $region46: #{unpillar_forward.1} parent=43 // pred_check_branch
            %3785 = sbr.rel (%p3783) target = $region48
          $region47: #{unpillar_forward.1} parent=43 // pred_region
            // Predicated region
            $region49: #{unpillar_forward.1} parent=47 // pred_check
              _
            $region50: #{unpillar_forward.1} parent=47 // pred_check_branch
              %3787 = sbr.rel (0) target = $region52
            $region51: #{unpillar_forward.1} parent=47 // pred_region
              // Predicated region
              $region71: #{unpillar_forward.1} parent=51 // pred_check
                _
              $region72: #{unpillar_forward.1} parent=51 // pred_check_branch
                %3963 = sbr.rel (0) target = $region74
              $region73: #{unpillar_forward.1} parent=51 // pred_region
                %s3964 = sshrl.u32 %s3778, 6
                // While loop
                $region75: #{unpillar_forward.1} parent=73 // loop_pre_header
                  _
                $region76: #{unpillar_forward.1} parent=73 // loop_header
                  %s3966 = sphi 0, %s3968
                  %p3967 = scmp.ge.s32.totalorder %s3966, %s3964
                  %s3971 = sphi 0, %s4104
                  %s3972 = sphi %s3771, %s4107
                  %s3973 = sphi %s3782, %s4108
                $region77: #{unpillar_forward.1} parent=73 // loop_header_branch
                  %3970 = sbr.rel (%p3967) target = $region81
                $region78: #{unpillar_forward.1} parent=73 // loop_body
                  %v3974 = vld [vmem:[%s3972] sm:$0xff]
                  %3975 = vst [vmem:[%s3973] sm:$0xff] %v3974
                  %v3976 = vld [vmem:[%s3972 + $0x8] sm:$0xff]
                  %3977 = vst [vmem:[%s3973 + $0x8] sm:$0xff] %v3976
                  %v3978 = vld [vmem:[%s3972 + $0x10] sm:$0xff]
                  %3979 = vst [vmem:[%s3973 + $0x10] sm:$0xff] %v3978
                  %v3980 = vld [vmem:[%s3972 + $0x18] sm:$0xff]
                  %3981 = vst [vmem:[%s3973 + $0x18] sm:$0xff] %v3980
                  %v3982 = vld [vmem:[%s3972 + $0x20] sm:$0xff]
                  %3983 = vst [vmem:[%s3973 + $0x20] sm:$0xff] %v3982
                  %v3984 = vld [vmem:[%s3972 + $0x28] sm:$0xff]
                  %3985 = vst [vmem:[%s3973 + $0x28] sm:$0xff] %v3984
                  %v3986 = vld [vmem:[%s3972 + $0x30] sm:$0xff]
                  %3987 = vst [vmem:[%s3973 + $0x30] sm:$0xff] %v3986
                  %v3988 = vld [vmem:[%s3972 + $0x38] sm:$0xff]
                  %3989 = vst [vmem:[%s3973 + $0x38] sm:$0xff] %v3988
                  %v3990 = vld [vmem:[%s3972 + $0x40] sm:$0xff]
                  %3991 = vst [vmem:[%s3973 + $0x40] sm:$0xff] %v3990
                  %v3992 = vld [vmem:[%s3972 + $0x48] sm:$0xff]
                  %3993 = vst [vmem:[%s3973 + $0x48] sm:$0xff] %v3992
                  %v3994 = vld [vmem:[%s3972 + $0x50] sm:$0xff]
                  %3995 = vst [vmem:[%s3973 + $0x50] sm:$0xff] %v3994
                  %v3996 = vld [vmem:[%s3972 + $0x58] sm:$0xff]
                  %3997 = vst [vmem:[%s3973 + $0x58] sm:$0xff] %v3996
                  %v3998 = vld [vmem:[%s3972 + $0x60] sm:$0xff]
                  %3999 = vst [vmem:[%s3973 + $0x60] sm:$0xff] %v3998
                  %v4000 = vld [vmem:[%s3972 + $0x68] sm:$0xff]
                  %4001 = vst [vmem:[%s3973 + $0x68] sm:$0xff] %v4000
                  %v4002 = vld [vmem:[%s3972 + $0x70] sm:$0xff]
                  %4003 = vst [vmem:[%s3973 + $0x70] sm:$0xff] %v4002
                  %v4004 = vld [vmem:[%s3972 + $0x78] sm:$0xff]
                  %4005 = vst [vmem:[%s3973 + $0x78] sm:$0xff] %v4004
                  %v4006 = vld [vmem:[%s3972 + $0x80] sm:$0xff]
                  %4007 = vst [vmem:[%s3973 + $0x80] sm:$0xff] %v4006
                  %v4008 = vld [vmem:[%s3972 + $0x88] sm:$0xff]
                  %4009 = vst [vmem:[%s3973 + $0x88] sm:$0xff] %v4008
                  %v4010 = vld [vmem:[%s3972 + $0x90] sm:$0xff]
                  %4011 = vst [vmem:[%s3973 + $0x90] sm:$0xff] %v4010
                  %v4012 = vld [vmem:[%s3972 + $0x98] sm:$0xff]
                  %4013 = vst [vmem:[%s3973 + $0x98] sm:$0xff] %v4012
                  %v4014 = vld [vmem:[%s3972 + $0xa0] sm:$0xff]
                  %4015 = vst [vmem:[%s3973 + $0xa0] sm:$0xff] %v4014
                  %v4016 = vld [vmem:[%s3972 + $0xa8] sm:$0xff]
                  %4017 = vst [vmem:[%s3973 + $0xa8] sm:$0xff] %v4016
                  %v4018 = vld [vmem:[%s3972 + $0xb0] sm:$0xff]
                  %4019 = vst [vmem:[%s3973 + $0xb0] sm:$0xff] %v4018
                  %v4020 = vld [vmem:[%s3972 + $0xb8] sm:$0xff]
                  %4021 = vst [vmem:[%s3973 + $0xb8] sm:$0xff] %v4020
                  %v4022 = vld [vmem:[%s3972 + $0xc0] sm:$0xff]
                  %4023 = vst [vmem:[%s3973 + $0xc0] sm:$0xff] %v4022
                  %v4024 = vld [vmem:[%s3972 + $0xc8] sm:$0xff]
                  %4025 = vst [vmem:[%s3973 + $0xc8] sm:$0xff] %v4024
                  %v4026 = vld [vmem:[%s3972 + $0xd0] sm:$0xff]
                  %4027 = vst [vmem:[%s3973 + $0xd0] sm:$0xff] %v4026
                  %v4028 = vld [vmem:[%s3972 + $0xd8] sm:$0xff]
                  %4029 = vst [vmem:[%s3973 + $0xd8] sm:$0xff] %v4028
                  %v4030 = vld [vmem:[%s3972 + $0xe0] sm:$0xff]
                  %4031 = vst [vmem:[%s3973 + $0xe0] sm:$0xff] %v4030
                  %v4032 = vld [vmem:[%s3972 + $0xe8] sm:$0xff]
                  %4033 = vst [vmem:[%s3973 + $0xe8] sm:$0xff] %v4032
                  %v4034 = vld [vmem:[%s3972 + $0xf0] sm:$0xff]
                  %4035 = vst [vmem:[%s3973 + $0xf0] sm:$0xff] %v4034
                  %v4036 = vld [vmem:[%s3972 + $0xf8] sm:$0xff]
                  %4037 = vst [vmem:[%s3973 + $0xf8] sm:$0xff] %v4036
                  %v4038 = vld [vmem:[%s3972 + $0x100] sm:$0xff]
                  %4039 = vst [vmem:[%s3973 + $0x100] sm:$0xff] %v4038
                  %v4040 = vld [vmem:[%s3972 + $0x108] sm:$0xff]
                  %4041 = vst [vmem:[%s3973 + $0x108] sm:$0xff] %v4040
                  %v4042 = vld [vmem:[%s3972 + $0x110] sm:$0xff]
                  %4043 = vst [vmem:[%s3973 + $0x110] sm:$0xff] %v4042
                  %v4044 = vld [vmem:[%s3972 + $0x118] sm:$0xff]
                  %4045 = vst [vmem:[%s3973 + $0x118] sm:$0xff] %v4044
                  %v4046 = vld [vmem:[%s3972 + $0x120] sm:$0xff]
                  %4047 = vst [vmem:[%s3973 + $0x120] sm:$0xff] %v4046
                  %v4048 = vld [vmem:[%s3972 + $0x128] sm:$0xff]
                  %4049 = vst [vmem:[%s3973 + $0x128] sm:$0xff] %v4048
                  %v4050 = vld [vmem:[%s3972 + $0x130] sm:$0xff]
                  %4051 = vst [vmem:[%s3973 + $0x130] sm:$0xff] %v4050
                  %v4052 = vld [vmem:[%s3972 + $0x138] sm:$0xff]
                  %4053 = vst [vmem:[%s3973 + $0x138] sm:$0xff] %v4052
                  %v4054 = vld [vmem:[%s3972 + $0x140] sm:$0xff]
                  %4055 = vst [vmem:[%s3973 + $0x140] sm:$0xff] %v4054
                  %v4056 = vld [vmem:[%s3972 + $0x148] sm:$0xff]
                  %4057 = vst [vmem:[%s3973 + $0x148] sm:$0xff] %v4056
                  %v4058 = vld [vmem:[%s3972 + $0x150] sm:$0xff]
                  %4059 = vst [vmem:[%s3973 + $0x150] sm:$0xff] %v4058
                  %v4060 = vld [vmem:[%s3972 + $0x158] sm:$0xff]
                  %4061 = vst [vmem:[%s3973 + $0x158] sm:$0xff] %v4060
                  %v4062 = vld [vmem:[%s3972 + $0x160] sm:$0xff]
                  %4063 = vst [vmem:[%s3973 + $0x160] sm:$0xff] %v4062
                  %v4064 = vld [vmem:[%s3972 + $0x168] sm:$0xff]
                  %4065 = vst [vmem:[%s3973 + $0x168] sm:$0xff] %v4064
                  %v4066 = vld [vmem:[%s3972 + $0x170] sm:$0xff]
                  %4067 = vst [vmem:[%s3973 + $0x170] sm:$0xff] %v4066
                  %v4068 = vld [vmem:[%s3972 + $0x178] sm:$0xff]
                  %4069 = vst [vmem:[%s3973 + $0x178] sm:$0xff] %v4068
                  %v4070 = vld [vmem:[%s3972 + $0x180] sm:$0xff]
                  %4071 = vst [vmem:[%s3973 + $0x180] sm:$0xff] %v4070
                  %v4072 = vld [vmem:[%s3972 + $0x188] sm:$0xff]
                  %4073 = vst [vmem:[%s3973 + $0x188] sm:$0xff] %v4072
                  %v4074 = vld [vmem:[%s3972 + $0x190] sm:$0xff]
                  %4075 = vst [vmem:[%s3973 + $0x190] sm:$0xff] %v4074
                  %v4076 = vld [vmem:[%s3972 + $0x198] sm:$0xff]
                  %4077 = vst [vmem:[%s3973 + $0x198] sm:$0xff] %v4076
                  %v4078 = vld [vmem:[%s3972 + $0x1a0] sm:$0xff]
                  %4079 = vst [vmem:[%s3973 + $0x1a0] sm:$0xff] %v4078
                  %v4080 = vld [vmem:[%s3972 + $0x1a8] sm:$0xff]
                  %4081 = vst [vmem:[%s3973 + $0x1a8] sm:$0xff] %v4080
                  %v4082 = vld [vmem:[%s3972 + $0x1b0] sm:$0xff]
                  %4083 = vst [vmem:[%s3973 + $0x1b0] sm:$0xff] %v4082
                  %v4084 = vld [vmem:[%s3972 + $0x1b8] sm:$0xff]
                  %4085 = vst [vmem:[%s3973 + $0x1b8] sm:$0xff] %v4084
                  %v4086 = vld [vmem:[%s3972 + $0x1c0] sm:$0xff]
                  %4087 = vst [vmem:[%s3973 + $0x1c0] sm:$0xff] %v4086
                  %v4088 = vld [vmem:[%s3972 + $0x1c8] sm:$0xff]
                  %4089 = vst [vmem:[%s3973 + $0x1c8] sm:$0xff] %v4088
                  %v4090 = vld [vmem:[%s3972 + $0x1d0] sm:$0xff]
                  %4091 = vst [vmem:[%s3973 + $0x1d0] sm:$0xff] %v4090
                  %v4092 = vld [vmem:[%s3972 + $0x1d8] sm:$0xff]
                  %4093 = vst [vmem:[%s3973 + $0x1d8] sm:$0xff] %v4092
                  %v4094 = vld [vmem:[%s3972 + $0x1e0] sm:$0xff]
                  %4095 = vst [vmem:[%s3973 + $0x1e0] sm:$0xff] %v4094
                  %v4096 = vld [vmem:[%s3972 + $0x1e8] sm:$0xff]
                  %4097 = vst [vmem:[%s3973 + $0x1e8] sm:$0xff] %v4096
                  %v4098 = vld [vmem:[%s3972 + $0x1f0] sm:$0xff]
                  %4099 = vst [vmem:[%s3973 + $0x1f0] sm:$0xff] %v4098
                  %v4100 = vld [vmem:[%s3972 + $0x1f8] sm:$0xff]
                  %4101 = vst [vmem:[%s3973 + $0x1f8] sm:$0xff] %v4100
                  %s4102 = sadd.s32 1, %s3971
                  %p4103 = scmp.ge.s32.totalorder %s4102, %s3964
                  %s4104 = scalar_select %p4103, 0, %s4102
                  %s4105 = smul.u32 %s4104, 512
                  %s4106 = smul.u32 %s4104, 512
                  %s4107 = scalar_lea.vmem %s3771, %s4105 [#allocation2]
                  %s4108 = scalar_lea.vmem %s3782, %s4106
                $region79: #{unpillar_forward.1} parent=73 // loop_footer
                  %s3968 = sadd.s32 %s3966, 1
                $region80: #{unpillar_forward.1} parent=73 // loop_footer_branch
                  %3965 = sbr.rel target = $region76
                $region81: #{unpillar_forward.1} parent=73 // loop_exit
                  _
                %s4109 = sshrl.u32 %s3778, 6
                %s4110 = sand.u32 %s3778, 63
                %s4111 = smul.u32 %s4109, 64
                %s4112 = smul.u32 8, %s4111
                %s4113 = scalar_lea.vmem %s3771, %s4112 [#allocation2]
                %s4114 = smul.u32 8, %s4111
                %s4115 = scalar_lea.vmem %s3782, %s4114
                // While loop
                $region82: #{unpillar_forward.1} parent=73 // loop_pre_header
                  _
                $region83: #{unpillar_forward.1} parent=73 // loop_header
                  %s4117 = sphi 0, %s4119
                  %p4118 = scmp.ge.s32.totalorder %s4117, %s4110
                  %s4122 = sphi 0, %s4129
                  %s4123 = sphi %s4113, %s4132
                  %s4124 = sphi %s4115, %s4133
                $region84: #{unpillar_forward.1} parent=73 // loop_header_branch
                  %4121 = sbr.rel (%p4118) target = $region88
                $region85: #{unpillar_forward.1} parent=73 // loop_body
                  %v4125 = vld [vmem:[%s4123] sm:$0xff]
                  %4126 = vst [vmem:[%s4124] sm:$0xff] %v4125
                  %s4127 = sadd.s32 1, %s4122
                  %p4128 = scmp.ge.s32.totalorder %s4127, %s4110
                  %s4129 = scalar_select %p4128, 0, %s4127
                  %s4130 = smul.u32 %s4129, 8
                  %s4131 = smul.u32 %s4129, 8
                  %s4132 = scalar_lea.vmem %s4113, %s4130 [#allocation2]
                  %s4133 = scalar_lea.vmem %s4115, %s4131
                $region86: #{unpillar_forward.1} parent=73 // loop_footer
                  %s4119 = sadd.s32 %s4117, 1
                $region87: #{unpillar_forward.1} parent=73 // loop_footer_branch
                  %4116 = sbr.rel target = $region83
                $region88: #{unpillar_forward.1} parent=73 // loop_exit
                  _
              $region74: #{unpillar_forward.1} parent=51 // pred_fallthru
                _
              // Predicated region
              $region89: #{unpillar_forward.1} parent=51 // pred_check
                _
              $region90: #{unpillar_forward.1} parent=51 // pred_check_branch
                %4135 = sbr.rel target = $region92
              $region91: #{unpillar_forward.1} parent=51 // pred_region
                _
              $region92: #{unpillar_forward.1} parent=51 // pred_fallthru
                _
            $region52: #{unpillar_forward.1} parent=47 // pred_fallthru
              _
            // Predicated region
            $region53: #{unpillar_forward.1} parent=47 // pred_check
              _
            $region54: #{unpillar_forward.1} parent=47 // pred_check_branch
              %3789 = sbr.rel target = $region56
            $region55: #{unpillar_forward.1} parent=47 // pred_region
              %s3791 = ssub.s32 256, 1
              %s3792 = sshrl.u32 %s3778, 6
              // While loop
              $region57: #{unpillar_forward.1} parent=55 // loop_pre_header
                _
              $region58: #{unpillar_forward.1} parent=55 // loop_header
                %s3794 = sphi 0, %s3796
                %p3795 = scmp.ge.s32.totalorder %s3794, %s3792
                %s3799 = sphi 0, %s3932
                %s3800 = sphi %s3771, %s3935
                %s3801 = sphi %s3782, %s3936
              $region59: #{unpillar_forward.1} parent=55 // loop_header_branch
                %3798 = sbr.rel (%p3795) target = $region63
              $region60: #{unpillar_forward.1} parent=55 // loop_body
                %v3802 = vld [vmem:[%s3800] sm:%s3791]
                %3803 = vst [vmem:[%s3801] sm:%s3791] %v3802
                %v3804 = vld [vmem:[%s3800 + $0x8] sm:%s3791]
                %3805 = vst [vmem:[%s3801 + $0x8] sm:%s3791] %v3804
                %v3806 = vld [vmem:[%s3800 + $0x10] sm:%s3791]
                %3807 = vst [vmem:[%s3801 + $0x10] sm:%s3791] %v3806
                %v3808 = vld [vmem:[%s3800 + $0x18] sm:%s3791]
                %3809 = vst [vmem:[%s3801 + $0x18] sm:%s3791] %v3808
                %v3810 = vld [vmem:[%s3800 + $0x20] sm:%s3791]
                %3811 = vst [vmem:[%s3801 + $0x20] sm:%s3791] %v3810
                %v3812 = vld [vmem:[%s3800 + $0x28] sm:%s3791]
                %3813 = vst [vmem:[%s3801 + $0x28] sm:%s3791] %v3812
                %v3814 = vld [vmem:[%s3800 + $0x30] sm:%s3791]
                %3815 = vst [vmem:[%s3801 + $0x30] sm:%s3791] %v3814
                %v3816 = vld [vmem:[%s3800 + $0x38] sm:%s3791]
                %3817 = vst [vmem:[%s3801 + $0x38] sm:%s3791] %v3816
                %v3818 = vld [vmem:[%s3800 + $0x40] sm:%s3791]
                %3819 = vst [vmem:[%s3801 + $0x40] sm:%s3791] %v3818
                %v3820 = vld [vmem:[%s3800 + $0x48] sm:%s3791]
                %3821 = vst [vmem:[%s3801 + $0x48] sm:%s3791] %v3820
                %v3822 = vld [vmem:[%s3800 + $0x50] sm:%s3791]
                %3823 = vst [vmem:[%s3801 + $0x50] sm:%s3791] %v3822
                %v3824 = vld [vmem:[%s3800 + $0x58] sm:%s3791]
                %3825 = vst [vmem:[%s3801 + $0x58] sm:%s3791] %v3824
                %v3826 = vld [vmem:[%s3800 + $0x60] sm:%s3791]
                %3827 = vst [vmem:[%s3801 + $0x60] sm:%s3791] %v3826
                %v3828 = vld [vmem:[%s3800 + $0x68] sm:%s3791]
                %3829 = vst [vmem:[%s3801 + $0x68] sm:%s3791] %v3828
                %v3830 = vld [vmem:[%s3800 + $0x70] sm:%s3791]
                %3831 = vst [vmem:[%s3801 + $0x70] sm:%s3791] %v3830
                %v3832 = vld [vmem:[%s3800 + $0x78] sm:%s3791]
                %3833 = vst [vmem:[%s3801 + $0x78] sm:%s3791] %v3832
                %v3834 = vld [vmem:[%s3800 + $0x80] sm:%s3791]
                %3835 = vst [vmem:[%s3801 + $0x80] sm:%s3791] %v3834
                %v3836 = vld [vmem:[%s3800 + $0x88] sm:%s3791]
                %3837 = vst [vmem:[%s3801 + $0x88] sm:%s3791] %v3836
                %v3838 = vld [vmem:[%s3800 + $0x90] sm:%s3791]
                %3839 = vst [vmem:[%s3801 + $0x90] sm:%s3791] %v3838
                %v3840 = vld [vmem:[%s3800 + $0x98] sm:%s3791]
                %3841 = vst [vmem:[%s3801 + $0x98] sm:%s3791] %v3840
                %v3842 = vld [vmem:[%s3800 + $0xa0] sm:%s3791]
                %3843 = vst [vmem:[%s3801 + $0xa0] sm:%s3791] %v3842
                %v3844 = vld [vmem:[%s3800 + $0xa8] sm:%s3791]
                %3845 = vst [vmem:[%s3801 + $0xa8] sm:%s3791] %v3844
                %v3846 = vld [vmem:[%s3800 + $0xb0] sm:%s3791]
                %3847 = vst [vmem:[%s3801 + $0xb0] sm:%s3791] %v3846
                %v3848 = vld [vmem:[%s3800 + $0xb8] sm:%s3791]
                %3849 = vst [vmem:[%s3801 + $0xb8] sm:%s3791] %v3848
                %v3850 = vld [vmem:[%s3800 + $0xc0] sm:%s3791]
                %3851 = vst [vmem:[%s3801 + $0xc0] sm:%s3791] %v3850
                %v3852 = vld [vmem:[%s3800 + $0xc8] sm:%s3791]
                %3853 = vst [vmem:[%s3801 + $0xc8] sm:%s3791] %v3852
                %v3854 = vld [vmem:[%s3800 + $0xd0] sm:%s3791]
                %3855 = vst [vmem:[%s3801 + $0xd0] sm:%s3791] %v3854
                %v3856 = vld [vmem:[%s3800 + $0xd8] sm:%s3791]
                %3857 = vst [vmem:[%s3801 + $0xd8] sm:%s3791] %v3856
                %v3858 = vld [vmem:[%s3800 + $0xe0] sm:%s3791]
                %3859 = vst [vmem:[%s3801 + $0xe0] sm:%s3791] %v3858
                %v3860 = vld [vmem:[%s3800 + $0xe8] sm:%s3791]
                %3861 = vst [vmem:[%s3801 + $0xe8] sm:%s3791] %v3860
                %v3862 = vld [vmem:[%s3800 + $0xf0] sm:%s3791]
                %3863 = vst [vmem:[%s3801 + $0xf0] sm:%s3791] %v3862
                %v3864 = vld [vmem:[%s3800 + $0xf8] sm:%s3791]
                %3865 = vst [vmem:[%s3801 + $0xf8] sm:%s3791] %v3864
                %v3866 = vld [vmem:[%s3800 + $0x100] sm:%s3791]
                %3867 = vst [vmem:[%s3801 + $0x100] sm:%s3791] %v3866
                %v3868 = vld [vmem:[%s3800 + $0x108] sm:%s3791]
                %3869 = vst [vmem:[%s3801 + $0x108] sm:%s3791] %v3868
                %v3870 = vld [vmem:[%s3800 + $0x110] sm:%s3791]
                %3871 = vst [vmem:[%s3801 + $0x110] sm:%s3791] %v3870
                %v3872 = vld [vmem:[%s3800 + $0x118] sm:%s3791]
                %3873 = vst [vmem:[%s3801 + $0x118] sm:%s3791] %v3872
                %v3874 = vld [vmem:[%s3800 + $0x120] sm:%s3791]
                %3875 = vst [vmem:[%s3801 + $0x120] sm:%s3791] %v3874
                %v3876 = vld [vmem:[%s3800 + $0x128] sm:%s3791]
                %3877 = vst [vmem:[%s3801 + $0x128] sm:%s3791] %v3876
                %v3878 = vld [vmem:[%s3800 + $0x130] sm:%s3791]
                %3879 = vst [vmem:[%s3801 + $0x130] sm:%s3791] %v3878
                %v3880 = vld [vmem:[%s3800 + $0x138] sm:%s3791]
                %3881 = vst [vmem:[%s3801 + $0x138] sm:%s3791] %v3880
                %v3882 = vld [vmem:[%s3800 + $0x140] sm:%s3791]
                %3883 = vst [vmem:[%s3801 + $0x140] sm:%s3791] %v3882
                %v3884 = vld [vmem:[%s3800 + $0x148] sm:%s3791]
                %3885 = vst [vmem:[%s3801 + $0x148] sm:%s3791] %v3884
                %v3886 = vld [vmem:[%s3800 + $0x150] sm:%s3791]
                %3887 = vst [vmem:[%s3801 + $0x150] sm:%s3791] %v3886
                %v3888 = vld [vmem:[%s3800 + $0x158] sm:%s3791]
                %3889 = vst [vmem:[%s3801 + $0x158] sm:%s3791] %v3888
                %v3890 = vld [vmem:[%s3800 + $0x160] sm:%s3791]
                %3891 = vst [vmem:[%s3801 + $0x160] sm:%s3791] %v3890
                %v3892 = vld [vmem:[%s3800 + $0x168] sm:%s3791]
                %3893 = vst [vmem:[%s3801 + $0x168] sm:%s3791] %v3892
                %v3894 = vld [vmem:[%s3800 + $0x170] sm:%s3791]
                %3895 = vst [vmem:[%s3801 + $0x170] sm:%s3791] %v3894
                %v3896 = vld [vmem:[%s3800 + $0x178] sm:%s3791]
                %3897 = vst [vmem:[%s3801 + $0x178] sm:%s3791] %v3896
                %v3898 = vld [vmem:[%s3800 + $0x180] sm:%s3791]
                %3899 = vst [vmem:[%s3801 + $0x180] sm:%s3791] %v3898
                %v3900 = vld [vmem:[%s3800 + $0x188] sm:%s3791]
                %3901 = vst [vmem:[%s3801 + $0x188] sm:%s3791] %v3900
                %v3902 = vld [vmem:[%s3800 + $0x190] sm:%s3791]
                %3903 = vst [vmem:[%s3801 + $0x190] sm:%s3791] %v3902
                %v3904 = vld [vmem:[%s3800 + $0x198] sm:%s3791]
                %3905 = vst [vmem:[%s3801 + $0x198] sm:%s3791] %v3904
                %v3906 = vld [vmem:[%s3800 + $0x1a0] sm:%s3791]
                %3907 = vst [vmem:[%s3801 + $0x1a0] sm:%s3791] %v3906
                %v3908 = vld [vmem:[%s3800 + $0x1a8] sm:%s3791]
                %3909 = vst [vmem:[%s3801 + $0x1a8] sm:%s3791] %v3908
                %v3910 = vld [vmem:[%s3800 + $0x1b0] sm:%s3791]
                %3911 = vst [vmem:[%s3801 + $0x1b0] sm:%s3791] %v3910
                %v3912 = vld [vmem:[%s3800 + $0x1b8] sm:%s3791]
                %3913 = vst [vmem:[%s3801 + $0x1b8] sm:%s3791] %v3912
                %v3914 = vld [vmem:[%s3800 + $0x1c0] sm:%s3791]
                %3915 = vst [vmem:[%s3801 + $0x1c0] sm:%s3791] %v3914
                %v3916 = vld [vmem:[%s3800 + $0x1c8] sm:%s3791]
                %3917 = vst [vmem:[%s3801 + $0x1c8] sm:%s3791] %v3916
                %v3918 = vld [vmem:[%s3800 + $0x1d0] sm:%s3791]
                %3919 = vst [vmem:[%s3801 + $0x1d0] sm:%s3791] %v3918
                %v3920 = vld [vmem:[%s3800 + $0x1d8] sm:%s3791]
                %3921 = vst [vmem:[%s3801 + $0x1d8] sm:%s3791] %v3920
                %v3922 = vld [vmem:[%s3800 + $0x1e0] sm:%s3791]
                %3923 = vst [vmem:[%s3801 + $0x1e0] sm:%s3791] %v3922
                %v3924 = vld [vmem:[%s3800 + $0x1e8] sm:%s3791]
                %3925 = vst [vmem:[%s3801 + $0x1e8] sm:%s3791] %v3924
                %v3926 = vld [vmem:[%s3800 + $0x1f0] sm:%s3791]
                %3927 = vst [vmem:[%s3801 + $0x1f0] sm:%s3791] %v3926
                %v3928 = vld [vmem:[%s3800 + $0x1f8] sm:%s3791]
                %3929 = vst [vmem:[%s3801 + $0x1f8] sm:%s3791] %v3928
                %s3930 = sadd.s32 1, %s3799
                %p3931 = scmp.ge.s32.totalorder %s3930, %s3792
                %s3932 = scalar_select %p3931, 0, %s3930
                %s3933 = smul.u32 %s3932, 512
                %s3934 = smul.u32 %s3932, 512
                %s3935 = scalar_lea.vmem %s3771, %s3933 [#allocation2]
                %s3936 = scalar_lea.vmem %s3782, %s3934
              $region61: #{unpillar_forward.1} parent=55 // loop_footer
                %s3796 = sadd.s32 %s3794, 1
              $region62: #{unpillar_forward.1} parent=55 // loop_footer_branch
                %3793 = sbr.rel target = $region58
              $region63: #{unpillar_forward.1} parent=55 // loop_exit
                _
              %s3937 = sshrl.u32 %s3778, 6
              %s3938 = sand.u32 %s3778, 63
              %s3939 = smul.u32 %s3937, 64
              %s3940 = smul.u32 8, %s3939
              %s3941 = scalar_lea.vmem %s3771, %s3940 [#allocation2]
              %s3942 = smul.u32 8, %s3939
              %s3943 = scalar_lea.vmem %s3782, %s3942
              // While loop
              $region64: #{unpillar_forward.1} parent=55 // loop_pre_header
                _
              $region65: #{unpillar_forward.1} parent=55 // loop_header
                %s3945 = sphi 0, %s3947
                %p3946 = scmp.ge.s32.totalorder %s3945, %s3938
                %s3950 = sphi 0, %s3957
                %s3951 = sphi %s3941, %s3960
                %s3952 = sphi %s3943, %s3961
              $region66: #{unpillar_forward.1} parent=55 // loop_header_branch
                %3949 = sbr.rel (%p3946) target = $region70
              $region67: #{unpillar_forward.1} parent=55 // loop_body
                %v3953 = vld [vmem:[%s3951] sm:%s3791]
                %3954 = vst [vmem:[%s3952] sm:%s3791] %v3953
                %s3955 = sadd.s32 1, %s3950
                %p3956 = scmp.ge.s32.totalorder %s3955, %s3938
                %s3957 = scalar_select %p3956, 0, %s3955
                %s3958 = smul.u32 %s3957, 8
                %s3959 = smul.u32 %s3957, 8
                %s3960 = scalar_lea.vmem %s3941, %s3958 [#allocation2]
                %s3961 = scalar_lea.vmem %s3943, %s3959
              $region68: #{unpillar_forward.1} parent=55 // loop_footer
                %s3947 = sadd.s32 %s3945, 1
              $region69: #{unpillar_forward.1} parent=55 // loop_footer_branch
                %3944 = sbr.rel target = $region65
              $region70: #{unpillar_forward.1} parent=55 // loop_exit
                _
            $region56: #{unpillar_forward.1} parent=47 // pred_fallthru
              _
          $region48: #{unpillar_forward.1} parent=43 // pred_fallthru
            _
          %4136 = vnop
        $region44: #{unpillar_forward.1} parent=39 // pred_fallthru
          _
      $region40: #{unpillar_forward.1} parent=5 // pred_fallthru
        _
      %p4137 = scmp.le.s32.totalorder 2, %s11
      // Predicated region
      $region93: #{unpillar_forward.1} parent=5 // pred_check
        %p4138 = pneg %p4137
      $region94: #{unpillar_forward.1} parent=5 // pred_check_branch
        %4140 = sbr.rel (%p4138) target = $region96
      $region95: #{unpillar_forward.1} parent=5 // pred_region
        %s4141 = ssub.s32 %s11, 2
        // Predicated region
        $region97: #{unpillar_forward.1} parent=95 // pred_check
          %p4142 = pneg %p155
        $region98: #{unpillar_forward.1} parent=95 // pred_check_branch
          %4144 = sbr.rel (%p4142) target = $region100
        $region99: #{unpillar_forward.1} parent=95 // pred_region
          %s4145 = sand.u32 %s140, 1
          %s4146 = sand.u32 %s140, 1
          %s4147 = smul.addr %s4146, 1480
          %s4148 = scalar_lea.vmem [#allocation2], %s4147
        $region100: #{unpillar_forward.1} parent=95 // pred_fallthru
          _
      $region96: #{unpillar_forward.1} parent=5 // pred_fallthru
        _
    $region6: #{unpillar_forward.1} parent=1 // loop_footer
      %s15 = sadd.s32 1, %s11
    $region7: #{unpillar_forward.1} parent=1 // loop_footer_branch
      %10 = sbr.rel target = $region3
    $region8: #{unpillar_forward.1} parent=1 // loop_exit
      _

</llo_original>
